<compile_context>
chip_gen: v6e
topology: v6e:2x2x1
jax: 0.10.0
libtpu: 0.0.40
codegen_flags: <defaults>
</compile_context>

<pallas_src>
import functools

import jax
import jax.numpy as jnp
from jax.experimental import pallas as pl
from jax.experimental.pallas import tpu as pltpu


# ----------------------------- fused Pallas kernel --------------------------

def _fused_poolconv_kernel(x_ref, *refs, conv_channels, conv_kernels,
                           pool_kernel, pool_type, nonlinearity, H, W):
    """Pool + full conv stack for ONE batch element, entirely in VMEM.

    refs layout: w_0, b_0, w_1, b_1, ..., o_ref, pad_scratch_0, pad_scratch_1, ...
      w_i : [K_i*K_i, Cin_i, Cout_i]   (kh-major, kw, cin) -> cout
      b_i : [1, Cout_i]
    """
    n_layers = len(conv_kernels)
    w_refs = [refs[2 * i] for i in range(n_layers)]
    b_refs = [refs[2 * i + 1] for i in range(n_layers)]
    o_ref = refs[2 * n_layers]
    pad_refs = refs[2 * n_layers + 1:]

    cin0 = conv_channels[0]

    # ---------------- pooling (channels stay the lane dim, pure VPU) --------
    if pool_kernel is not None:
        pk = pool_kernel
        hc, wc = H // pk, W // pk
        combine = jnp.maximum if pool_type == 'max' else jnp.add
        x = x_ref[0]                                  # [H, Wc, pk*Cin]
        # W direction: reduce over pk contiguous lane groups (static lane slices).
        cur = x[:, :, 0:cin0]
        for dw in range(1, pk):
            cur = combine(cur, x[:, :, dw * cin0:(dw + 1) * cin0])
        # H direction: split the (untiled) leading dim and reduce elementwise.
        cur = cur.reshape(hc, pk, wc, cin0)
        pooled = cur[:, 0]
        for dh in range(1, pk):
            pooled = combine(pooled, cur[:, dh])
        if pool_type in ('avg', 'average'):
            pooled = pooled * (1.0 / (pk * pk))
        act = pooled.astype(jnp.float32)              # [hc, wc, Cin]
    else:
        hc, wc = H, W
        act = x_ref[0].astype(jnp.float32)            # [H, W, Cin]

    # -------- conv stack: zero-pad in VMEM, sum of shifted MXU matmuls ------
    for li in range(n_layers):
        k = conv_kernels[li]
        cin = conv_channels[li]
        cout = conv_channels[li + 1]
        p = (k - 1) // 2
        h_out = hc + 2 * p - k + 1
        w_out = wc + 2 * p - k + 1

        pad_ref = pad_refs[li]                        # [hc+2p, wc+2p, cin]
        pad_ref[...] = jnp.zeros(pad_ref.shape, jnp.float32)
        pad_ref[p:p + hc, p:p + wc, :] = act

        m = h_out * w_out
        acc = jnp.zeros((m, cout), jnp.float32)
        for kh in range(k):
            for kw in range(k):
                patch = pad_ref[kh:kh + h_out, kw:kw + w_out, :]  # [h_out, w_out, cin]
                acc = acc + jnp.dot(patch.reshape(m, cin),
                                    w_refs[li][kh * k + kw],
                                    preferred_element_type=jnp.float32)
        acc = acc + b_refs[li][...]                   # [1, cout] broadcast
        if nonlinearity == 'relu':
            acc = jnp.maximum(acc, 0.0)
        elif nonlinearity == 'sigd':
            acc = jax.nn.sigmoid(acc)
        elif nonlinearity == 'tanh':
            acc = jnp.tanh(acc)
        else:
            raise ValueError(f"unknown nonlinearity {nonlinearity}")
        act = acc.reshape(h_out, w_out, cout)
        hc, wc = h_out, w_out

    o_ref[0] = act.astype(o_ref.dtype)


# ------------------------------ wrapper --------------------------------------

@functools.partial(jax.jit, static_argnums=(2, 3, 4, 5, 6))
def poolconv_forward(x_nchw, params, conv_kernels, conv_channels,
                     pool_kernel, pool_type, nonlinearity):
    B, Cin, H, W = x_nchw.shape
    assert Cin == conv_channels[0]
    assert len(conv_channels) == len(conv_kernels) + 1

    # Boundary-only layout change (tiny, once): NCHW -> NHWC. No inter-layer
    # transposes — the whole pool+conv chain runs inside one pallas_call.
    x = jnp.transpose(x_nchw, (0, 2, 3, 1))

    if pool_kernel is not None:
        if pool_type not in ('max', 'avg', 'average'):
            # TODO(synk): 'unpool' (UnPool) pool_type not wired up.
            raise NotImplementedError(pool_type)
        pk = pool_kernel
        # Same divisibility requirement as the previous version (PyTorch floors).
        assert H % pk == 0 and W % pk == 0, "pooling needs divisible spatial dims"
        Hc, Wc = H // pk, W // pk
        # Free reshape (no data movement): pk W-neighbours share the lane dim so
        # the W-direction pool is a contiguous lane-slice max inside the kernel.
        x = x.reshape(B, H, Wc, pk * Cin)
    else:
        Hc, Wc = H, W

    # Static per-layer spatial sizes and padded-scratch shapes.
    h, w = Hc, Wc
    pad_shapes, out_dims = [], []
    for k, cin, cout in zip(conv_kernels, conv_channels[:-1], conv_channels[1:]):
        p = (k - 1) // 2
        pad_shapes.append((h + 2 * p, w + 2 * p, cin))
        h = h + 2 * p - k + 1
        w = w + 2 * p - k + 1
        out_dims.append((h, w, cout))
    if out_dims:
        Ho, Wo, Co = out_dims[-1]
    else:
        Ho, Wo, Co = Hc, Wc, conv_channels[-1]

    # Pack weights as [K*K, Cin, Cout] (kh, kw, cin -> cout) and bias as [1, Cout].
    flat_params = []
    for (wgt, bias), k in zip(params, conv_kernels):
        cout, cin = wgt.shape[0], wgt.shape[1]
        flat_params.append(jnp.transpose(wgt, (2, 3, 1, 0)).reshape(k * k, cin, cout))
        flat_params.append(bias.reshape(1, cout))

    kernel = functools.partial(
        _fused_poolconv_kernel,
        conv_channels=conv_channels, conv_kernels=conv_kernels,
        pool_kernel=pool_kernel, pool_type=pool_type,
        nonlinearity=nonlinearity, H=H, W=W)

    in_specs = [pl.BlockSpec((1,) + x.shape[1:], lambda b: (b, 0, 0, 0))]
    for arr in flat_params:
        in_specs.append(
            pl.BlockSpec(arr.shape, (lambda b, _nd=arr.ndim: (0,) * _nd)))

    out_nhwc = pl.pallas_call(
        kernel,
        out_shape=jax.ShapeDtypeStruct((B, Ho, Wo, Co), x_nchw.dtype),
        grid=(B,),
        in_specs=in_specs,
        out_specs=pl.BlockSpec((1, Ho, Wo, Co), lambda b: (b, 0, 0, 0)),
        scratch_shapes=[pltpu.VMEM(s, jnp.float32) for s in pad_shapes],
        compiler_params=pltpu.CompilerParams(
            dimension_semantics=("parallel",),        # megacore on v7x
            vmem_limit_bytes=32 * 1024 * 1024),       # well under v7x's 64 MiB
    )(x, *flat_params)

    # Boundary-only layout change back to the PyTorch NCHW convention.
    return jnp.transpose(out_nhwc, (0, 3, 1, 2))


class PoolConvPallas:
    """Pallas equivalent of PoolConv(conv_channels, conv_kernels, pool_kernel)."""

    def __init__(self, conv_channels, conv_kernels, pool_kernel,
                 pool_type='max', nonlinearity='relu', key=None):
        assert len(conv_channels) == len(conv_kernels) + 1
        self.conv_channels = list(conv_channels)
        self.conv_kernels = list(conv_kernels)
        self.pool_kernel = pool_kernel
        self.pool_type = pool_type
        self.nonlinearity = nonlinearity
        if key is None:
            key = jax.random.PRNGKey(0)
        self.params = []
        for cin, cout, k in zip(conv_channels[:-1], conv_channels[1:], conv_kernels):
            key, kw_key, kb_key = jax.random.split(key, 3)
            w = 0.1 * jax.random.normal(kw_key, (cout, cin, k, k), jnp.float32)
            b = 0.1 * jax.random.normal(kb_key, (cout,), jnp.float32)
            self.params.append((w, b))

    def __call__(self, x_nchw):
        return poolconv_forward(x_nchw, self.params,
                                tuple(self.conv_kernels),
                                tuple(self.conv_channels),
                                self.pool_kernel, self.pool_type,
                                self.nonlinearity)


# ------------------------------ reference ------------------------------------

def ref_forward(x_nchw, params, pool_kernel, nonlinearity):
    x = x_nchw
    if pool_kernel is not None:
        x = jax.lax.reduce_window(
            x, -jnp.inf, jax.lax.max,
            (1, 1, pool_kernel, pool_kernel),
            (1, 1, pool_kernel, pool_kernel), 'VALID')
    act = {'relu': jax.nn.relu, 'sigd': jax.nn.sigmoid, 'tanh': jnp.tanh}[nonlinearity]
    for w, b in params:
        k = w.shape[-1]
        pad = (k - 1) // 2
        x = jax.lax.conv_general_dilated(
            x, w, (1, 1), [(pad, pad), (pad, pad)],
            dimension_numbers=('NCHW', 'OIHW', 'NCHW'))
        x = act(x + b.reshape(1, -1, 1, 1))
    return x


# -------------------------------- main ----------------------------------------

if __name__ == "__main__":
    key = jax.random.PRNGKey(0)
    k_x, k_p = jax.random.split(key)

    # Module config: PoolConv([4, 8, 8], [3, 3], pool_kernel=2, 'max', 'relu')
    conv_channels = [4, 8, 8]
    conv_kernels = [3, 3]
    pool_kernel = 2

    x = jax.random.normal(k_x, (2, 4, 16, 16), jnp.float32)  # NCHW

    mod = PoolConvPallas(conv_channels, conv_kernels, pool_kernel,
                         pool_type='max', nonlinearity='relu', key=k_p)

    out = jax.block_until_ready(mod(x))
    ref = jax.block_until_ready(ref_forward(x, mod.params, pool_kernel, 'relu'))

    assert out.shape == (2, 8, 8, 8), out.shape
    err = float(jnp.max(jnp.abs(out - ref)))
    assert jnp.allclose(out, ref, atol=2e-4, rtol=2e-4), err

    print("KERNEL_OK")
</pallas_src>

<mosaic_0001>
module attributes {stable_mosaic.version = 11 : i64} {
  func.func @_fused_poolconv_kernel(%arg0: i32, %arg1: memref<1x16x8x8xf32, #tpu.memory_space<vmem>>, %arg2: memref<9x4x8xf32, #tpu.memory_space<vmem>>, %arg3: memref<1x8xf32, #tpu.memory_space<vmem>>, %arg4: memref<9x8x8xf32, #tpu.memory_space<vmem>>, %arg5: memref<1x8xf32, #tpu.memory_space<vmem>>, %arg6: memref<1x8x8x8xf32, #tpu.memory_space<vmem>>, %arg7: memref<10x10x4xf32, #tpu.memory_space<vmem>>, %arg8: memref<10x10x8xf32, #tpu.memory_space<vmem>>) attributes {dimension_semantics = [#tpu.dimension_semantics<parallel>], iteration_bounds = array<i64: 2>, scalar_prefetch = 0 : i64, scratch_operands = 2 : i64, tpu.core_type = #tpu.core_type<tc>, window_params = [{transform_indices = @transform_0, window_bounds = array<i64: 1, 16, 8, 8>}, {pipeline_mode = #tpu.pipeline_mode<synchronous>, transform_indices = @transform_1, window_bounds = array<i64: 9, 4, 8>}, {pipeline_mode = #tpu.pipeline_mode<synchronous>, transform_indices = @transform_2, window_bounds = array<i64: 1, 8>}, {pipeline_mode = #tpu.pipeline_mode<synchronous>, transform_indices = @transform_3, window_bounds = array<i64: 9, 8, 8>}, {pipeline_mode = #tpu.pipeline_mode<synchronous>, transform_indices = @transform_4, window_bounds = array<i64: 1, 8>}, {transform_indices = @transform_5, window_bounds = array<i64: 1, 8, 8, 8>}]} {
    %c0 = arith.constant 0 : index
    %c0_0 = arith.constant 0 : index
    %c0_1 = arith.constant 0 : index
    %c0_2 = arith.constant 0 : index
    %0 = vector.load %arg1[%c0, %c0_0, %c0_1, %c0_2] : memref<1x16x8x8xf32, #tpu.memory_space<vmem>>, vector<1x16x8x8xf32>
    %1 = vector.shape_cast %0 : vector<1x16x8x8xf32> to vector<16x8x8xf32>
    %2 = vector.extract_strided_slice %1 {offsets = [0, 0, 0], sizes = [16, 8, 4], strides = [1, 1, 1]} : vector<16x8x8xf32> to vector<16x8x4xf32>
    %3 = vector.extract_strided_slice %1 {offsets = [0, 0, 4], sizes = [16, 8, 4], strides = [1, 1, 1]} : vector<16x8x8xf32> to vector<16x8x4xf32>
    %4 = arith.maximumf %2, %3 : vector<16x8x4xf32>
    %5 = vector.shape_cast %4 : vector<16x8x4xf32> to vector<8x2x8x4xf32>
    %6 = vector.extract_strided_slice %5 {offsets = [0, 0, 0, 0], sizes = [8, 1, 8, 4], strides = [1, 1, 1, 1]} : vector<8x2x8x4xf32> to vector<8x1x8x4xf32>
    %7 = vector.shape_cast %6 : vector<8x1x8x4xf32> to vector<8x8x4xf32>
    %8 = vector.extract_strided_slice %5 {offsets = [0, 1, 0, 0], sizes = [8, 1, 8, 4], strides = [1, 1, 1, 1]} : vector<8x2x8x4xf32> to vector<8x1x8x4xf32>
    %9 = vector.shape_cast %8 : vector<8x1x8x4xf32> to vector<8x8x4xf32>
    %10 = arith.maximumf %7, %9 : vector<8x8x4xf32>
    %cst = arith.constant 0.000000e+00 : f32
    %11 = vector.broadcast %cst : f32 to vector<10x10x4xf32>
    %c0_3 = arith.constant 0 : index
    %c0_4 = arith.constant 0 : index
    %c0_5 = arith.constant 0 : index
    %12 = vector.load %arg7[%c0_3, %c0_4, %c0_5] : memref<10x10x4xf32, #tpu.memory_space<vmem>>, vector<10x10x4xf32>
    tpu.vector_store %arg7[%c0_3, %c0_4, %c0_5], %11 {strides = array<i32>} : memref<10x10x4xf32, #tpu.memory_space<vmem>>, vector<10x10x4xf32>,
    %c1 = arith.constant 1 : index
    %c1_6 = arith.constant 1 : index
    %c0_7 = arith.constant 0 : index
    %13 = vector.load %arg7[%c1, %c1_6, %c0_7] : memref<10x10x4xf32, #tpu.memory_space<vmem>>, vector<8x8x4xf32>
    tpu.vector_store %arg7[%c1, %c1_6, %c0_7], %10 {strides = array<i32>} : memref<10x10x4xf32, #tpu.memory_space<vmem>>, vector<8x8x4xf32>,
    %cst_8 = arith.constant 0.000000e+00 : f32
    %14 = vector.broadcast %cst_8 : f32 to vector<64x8xf32>
    %c0_9 = arith.constant 0 : index
    %c0_10 = arith.constant 0 : index
    %c0_11 = arith.constant 0 : index
    %15 = vector.load %arg7[%c0_9, %c0_10, %c0_11] : memref<10x10x4xf32, #tpu.memory_space<vmem>>, vector<8x8x4xf32>
    %16 = vector.shape_cast %15 : vector<8x8x4xf32> to vector<64x4xf32>
    %c0_12 = arith.constant 0 : index
    %c0_13 = arith.constant 0 : index
    %c0_14 = arith.constant 0 : index
    %17 = vector.load %arg2[%c0_12, %c0_13, %c0_14] : memref<9x4x8xf32, #tpu.memory_space<vmem>>, vector<1x4x8xf32>
    %18 = vector.shape_cast %17 : vector<1x4x8xf32> to vector<4x8xf32>
    %cst_15 = arith.constant dense<0.000000e+00> : vector<64x8xf32>
    %19 = tpu.matmul %16, %18, %cst_15 {dimension_numbers = #tpu.dot_dimension_numbers<[1], [0], [0], [1], [0, 0, 1, 1], [], []>} : vector<64x4xf32>, vector<4x8xf32>, vector<64x8xf32> -> vector<64x8xf32>
    %20 = arith.addf %14, %19 : vector<64x8xf32>
    %c0_16 = arith.constant 0 : index
    %c1_17 = arith.constant 1 : index
    %c0_18 = arith.constant 0 : index
    %21 = vector.load %arg7[%c0_16, %c1_17, %c0_18] : memref<10x10x4xf32, #tpu.memory_space<vmem>>, vector<8x8x4xf32>
    %22 = vector.shape_cast %21 : vector<8x8x4xf32> to vector<64x4xf32>
    %c1_19 = arith.constant 1 : index
    %c0_20 = arith.constant 0 : index
    %c0_21 = arith.constant 0 : index
    %23 = vector.load %arg2[%c1_19, %c0_20, %c0_21] : memref<9x4x8xf32, #tpu.memory_space<vmem>>, vector<1x4x8xf32>
    %24 = vector.shape_cast %23 : vector<1x4x8xf32> to vector<4x8xf32>
    %cst_22 = arith.constant dense<0.000000e+00> : vector<64x8xf32>
    %25 = tpu.matmul %22, %24, %cst_22 {dimension_numbers = #tpu.dot_dimension_numbers<[1], [0], [0], [1], [0, 0, 1, 1], [], []>} : vector<64x4xf32>, vector<4x8xf32>, vector<64x8xf32> -> vector<64x8xf32>
    %26 = arith.addf %20, %25 : vector<64x8xf32>
    %c0_23 = arith.constant 0 : index
    %c2 = arith.constant 2 : index
    %c0_24 = arith.constant 0 : index
    %27 = vector.load %arg7[%c0_23, %c2, %c0_24] : memref<10x10x4xf32, #tpu.memory_space<vmem>>, vector<8x8x4xf32>
    %28 = vector.shape_cast %27 : vector<8x8x4xf32> to vector<64x4xf32>
    %c2_25 = arith.constant 2 : index
    %c0_26 = arith.constant 0 : index
    %c0_27 = arith.constant 0 : index
    %29 = vector.load %arg2[%c2_25, %c0_26, %c0_27] : memref<9x4x8xf32, #tpu.memory_space<vmem>>, vector<1x4x8xf32>
    %30 = vector.shape_cast %29 : vector<1x4x8xf32> to vector<4x8xf32>
    %cst_28 = arith.constant dense<0.000000e+00> : vector<64x8xf32>
    %31 = tpu.matmul %28, %30, %cst_28 {dimension_numbers = #tpu.dot_dimension_numbers<[1], [0], [0], [1], [0, 0, 1, 1], [], []>} : vector<64x4xf32>, vector<4x8xf32>, vector<64x8xf32> -> vector<64x8xf32>
    %32 = arith.addf %26, %31 : vector<64x8xf32>
    %c1_29 = arith.constant 1 : index
    %c0_30 = arith.constant 0 : index
    %c0_31 = arith.constant 0 : index
    %33 = vector.load %arg7[%c1_29, %c0_30, %c0_31] : memref<10x10x4xf32, #tpu.memory_space<vmem>>, vector<8x8x4xf32>
    %34 = vector.shape_cast %33 : vector<8x8x4xf32> to vector<64x4xf32>
    %c3 = arith.constant 3 : index
    %c0_32 = arith.constant 0 : index
    %c0_33 = arith.constant 0 : index
    %35 = vector.load %arg2[%c3, %c0_32, %c0_33] : memref<9x4x8xf32, #tpu.memory_space<vmem>>, vector<1x4x8xf32>
    %36 = vector.shape_cast %35 : vector<1x4x8xf32> to vector<4x8xf32>
    %cst_34 = arith.constant dense<0.000000e+00> : vector<64x8xf32>
    %37 = tpu.matmul %34, %36, %cst_34 {dimension_numbers = #tpu.dot_dimension_numbers<[1], [0], [0], [1], [0, 0, 1, 1], [], []>} : vector<64x4xf32>, vector<4x8xf32>, vector<64x8xf32> -> vector<64x8xf32>
    %38 = arith.addf %32, %37 : vector<64x8xf32>
    %c1_35 = arith.constant 1 : index
    %c1_36 = arith.constant 1 : index
    %c0_37 = arith.constant 0 : index
    %39 = vector.load %arg7[%c1_35, %c1_36, %c0_37] : memref<10x10x4xf32, #tpu.memory_space<vmem>>, vector<8x8x4xf32>
    %40 = vector.shape_cast %39 : vector<8x8x4xf32> to vector<64x4xf32>
    %c4 = arith.constant 4 : index
    %c0_38 = arith.constant 0 : index
    %c0_39 = arith.constant 0 : index
    %41 = vector.load %arg2[%c4, %c0_38, %c0_39] : memref<9x4x8xf32, #tpu.memory_space<vmem>>, vector<1x4x8xf32>
    %42 = vector.shape_cast %41 : vector<1x4x8xf32> to vector<4x8xf32>
    %cst_40 = arith.constant dense<0.000000e+00> : vector<64x8xf32>
    %43 = tpu.matmul %40, %42, %cst_40 {dimension_numbers = #tpu.dot_dimension_numbers<[1], [0], [0], [1], [0, 0, 1, 1], [], []>} : vector<64x4xf32>, vector<4x8xf32>, vector<64x8xf32> -> vector<64x8xf32>
    %44 = arith.addf %38, %43 : vector<64x8xf32>
    %c1_41 = arith.constant 1 : index
    %c2_42 = arith.constant 2 : index
    %c0_43 = arith.constant 0 : index
    %45 = vector.load %arg7[%c1_41, %c2_42, %c0_43] : memref<10x10x4xf32, #tpu.memory_space<vmem>>, vector<8x8x4xf32>
    %46 = vector.shape_cast %45 : vector<8x8x4xf32> to vector<64x4xf32>
    %c5 = arith.constant 5 : index
    %c0_44 = arith.constant 0 : index
    %c0_45 = arith.constant 0 : index
    %47 = vector.load %arg2[%c5, %c0_44, %c0_45] : memref<9x4x8xf32, #tpu.memory_space<vmem>>, vector<1x4x8xf32>
    %48 = vector.shape_cast %47 : vector<1x4x8xf32> to vector<4x8xf32>
    %cst_46 = arith.constant dense<0.000000e+00> : vector<64x8xf32>
    %49 = tpu.matmul %46, %48, %cst_46 {dimension_numbers = #tpu.dot_dimension_numbers<[1], [0], [0], [1], [0, 0, 1, 1], [], []>} : vector<64x4xf32>, vector<4x8xf32>, vector<64x8xf32> -> vector<64x8xf32>
    %50 = arith.addf %44, %49 : vector<64x8xf32>
    %c2_47 = arith.constant 2 : index
    %c0_48 = arith.constant 0 : index
    %c0_49 = arith.constant 0 : index
    %51 = vector.load %arg7[%c2_47, %c0_48, %c0_49] : memref<10x10x4xf32, #tpu.memory_space<vmem>>, vector<8x8x4xf32>
    %52 = vector.shape_cast %51 : vector<8x8x4xf32> to vector<64x4xf32>
    %c6 = arith.constant 6 : index
    %c0_50 = arith.constant 0 : index
    %c0_51 = arith.constant 0 : index
    %53 = vector.load %arg2[%c6, %c0_50, %c0_51] : memref<9x4x8xf32, #tpu.memory_space<vmem>>, vector<1x4x8xf32>
    %54 = vector.shape_cast %53 : vector<1x4x8xf32> to vector<4x8xf32>
    %cst_52 = arith.constant dense<0.000000e+00> : vector<64x8xf32>
    %55 = tpu.matmul %52, %54, %cst_52 {dimension_numbers = #tpu.dot_dimension_numbers<[1], [0], [0], [1], [0, 0, 1, 1], [], []>} : vector<64x4xf32>, vector<4x8xf32>, vector<64x8xf32> -> vector<64x8xf32>
    %56 = arith.addf %50, %55 : vector<64x8xf32>
    %c2_53 = arith.constant 2 : index
    %c1_54 = arith.constant 1 : index
    %c0_55 = arith.constant 0 : index
    %57 = vector.load %arg7[%c2_53, %c1_54, %c0_55] : memref<10x10x4xf32, #tpu.memory_space<vmem>>, vector<8x8x4xf32>
    %58 = vector.shape_cast %57 : vector<8x8x4xf32> to vector<64x4xf32>
    %c7 = arith.constant 7 : index
    %c0_56 = arith.constant 0 : index
    %c0_57 = arith.constant 0 : index
    %59 = vector.load %arg2[%c7, %c0_56, %c0_57] : memref<9x4x8xf32, #tpu.memory_space<vmem>>, vector<1x4x8xf32>
    %60 = vector.shape_cast %59 : vector<1x4x8xf32> to vector<4x8xf32>
    %cst_58 = arith.constant dense<0.000000e+00> : vector<64x8xf32>
    %61 = tpu.matmul %58, %60, %cst_58 {dimension_numbers = #tpu.dot_dimension_numbers<[1], [0], [0], [1], [0, 0, 1, 1], [], []>} : vector<64x4xf32>, vector<4x8xf32>, vector<64x8xf32> -> vector<64x8xf32>
    %62 = arith.addf %56, %61 : vector<64x8xf32>
    %c2_59 = arith.constant 2 : index
    %c2_60 = arith.constant 2 : index
    %c0_61 = arith.constant 0 : index
    %63 = vector.load %arg7[%c2_59, %c2_60, %c0_61] : memref<10x10x4xf32, #tpu.memory_space<vmem>>, vector<8x8x4xf32>
    %64 = vector.shape_cast %63 : vector<8x8x4xf32> to vector<64x4xf32>
    %c8 = arith.constant 8 : index
    %c0_62 = arith.constant 0 : index
    %c0_63 = arith.constant 0 : index
    %65 = vector.load %arg2[%c8, %c0_62, %c0_63] : memref<9x4x8xf32, #tpu.memory_space<vmem>>, vector<1x4x8xf32>
    %66 = vector.shape_cast %65 : vector<1x4x8xf32> to vector<4x8xf32>
    %cst_64 = arith.constant dense<0.000000e+00> : vector<64x8xf32>
    %67 = tpu.matmul %64, %66, %cst_64 {dimension_numbers = #tpu.dot_dimension_numbers<[1], [0], [0], [1], [0, 0, 1, 1], [], []>} : vector<64x4xf32>, vector<4x8xf32>, vector<64x8xf32> -> vector<64x8xf32>
    %68 = arith.addf %62, %67 : vector<64x8xf32>
    %c0_65 = arith.constant 0 : index
    %c0_66 = arith.constant 0 : index
    %69 = vector.load %arg3[%c0_65, %c0_66] : memref<1x8xf32, #tpu.memory_space<vmem>>, vector<1x8xf32>
    %70 = vector.broadcast %69 : vector<1x8xf32> to vector<64x8xf32>
    %71 = arith.addf %68, %70 : vector<64x8xf32>
    %cst_67 = arith.constant 0.000000e+00 : f32
    %72 = vector.broadcast %cst_67 : f32 to vector<64x8xf32>
    %73 = arith.maximumf %71, %72 : vector<64x8xf32>
    %74 = vector.shape_cast %73 : vector<64x8xf32> to vector<8x8x8xf32>
    %cst_68 = arith.constant 0.000000e+00 : f32
    %75 = vector.broadcast %cst_68 : f32 to vector<10x10x8xf32>
    %c0_69 = arith.constant 0 : index
    %c0_70 = arith.constant 0 : index
    %c0_71 = arith.constant 0 : index
    %76 = vector.load %arg8[%c0_69, %c0_70, %c0_71] : memref<10x10x8xf32, #tpu.memory_space<vmem>>, vector<10x10x8xf32>
    tpu.vector_store %arg8[%c0_69, %c0_70, %c0_71], %75 {strides = array<i32>} : memref<10x10x8xf32, #tpu.memory_space<vmem>>, vector<10x10x8xf32>,
    %c1_72 = arith.constant 1 : index
    %c1_73 = arith.constant 1 : index
    %c0_74 = arith.constant 0 : index
    %77 = vector.load %arg8[%c1_72, %c1_73, %c0_74] : memref<10x10x8xf32, #tpu.memory_space<vmem>>, vector<8x8x8xf32>
    tpu.vector_store %arg8[%c1_72, %c1_73, %c0_74], %74 {strides = array<i32>} : memref<10x10x8xf32, #tpu.memory_space<vmem>>, vector<8x8x8xf32>,
    %cst_75 = arith.constant 0.000000e+00 : f32
    %78 = vector.broadcast %cst_75 : f32 to vector<64x8xf32>
    %c0_76 = arith.constant 0 : index
    %c0_77 = arith.constant 0 : index
    %c0_78 = arith.constant 0 : index
    %79 = vector.load %arg8[%c0_76, %c0_77, %c0_78] : memref<10x10x8xf32, #tpu.memory_space<vmem>>, vector<8x8x8xf32>
    %80 = vector.shape_cast %79 : vector<8x8x8xf32> to vector<64x8xf32>
    %c0_79 = arith.constant 0 : index
    %c0_80 = arith.constant 0 : index
    %c0_81 = arith.constant 0 : index
    %81 = vector.load %arg4[%c0_79, %c0_80, %c0_81] : memref<9x8x8xf32, #tpu.memory_space<vmem>>, vector<1x8x8xf32>
    %82 = vector.shape_cast %81 : vector<1x8x8xf32> to vector<8x8xf32>
    %cst_82 = arith.constant dense<0.000000e+00> : vector<64x8xf32>
    %83 = tpu.matmul %80, %82, %cst_82 {dimension_numbers = #tpu.dot_dimension_numbers<[1], [0], [0], [1], [0, 0, 1, 1], [], []>} : vector<64x8xf32>, vector<8x8xf32>, vector<64x8xf32> -> vector<64x8xf32>
    %84 = arith.addf %78, %83 : vector<64x8xf32>
    %c0_83 = arith.constant 0 : index
    %c1_84 = arith.constant 1 : index
    %c0_85 = arith.constant 0 : index
    %85 = vector.load %arg8[%c0_83, %c1_84, %c0_85] : memref<10x10x8xf32, #tpu.memory_space<vmem>>, vector<8x8x8xf32>
    %86 = vector.shape_cast %85 : vector<8x8x8xf32> to vector<64x8xf32>
    %c1_86 = arith.constant 1 : index
    %c0_87 = arith.constant 0 : index
    %c0_88 = arith.constant 0 : index
    %87 = vector.load %arg4[%c1_86, %c0_87, %c0_88] : memref<9x8x8xf32, #tpu.memory_space<vmem>>, vector<1x8x8xf32>
    %88 = vector.shape_cast %87 : vector<1x8x8xf32> to vector<8x8xf32>
    %cst_89 = arith.constant dense<0.000000e+00> : vector<64x8xf32>
    %89 = tpu.matmul %86, %88, %cst_89 {dimension_numbers = #tpu.dot_dimension_numbers<[1], [0], [0], [1], [0, 0, 1, 1], [], []>} : vector<64x8xf32>, vector<8x8xf32>, vector<64x8xf32> -> vector<64x8xf32>
    %90 = arith.addf %84, %89 : vector<64x8xf32>
    %c0_90 = arith.constant 0 : index
    %c2_91 = arith.constant 2 : index
    %c0_92 = arith.constant 0 : index
    %91 = vector.load %arg8[%c0_90, %c2_91, %c0_92] : memref<10x10x8xf32, #tpu.memory_space<vmem>>, vector<8x8x8xf32>
    %92 = vector.shape_cast %91 : vector<8x8x8xf32> to vector<64x8xf32>
    %c2_93 = arith.constant 2 : index
    %c0_94 = arith.constant 0 : index
    %c0_95 = arith.constant 0 : index
    %93 = vector.load %arg4[%c2_93, %c0_94, %c0_95] : memref<9x8x8xf32, #tpu.memory_space<vmem>>, vector<1x8x8xf32>
    %94 = vector.shape_cast %93 : vector<1x8x8xf32> to vector<8x8xf32>
    %cst_96 = arith.constant dense<0.000000e+00> : vector<64x8xf32>
    %95 = tpu.matmul %92, %94, %cst_96 {dimension_numbers = #tpu.dot_dimension_numbers<[1], [0], [0], [1], [0, 0, 1, 1], [], []>} : vector<64x8xf32>, vector<8x8xf32>, vector<64x8xf32> -> vector<64x8xf32>
    %96 = arith.addf %90, %95 : vector<64x8xf32>
    %c1_97 = arith.constant 1 : index
    %c0_98 = arith.constant 0 : index
    %c0_99 = arith.constant 0 : index
    %97 = vector.load %arg8[%c1_97, %c0_98, %c0_99] : memref<10x10x8xf32, #tpu.memory_space<vmem>>, vector<8x8x8xf32>
    %98 = vector.shape_cast %97 : vector<8x8x8xf32> to vector<64x8xf32>
    %c3_100 = arith.constant 3 : index
    %c0_101 = arith.constant 0 : index
    %c0_102 = arith.constant 0 : index
    %99 = vector.load %arg4[%c3_100, %c0_101, %c0_102] : memref<9x8x8xf32, #tpu.memory_space<vmem>>, vector<1x8x8xf32>
    %100 = vector.shape_cast %99 : vector<1x8x8xf32> to vector<8x8xf32>
    %cst_103 = arith.constant dense<0.000000e+00> : vector<64x8xf32>
    %101 = tpu.matmul %98, %100, %cst_103 {dimension_numbers = #tpu.dot_dimension_numbers<[1], [0], [0], [1], [0, 0, 1, 1], [], []>} : vector<64x8xf32>, vector<8x8xf32>, vector<64x8xf32> -> vector<64x8xf32>
    %102 = arith.addf %96, %101 : vector<64x8xf32>
    %c1_104 = arith.constant 1 : index
    %c1_105 = arith.constant 1 : index
    %c0_106 = arith.constant 0 : index
    %103 = vector.load %arg8[%c1_104, %c1_105, %c0_106] : memref<10x10x8xf32, #tpu.memory_space<vmem>>, vector<8x8x8xf32>
    %104 = vector.shape_cast %103 : vector<8x8x8xf32> to vector<64x8xf32>
    %c4_107 = arith.constant 4 : index
    %c0_108 = arith.constant 0 : index
    %c0_109 = arith.constant 0 : index
    %105 = vector.load %arg4[%c4_107, %c0_108, %c0_109] : memref<9x8x8xf32, #tpu.memory_space<vmem>>, vector<1x8x8xf32>
    %106 = vector.shape_cast %105 : vector<1x8x8xf32> to vector<8x8xf32>
    %cst_110 = arith.constant dense<0.000000e+00> : vector<64x8xf32>
    %107 = tpu.matmul %104, %106, %cst_110 {dimension_numbers = #tpu.dot_dimension_numbers<[1], [0], [0], [1], [0, 0, 1, 1], [], []>} : vector<64x8xf32>, vector<8x8xf32>, vector<64x8xf32> -> vector<64x8xf32>
    %108 = arith.addf %102, %107 : vector<64x8xf32>
    %c1_111 = arith.constant 1 : index
    %c2_112 = arith.constant 2 : index
    %c0_113 = arith.constant 0 : index
    %109 = vector.load %arg8[%c1_111, %c2_112, %c0_113] : memref<10x10x8xf32, #tpu.memory_space<vmem>>, vector<8x8x8xf32>
    %110 = vector.shape_cast %109 : vector<8x8x8xf32> to vector<64x8xf32>
    %c5_114 = arith.constant 5 : index
    %c0_115 = arith.constant 0 : index
    %c0_116 = arith.constant 0 : index
    %111 = vector.load %arg4[%c5_114, %c0_115, %c0_116] : memref<9x8x8xf32, #tpu.memory_space<vmem>>, vector<1x8x8xf32>
    %112 = vector.shape_cast %111 : vector<1x8x8xf32> to vector<8x8xf32>
    %cst_117 = arith.constant dense<0.000000e+00> : vector<64x8xf32>
    %113 = tpu.matmul %110, %112, %cst_117 {dimension_numbers = #tpu.dot_dimension_numbers<[1], [0], [0], [1], [0, 0, 1, 1], [], []>} : vector<64x8xf32>, vector<8x8xf32>, vector<64x8xf32> -> vector<64x8xf32>
    %114 = arith.addf %108, %113 : vector<64x8xf32>
    %c2_118 = arith.constant 2 : index
    %c0_119 = arith.constant 0 : index
    %c0_120 = arith.constant 0 : index
    %115 = vector.load %arg8[%c2_118, %c0_119, %c0_120] : memref<10x10x8xf32, #tpu.memory_space<vmem>>, vector<8x8x8xf32>
    %116 = vector.shape_cast %115 : vector<8x8x8xf32> to vector<64x8xf32>
    %c6_121 = arith.constant 6 : index
    %c0_122 = arith.constant 0 : index
    %c0_123 = arith.constant 0 : index
    %117 = vector.load %arg4[%c6_121, %c0_122, %c0_123] : memref<9x8x8xf32, #tpu.memory_space<vmem>>, vector<1x8x8xf32>
    %118 = vector.shape_cast %117 : vector<1x8x8xf32> to vector<8x8xf32>
    %cst_124 = arith.constant dense<0.000000e+00> : vector<64x8xf32>
    %119 = tpu.matmul %116, %118, %cst_124 {dimension_numbers = #tpu.dot_dimension_numbers<[1], [0], [0], [1], [0, 0, 1, 1], [], []>} : vector<64x8xf32>, vector<8x8xf32>, vector<64x8xf32> -> vector<64x8xf32>
    %120 = arith.addf %114, %119 : vector<64x8xf32>
    %c2_125 = arith.constant 2 : index
    %c1_126 = arith.constant 1 : index
    %c0_127 = arith.constant 0 : index
    %121 = vector.load %arg8[%c2_125, %c1_126, %c0_127] : memref<10x10x8xf32, #tpu.memory_space<vmem>>, vector<8x8x8xf32>
    %122 = vector.shape_cast %121 : vector<8x8x8xf32> to vector<64x8xf32>
    %c7_128 = arith.constant 7 : index
    %c0_129 = arith.constant 0 : index
    %c0_130 = arith.constant 0 : index
    %123 = vector.load %arg4[%c7_128, %c0_129, %c0_130] : memref<9x8x8xf32, #tpu.memory_space<vmem>>, vector<1x8x8xf32>
    %124 = vector.shape_cast %123 : vector<1x8x8xf32> to vector<8x8xf32>
    %cst_131 = arith.constant dense<0.000000e+00> : vector<64x8xf32>
    %125 = tpu.matmul %122, %124, %cst_131 {dimension_numbers = #tpu.dot_dimension_numbers<[1], [0], [0], [1], [0, 0, 1, 1], [], []>} : vector<64x8xf32>, vector<8x8xf32>, vector<64x8xf32> -> vector<64x8xf32>
    %126 = arith.addf %120, %125 : vector<64x8xf32>
    %c2_132 = arith.constant 2 : index
    %c2_133 = arith.constant 2 : index
    %c0_134 = arith.constant 0 : index
    %127 = vector.load %arg8[%c2_132, %c2_133, %c0_134] : memref<10x10x8xf32, #tpu.memory_space<vmem>>, vector<8x8x8xf32>
    %128 = vector.shape_cast %127 : vector<8x8x8xf32> to vector<64x8xf32>
    %c8_135 = arith.constant 8 : index
    %c0_136 = arith.constant 0 : index
    %c0_137 = arith.constant 0 : index
    %129 = vector.load %arg4[%c8_135, %c0_136, %c0_137] : memref<9x8x8xf32, #tpu.memory_space<vmem>>, vector<1x8x8xf32>
    %130 = vector.shape_cast %129 : vector<1x8x8xf32> to vector<8x8xf32>
    %cst_138 = arith.constant dense<0.000000e+00> : vector<64x8xf32>
    %131 = tpu.matmul %128, %130, %cst_138 {dimension_numbers = #tpu.dot_dimension_numbers<[1], [0], [0], [1], [0, 0, 1, 1], [], []>} : vector<64x8xf32>, vector<8x8xf32>, vector<64x8xf32> -> vector<64x8xf32>
    %132 = arith.addf %126, %131 : vector<64x8xf32>
    %c0_139 = arith.constant 0 : index
    %c0_140 = arith.constant 0 : index
    %133 = vector.load %arg5[%c0_139, %c0_140] : memref<1x8xf32, #tpu.memory_space<vmem>>, vector<1x8xf32>
    %134 = vector.broadcast %133 : vector<1x8xf32> to vector<64x8xf32>
    %135 = arith.addf %132, %134 : vector<64x8xf32>
    %cst_141 = arith.constant 0.000000e+00 : f32
    %136 = vector.broadcast %cst_141 : f32 to vector<64x8xf32>
    %137 = arith.maximumf %135, %136 : vector<64x8xf32>
    %138 = vector.shape_cast %137 : vector<64x8xf32> to vector<8x8x8xf32>
    %c0_142 = arith.constant 0 : index
    %c0_143 = arith.constant 0 : index
    %c0_144 = arith.constant 0 : index
    %c0_145 = arith.constant 0 : index
    %139 = vector.load %arg6[%c0_142, %c0_143, %c0_144, %c0_145] : memref<1x8x8x8xf32, #tpu.memory_space<vmem>>, vector<1x8x8x8xf32>
    %140 = vector.shape_cast %139 : vector<1x8x8x8xf32> to vector<8x8x8xf32>
    %141 = vector.shape_cast %138 : vector<8x8x8xf32> to vector<1x8x8x8xf32>
    tpu.vector_store %arg6[%c0_142, %c0_143, %c0_144, %c0_145], %141 {strides = array<i32>} : memref<1x8x8x8xf32, #tpu.memory_space<vmem>>, vector<1x8x8x8xf32>,
    return
  }
  func.func @transform_0(%arg0: i32) -> (i32, i32, i32, i32) {
    %c0_i32 = arith.constant 0 : i32
    %c0_i32_0 = arith.constant 0 : i32
    %c0_i32_1 = arith.constant 0 : i32
    %c0_i32_2 = arith.constant 0 : i32
    return %arg0, %c0_i32, %c0_i32_0, %c0_i32_1 : i32, i32, i32, i32
  }
  func.func @transform_1(%arg0: i32) -> (i32, i32, i32) {
    %c0_i32 = arith.constant 0 : i32
    %c0_i32_0 = arith.constant 0 : i32
    %c0_i32_1 = arith.constant 0 : i32
    %c0_i32_2 = arith.constant 0 : i32
    return %c0_i32, %c0_i32_0, %c0_i32_1 : i32, i32, i32
  }
  func.func @transform_2(%arg0: i32) -> (i32, i32) {
    %c0_i32 = arith.constant 0 : i32
    %c0_i32_0 = arith.constant 0 : i32
    %c0_i32_1 = arith.constant 0 : i32
    return %c0_i32, %c0_i32_0 : i32, i32
  }
  func.func @transform_3(%arg0: i32) -> (i32, i32, i32) {
    %c0_i32 = arith.constant 0 : i32
    %c0_i32_0 = arith.constant 0 : i32
    %c0_i32_1 = arith.constant 0 : i32
    %c0_i32_2 = arith.constant 0 : i32
    return %c0_i32, %c0_i32_0, %c0_i32_1 : i32, i32, i32
  }
  func.func @transform_4(%arg0: i32) -> (i32, i32) {
    %c0_i32 = arith.constant 0 : i32
    %c0_i32_0 = arith.constant 0 : i32
    %c0_i32_1 = arith.constant 0 : i32
    return %c0_i32, %c0_i32_0 : i32, i32
  }
  func.func @transform_5(%arg0: i32) -> (i32, i32, i32, i32) {
    %c0_i32 = arith.constant 0 : i32
    %c0_i32_0 = arith.constant 0 : i32
    %c0_i32_1 = arith.constant 0 : i32
    %c0_i32_2 = arith.constant 0 : i32
    return %arg0, %c0_i32, %c0_i32_0, %c0_i32_1 : i32, i32, i32, i32
  }
}

</mosaic_0001>

<llo_original>
// kernel: poolconv_forward.1
$region0: #{poolconv_forward.1}
  #allocation0 [shape = 'u32[]', space=smem, size = 0x4, offset = 0x4, fixed_abs, tag = 'smem constant byte address 0x4 - core index']
  #allocation1 [shape = 'u32[144,128]{1,0:T(1,128)}', space=vmem, size = 0x12000, scoped, tag = 'internal scratch']
  #allocation2 [shape = 'f32[10,10,4]{2,1,0:T(8,128)}', space=vmem, size = 0x14000, scoped, tag = 'scratch operand']
  #allocation3 [shape = 'f32[10,10,8]{2,1,0:T(8,128)}', space=vmem, size = 0x14000, scoped, tag = 'scratch operand']
  %s0 = inlined_call_operand.vmem [shape: f32[2,16,8,8], index: 0, kind: input, shape index: {}]
  %s1 = inlined_call_operand.vmem [shape: f32[9,4,8], index: 1, kind: input, shape index: {}]
  %s2 = inlined_call_operand.vmem [shape: f32[1,8], index: 2, kind: input, shape index: {}]
  %s3 = inlined_call_operand.vmem [shape: f32[9,8,8], index: 3, kind: input, shape index: {}]
  %s4 = inlined_call_operand.vmem [shape: f32[1,8], index: 4, kind: input, shape index: {}]
  %s5 = inlined_call_operand.vmem [shape: f32[2,8,8,8], index: 5, kind: output, shape index: {}]
  %s6 = sld [smem:[#allocation0]]
  $region53: #{poolconv_forward.1} parent=0
    _
  %s8 = ssub.s32 1, %s6
  %s9 = scalar_select 0, %s8, %s6
  loop: start=0, step=1, limit=4
  $region2: #{poolconv_forward.1} parent=0 // loop_pre_header
    _
  $region3: #{poolconv_forward.1} parent=0 // loop_header
    %s11 = sphi 0, %s15
    %p12 = scmp.ge.s32.totalorder %s11, 4
    %s21 = sphi 0, %s23
    %s24 = sphi 0, %s21
    %s25 = sphi 0, %s24
    %s41 = sphi 0, %s25
    %s45 = sphi 0, %s45
    %s47 = sphi 0, %s45
    %s48 = sphi 0, %s47
    %s62 = sphi 0, %s48
    %s66 = sphi 0, %s66
    %s68 = sphi 0, %s66
    %s69 = sphi 0, %s68
    %s83 = sphi 0, %s69
    %s87 = sphi 0, %s87
    %s89 = sphi 0, %s87
    %s90 = sphi 0, %s89
    %s104 = sphi 0, %s90
    %s108 = sphi 0, %s108
    %s110 = sphi 0, %s108
    %s111 = sphi 0, %s110
    %s125 = sphi 0, %s111
    %s131 = sphi 0, %s133
    %s134 = sphi 0, %s131
    %s135 = sphi 0, %s134
    %s151 = sphi 0, %s135
  $region4: #{poolconv_forward.1} parent=0 // loop_header_branch
    %14 = sbr.rel (%p12) target = $region8
  $region5: #{poolconv_forward.1} parent=0 // loop_body
    %s16 = ssub.s32 %s11, 1
    %s17 = ssub.s32 %s11, 2
    %s18 = sadd.s32 %s11, 1
    %s19 = ssub.s32 %s11, %s18
    %p20 = scmp.eq.s32.totalorder %s19, 0
    %s22 = sadd.s32 %s21, 1
    %s23 = scalar_select %p20, %s21, %s22
    %p26 = pneg %p20
    %p27 = scmp.eq.s32.totalorder %s11, 1
    %p28 = por %p26, %p27
    %p29 = scmp.ne.s32.totalorder %s21, %s24
    %p30 = scmp.eq.s32.totalorder %s11, 0
    %p31 = por %p29, %p30
    %p32 = scmp.ne.s32.totalorder %s21, %s24
    %p33 = scmp.eq.s32.totalorder %s16, 1
    %p34 = por %p32, %p33
    %p35 = scmp.ne.s32.totalorder %s24, %s25
    %p36 = scmp.eq.s32.totalorder %s16, 0
    %p37 = por %p35, %p36
    %p38 = scmp.ne.s32.totalorder %s24, %s25
    %p39 = scmp.eq.s32.totalorder %s17, 1
    %p40 = por %p38, %p39
    %p42 = scmp.ne.s32.totalorder %s25, %s41
    %p43 = scmp.eq.s32.totalorder %s17, 0
    %p44 = por %p42, %p43
    %s46 = sadd.s32 %s45, 1
    %p49 = scmp.eq.s32.totalorder %s11, 1
    %p50 = scmp.ne.s32.totalorder %s45, %s47
    %p51 = scmp.eq.s32.totalorder %s11, 0
    %p52 = por %p50, %p51
    %p53 = scmp.ne.s32.totalorder %s45, %s47
    %p54 = scmp.eq.s32.totalorder %s16, 1
    %p55 = por %p53, %p54
    %p56 = scmp.ne.s32.totalorder %s47, %s48
    %p57 = scmp.eq.s32.totalorder %s16, 0
    %p58 = por %p56, %p57
    %p59 = scmp.ne.s32.totalorder %s47, %s48
    %p60 = scmp.eq.s32.totalorder %s17, 1
    %p61 = por %p59, %p60
    %p63 = scmp.ne.s32.totalorder %s48, %s62
    %p64 = scmp.eq.s32.totalorder %s17, 0
    %p65 = por %p63, %p64
    %s67 = sadd.s32 %s66, 1
    %p70 = scmp.eq.s32.totalorder %s11, 1
    %p71 = scmp.ne.s32.totalorder %s66, %s68
    %p72 = scmp.eq.s32.totalorder %s11, 0
    %p73 = por %p71, %p72
    %p74 = scmp.ne.s32.totalorder %s66, %s68
    %p75 = scmp.eq.s32.totalorder %s16, 1
    %p76 = por %p74, %p75
    %p77 = scmp.ne.s32.totalorder %s68, %s69
    %p78 = scmp.eq.s32.totalorder %s16, 0
    %p79 = por %p77, %p78
    %p80 = scmp.ne.s32.totalorder %s68, %s69
    %p81 = scmp.eq.s32.totalorder %s17, 1
    %p82 = por %p80, %p81
    %p84 = scmp.ne.s32.totalorder %s69, %s83
    %p85 = scmp.eq.s32.totalorder %s17, 0
    %p86 = por %p84, %p85
    %s88 = sadd.s32 %s87, 1
    %p91 = scmp.eq.s32.totalorder %s11, 1
    %p92 = scmp.ne.s32.totalorder %s87, %s89
    %p93 = scmp.eq.s32.totalorder %s11, 0
    %p94 = por %p92, %p93
    %p95 = scmp.ne.s32.totalorder %s87, %s89
    %p96 = scmp.eq.s32.totalorder %s16, 1
    %p97 = por %p95, %p96
    %p98 = scmp.ne.s32.totalorder %s89, %s90
    %p99 = scmp.eq.s32.totalorder %s16, 0
    %p100 = por %p98, %p99
    %p101 = scmp.ne.s32.totalorder %s89, %s90
    %p102 = scmp.eq.s32.totalorder %s17, 1
    %p103 = por %p101, %p102
    %p105 = scmp.ne.s32.totalorder %s90, %s104
    %p106 = scmp.eq.s32.totalorder %s17, 0
    %p107 = por %p105, %p106
    %s109 = sadd.s32 %s108, 1
    %p112 = scmp.eq.s32.totalorder %s11, 1
    %p113 = scmp.ne.s32.totalorder %s108, %s110
    %p114 = scmp.eq.s32.totalorder %s11, 0
    %p115 = por %p113, %p114
    %p116 = scmp.ne.s32.totalorder %s108, %s110
    %p117 = scmp.eq.s32.totalorder %s16, 1
    %p118 = por %p116, %p117
    %p119 = scmp.ne.s32.totalorder %s110, %s111
    %p120 = scmp.eq.s32.totalorder %s16, 0
    %p121 = por %p119, %p120
    %p122 = scmp.ne.s32.totalorder %s110, %s111
    %p123 = scmp.eq.s32.totalorder %s17, 1
    %p124 = por %p122, %p123
    %p126 = scmp.ne.s32.totalorder %s111, %s125
    %p127 = scmp.eq.s32.totalorder %s17, 0
    %p128 = por %p126, %p127
    %s129 = ssub.s32 %s11, %s18
    %p130 = scmp.eq.s32.totalorder %s129, 0
    %s132 = sadd.s32 %s131, 1
    %s133 = scalar_select %p130, %s131, %s132
    %p136 = pneg %p130
    %p137 = scmp.eq.s32.totalorder %s11, 1
    %p138 = por %p136, %p137
    %p139 = scmp.ne.s32.totalorder %s131, %s134
    %p140 = scmp.eq.s32.totalorder %s11, 0
    %p141 = por %p139, %p140
    %p142 = scmp.ne.s32.totalorder %s131, %s134
    %p143 = scmp.eq.s32.totalorder %s16, 1
    %p144 = por %p142, %p143
    %p145 = scmp.ne.s32.totalorder %s134, %s135
    %p146 = scmp.eq.s32.totalorder %s16, 0
    %p147 = por %p145, %p146
    %p148 = scmp.ne.s32.totalorder %s134, %s135
    %p149 = scmp.eq.s32.totalorder %s17, 1
    %p150 = por %p148, %p149
    %p152 = scmp.ne.s32.totalorder %s135, %s151
    %p153 = scmp.eq.s32.totalorder %s17, 0
    %p154 = por %p152, %p153
    %p155 = scmp.le.s32.totalorder 1, %s11
    %p156 = scmp.lt.s32.totalorder %s11, 3
    %p157 = pnand %p155, %p156
    %p158 = pneg %p157
    // Predicated region
    $region9: #{poolconv_forward.1} parent=5 // pred_check
      _
    $region10: #{poolconv_forward.1} parent=5 // pred_check_branch
      %160 = sbr.rel (%p157) target = $region12
    $region11: #{poolconv_forward.1} parent=5 // pred_region
      %s161 = ssub.s32 %s11, 1
      // Predicated region
      $region13: #{poolconv_forward.1} parent=11 // pred_check
        %p162 = pneg %p58
      $region14: #{poolconv_forward.1} parent=11 // pred_check_branch
        %164 = sbr.rel (%p162) target = $region16
      $region15: #{poolconv_forward.1} parent=11 // pred_region
        _
      $region16: #{poolconv_forward.1} parent=11 // pred_fallthru
        _
      // Predicated region
      $region17: #{poolconv_forward.1} parent=11 // pred_check
        %p165 = pneg %p79
      $region18: #{poolconv_forward.1} parent=11 // pred_check_branch
        %167 = sbr.rel (%p165) target = $region20
      $region19: #{poolconv_forward.1} parent=11 // pred_region
        _
      $region20: #{poolconv_forward.1} parent=11 // pred_fallthru
        _
      // Predicated region
      $region21: #{poolconv_forward.1} parent=11 // pred_check
        %p168 = pneg %p100
      $region22: #{poolconv_forward.1} parent=11 // pred_check_branch
        %170 = sbr.rel (%p168) target = $region24
      $region23: #{poolconv_forward.1} parent=11 // pred_region
        _
      $region24: #{poolconv_forward.1} parent=11 // pred_fallthru
        _
      // Predicated region
      $region25: #{poolconv_forward.1} parent=11 // pred_check
        %p171 = pneg %p121
      $region26: #{poolconv_forward.1} parent=11 // pred_check_branch
        %173 = sbr.rel (%p171) target = $region28
      $region27: #{poolconv_forward.1} parent=11 // pred_region
        _
      $region28: #{poolconv_forward.1} parent=11 // pred_fallthru
        _
    $region12: #{poolconv_forward.1} parent=5 // pred_fallthru
      _
    %p174 = scmp.lt.s32.totalorder %s11, 2
    // Predicated region
    $region29: #{poolconv_forward.1} parent=5 // pred_check
      %p175 = pneg %p174
    $region30: #{poolconv_forward.1} parent=5 // pred_check_branch
      %177 = sbr.rel (%p175) target = $region32
    $region31: #{poolconv_forward.1} parent=5 // pred_region
      // Predicated region
      $region33: #{poolconv_forward.1} parent=31 // pred_check
        %p178 = pneg %p31
      $region34: #{poolconv_forward.1} parent=31 // pred_check_branch
        %180 = sbr.rel (%p178) target = $region36
      $region35: #{poolconv_forward.1} parent=31 // pred_region
        %p181 = scmp.lt.s32.totalorder %s11, 1
        %s182 = scalar_select %p181, %s11, 1
        %s183 = smul.addr %s182, 16
        %s184 = smul.addr %s183, 8
        %s185 = scalar_lea.vmem %s0, %s184
      $region36: #{poolconv_forward.1} parent=31 // pred_fallthru
        _
    $region32: #{poolconv_forward.1} parent=5 // pred_fallthru
      _
    %p186 = scmp.le.s32.totalorder 1, %s11
    %p187 = scmp.lt.s32.totalorder %s11, 3
    %p188 = pnand %p186, %p187
    %p189 = pneg %p188
    // Predicated region
    $region37: #{poolconv_forward.1} parent=5 // pred_check
      _
    $region38: #{poolconv_forward.1} parent=5 // pred_check_branch
      %191 = sbr.rel (%p188) target = $region40
    $region39: #{poolconv_forward.1} parent=5 // pred_region
      %s192 = ssub.s32 %s11, 1
      %p193 = scmp.lt.s32.totalorder %s16, 1
      %s194 = scalar_select %p193, %s16, 1
      %s195 = smul.addr %s194, 16
      %s196 = smul.addr %s195, 8
      %s197 = scalar_lea.vmem %s0, %s196
      %p198 = pneg %p37
      %p199 = pneg %p34
      %p200 = pneg %p58
      %p201 = pneg %p55
      %p202 = pneg %p79
      %p203 = pneg %p76
      %p204 = pneg %p100
      %p205 = pneg %p97
      %p206 = pneg %p121
      %p207 = pneg %p118
      %p208 = pneg %p147
      %p209 = pneg %p144
      %p210 = scmp.lt.s32.totalorder %s16, 1
      %s211 = scalar_select %p210, %s16, 1
      %s212 = smul.addr %s211, 8
      %s213 = smul.addr %s212, 8
      %s214 = scalar_lea.vmem %s5, %s213
      %p215 = scmp.lt.s32.totalorder %s16, 1
      %s216 = scalar_select %p215, %s16, 1
      %s217 = smul.addr %s216, 16
      %s218 = smul.addr %s217, 8
      %s219 = scalar_lea.vmem %s0, %s218
      %p220 = scmp.lt.s32.totalorder %s16, 1
      %s221 = scalar_select %p220, %s16, 1
      %s222 = smul.addr %s221, 8
      %s223 = smul.addr %s222, 8
      %s224 = scalar_lea.vmem %s5, %s223
      %v225 = vld [vmem:[%s219] sm:$0xff]
      %v226 = vld [vmem:[%s219 + $0x8] sm:$0xff]
      %v227 = vld [vmem:[%s219 + $0x10] sm:$0xff]
      %v228 = vld [vmem:[%s219 + $0x18] sm:$0xff]
      %v229 = vld [vmem:[%s219 + $0x20] sm:$0xff]
      %v230 = vld [vmem:[%s219 + $0x28] sm:$0xff]
      %v231 = vld [vmem:[%s219 + $0x30] sm:$0xff]
      %v232 = vld [vmem:[%s219 + $0x38] sm:$0xff]
      %v233 = vld [vmem:[%s219 + $0x40] sm:$0xff]
      %v234 = vld [vmem:[%s219 + $0x48] sm:$0xff]
      %v235 = vld [vmem:[%s219 + $0x50] sm:$0xff]
      %v236 = vld [vmem:[%s219 + $0x58] sm:$0xff]
      %v237 = vld [vmem:[%s219 + $0x60] sm:$0xff]
      %v238 = vld [vmem:[%s219 + $0x68] sm:$0xff]
      %v239 = vld [vmem:[%s219 + $0x70] sm:$0xff]
      %v240 = vld [vmem:[%s219 + $0x78] sm:$0xff]
      %257 = vrot.lane.b32.xlu0 %v225, 124
      %v258 = vpop.permute.xlu0 %257
      %259 = vrot.lane.b32.xlu0 %v226, 124
      %v260 = vpop.permute.xlu0 %259
      %261 = vrot.lane.b32.xlu0 %v227, 124
      %v262 = vpop.permute.xlu0 %261
      %263 = vrot.lane.b32.xlu0 %v228, 124
      %v264 = vpop.permute.xlu0 %263
      %265 = vrot.lane.b32.xlu0 %v229, 124
      %v266 = vpop.permute.xlu0 %265
      %267 = vrot.lane.b32.xlu0 %v230, 124
      %v268 = vpop.permute.xlu0 %267
      %269 = vrot.lane.b32.xlu0 %v231, 124
      %v270 = vpop.permute.xlu0 %269
      %271 = vrot.lane.b32.xlu0 %v232, 124
      %v272 = vpop.permute.xlu0 %271
      %273 = vrot.lane.b32.xlu0 %v233, 124
      %v274 = vpop.permute.xlu0 %273
      %275 = vrot.lane.b32.xlu0 %v234, 124
      %v276 = vpop.permute.xlu0 %275
      %277 = vrot.lane.b32.xlu0 %v235, 124
      %v278 = vpop.permute.xlu0 %277
      %279 = vrot.lane.b32.xlu0 %v236, 124
      %v280 = vpop.permute.xlu0 %279
      %281 = vrot.lane.b32.xlu0 %v237, 124
      %v282 = vpop.permute.xlu0 %281
      %283 = vrot.lane.b32.xlu0 %v238, 124
      %v284 = vpop.permute.xlu0 %283
      %285 = vrot.lane.b32.xlu0 %v239, 124
      %v286 = vpop.permute.xlu0 %285
      %287 = vrot.lane.b32.xlu0 %v240, 124
      %v288 = vpop.permute.xlu0 %287
      %v305 = vmax.f32 %v225, %v258
      %v306 = vmax.f32 %v226, %v260
      %v307 = vmax.f32 %v227, %v262
      %v308 = vmax.f32 %v228, %v264
      %v309 = vmax.f32 %v229, %v266
      %v310 = vmax.f32 %v230, %v268
      %v311 = vmax.f32 %v231, %v270
      %v312 = vmax.f32 %v232, %v272
      %v313 = vmax.f32 %v233, %v274
      %v314 = vmax.f32 %v234, %v276
      %v315 = vmax.f32 %v235, %v278
      %v316 = vmax.f32 %v236, %v280
      %v317 = vmax.f32 %v237, %v282
      %v318 = vmax.f32 %v238, %v284
      %v319 = vmax.f32 %v239, %v286
      %v320 = vmax.f32 %v240, %v288
      %v321 = vmax.f32 %v305, %v306
      %v322 = vmax.f32 %v307, %v308
      %v323 = vmax.f32 %v309, %v310
      %v324 = vmax.f32 %v311, %v312
      %v325 = vmax.f32 %v313, %v314
      %v326 = vmax.f32 %v315, %v316
      %v327 = vmax.f32 %v317, %v318
      %v328 = vmax.f32 %v319, %v320
      %vm329 = vcmask 31744
      %330 = vst.msk [vmem:[#allocation2] sm:$0xff] %vm329, 0.0
      %vm331 = vcmask 25600
      %332 = vst.msk [vmem:[#allocation2 + $0x8] sm:$0x3] %vm331, 0.0
      %333 = vst.msk [vmem:[#allocation2 + $0x10] sm:$0xff] %vm329, 0.0
      %334 = vst.msk [vmem:[#allocation2 + $0x18] sm:$0x3] %vm331, 0.0
      %335 = vst.msk [vmem:[#allocation2 + $0x20] sm:$0xff] %vm329, 0.0
      %336 = vst.msk [vmem:[#allocation2 + $0x28] sm:$0x3] %vm331, 0.0
      %337 = vst.msk [vmem:[#allocation2 + $0x30] sm:$0xff] %vm329, 0.0
      %338 = vst.msk [vmem:[#allocation2 + $0x38] sm:$0x3] %vm331, 0.0
      %339 = vst.msk [vmem:[#allocation2 + $0x40] sm:$0xff] %vm329, 0.0
      %340 = vst.msk [vmem:[#allocation2 + $0x48] sm:$0x3] %vm331, 0.0
      %341 = vst.msk [vmem:[#allocation2 + $0x50] sm:$0xff] %vm329, 0.0
      %342 = vst.msk [vmem:[#allocation2 + $0x58] sm:$0x3] %vm331, 0.0
      %343 = vst.msk [vmem:[#allocation2 + $0x60] sm:$0xff] %vm329, 0.0
      %344 = vst.msk [vmem:[#allocation2 + $0x68] sm:$0x3] %vm331, 0.0
      %345 = vst.msk [vmem:[#allocation2 + $0x70] sm:$0xff] %vm329, 0.0
      %346 = vst.msk [vmem:[#allocation2 + $0x78] sm:$0x3] %vm331, 0.0
      %347 = vst.msk [vmem:[#allocation2 + $0x80] sm:$0xff] %vm329, 0.0
      %348 = vst.msk [vmem:[#allocation2 + $0x88] sm:$0x3] %vm331, 0.0
      %349 = vst.msk [vmem:[#allocation2 + $0x90] sm:$0xff] %vm329, 0.0
      %350 = vst.msk [vmem:[#allocation2 + $0x98] sm:$0x3] %vm331, 0.0
      %s351 = scalar_lea.vmem [#allocation2], 16
      %352 = vst.msk [vmem:[%s351 + $0x1] sm:$0xff] %vm329, %v321
      %353 = vst.msk [vmem:[%s351 + $0x11] sm:$0xff] %vm329, %v322
      %354 = vst.msk [vmem:[%s351 + $0x21] sm:$0xff] %vm329, %v323
      %355 = vst.msk [vmem:[%s351 + $0x31] sm:$0xff] %vm329, %v324
      %356 = vst.msk [vmem:[%s351 + $0x41] sm:$0xff] %vm329, %v325
      %357 = vst.msk [vmem:[%s351 + $0x51] sm:$0xff] %vm329, %v326
      %358 = vst.msk [vmem:[%s351 + $0x61] sm:$0xff] %vm329, %v327
      %359 = vst.msk [vmem:[%s351 + $0x71] sm:$0xff] %vm329, %v328
      %v360 = vld [vmem:[#allocation2] sm:$0xff]
      %v361 = vld [vmem:[#allocation2 + $0x10] sm:$0xff]
      %v362 = vld [vmem:[#allocation2 + $0x20] sm:$0xff]
      %v363 = vld [vmem:[#allocation2 + $0x30] sm:$0xff]
      %v364 = vld [vmem:[#allocation2 + $0x40] sm:$0xff]
      %v365 = vld [vmem:[#allocation2 + $0x50] sm:$0xff]
      %v366 = vld [vmem:[#allocation2 + $0x60] sm:$0xff]
      %v367 = vld [vmem:[#allocation2 + $0x70] sm:$0xff]
      %v368 = vld [vmem:[%s1] sm:$0xf]
      %v369 = vld [vmem:[#allocation2 + $0x1] sm:$0xff]
      %v370 = vld [vmem:[#allocation2 + $0x11] sm:$0xff]
      %v371 = vld [vmem:[#allocation2 + $0x21] sm:$0xff]
      %v372 = vld [vmem:[#allocation2 + $0x31] sm:$0xff]
      %v373 = vld [vmem:[#allocation2 + $0x41] sm:$0xff]
      %v374 = vld [vmem:[#allocation2 + $0x51] sm:$0xff]
      %v375 = vld [vmem:[#allocation2 + $0x61] sm:$0xff]
      %v376 = vld [vmem:[#allocation2 + $0x71] sm:$0xff]
      %s377 = scalar_lea.vmem %s1, 4
      %v378 = vld [vmem:[%s377] sm:$0xf]
      %v380 = vsel %vm329, %v369, 0
      %v383 = vsel %vm329, %v370, 0
      %v386 = vsel %vm329, %v371, 0
      %v389 = vsel %vm329, %v372, 0
      %v392 = vsel %vm329, %v373, 0
      %v395 = vsel %vm329, %v374, 0
      %v398 = vsel %vm329, %v375, 0
      %v401 = vsel %vm329, %v376, 0
      %vm403 = vcmask 1043456
      %v405 = vsel %vm403, %v378, 0
      %407 = vmatprep.subr.mxu0 0.0
      %408 = vmatpush1.msra.mxu0 0.0
      %409 = vmatprep.subr.mxu0 0.0
      %410 = vmatpush1.msra.mxu0 0.0
      %411 = vmatprep.subr.mxu0 0.0
      %412 = vmatpush1.msra.mxu0 0.0
      %413 = vmatprep.subr.mxu0 0.0
      %414 = vmatpush1.msra.mxu0 0.0
      %415 = vmatprep.subr.mxu0 0.0
      %416 = vmatpush1.msra.mxu0 0.0
      %417 = vmatprep.subr.mxu0 0.0
      %418 = vmatpush1.msra.mxu0 0.0
      %419 = vmatprep.subr.mxu0 0.0
      %420 = vmatpush1.msra.mxu0 0.0
      %421 = vmatprep.subr.mxu0 0.0
      %422 = vmatpush1.msra.mxu0 0.0
      %423 = vmatprep.subr.mxu0 0.0
      %424 = vmatpush1.msra.mxu0 0.0
      %425 = vmatprep.subr.mxu0 0.0
      %426 = vmatpush1.msra.mxu0 0.0
      %427 = vmatprep.subr.mxu0 0.0
      %428 = vmatpush1.msra.mxu0 0.0
      %429 = vmatprep.subr.mxu0 0.0
      %430 = vmatpush1.msra.mxu0 0.0
      %431 = vmatprep.subr.mxu0 0.0
      %432 = vmatpush1.msra.mxu0 0.0
      %433 = vmatprep.subr.mxu0 0.0
      %434 = vmatpush1.msra.mxu0 0.0
      %435 = vmatprep.subr.mxu0 0.0
      %436 = vmatpush1.msra.mxu0 0.0
      %437 = vmatprep.subr.mxu0 0.0
      %438 = vmatpush1.msra.mxu0 %v405
      %439 = vmatprep.subr.mxu0 0.0
      %440 = vmatpush2.msra.mxu0 0.0
      %441 = vmatprep.subr.mxu0 0.0
      %442 = vmatpush2.msra.mxu0 0.0
      %443 = vmatprep.subr.mxu0 0.0
      %444 = vmatpush2.msra.mxu0 0.0
      %445 = vmatprep.subr.mxu0 0.0
      %446 = vmatpush2.msra.mxu0 0.0
      %447 = vmatprep.subr.mxu0 0.0
      %448 = vmatpush2.msra.mxu0 0.0
      %449 = vmatprep.subr.mxu0 0.0
      %450 = vmatpush2.msra.mxu0 0.0
      %451 = vmatprep.subr.mxu0 0.0
      %452 = vmatpush2.msra.mxu0 0.0
      %453 = vmatprep.subr.mxu0 0.0
      %454 = vmatpush2.msra.mxu0 0.0
      %455 = vmatprep.subr.mxu0 0.0
      %456 = vmatpush2.msra.mxu0 0.0
      %457 = vmatprep.subr.mxu0 0.0
      %458 = vmatpush2.msra.mxu0 0.0
      %459 = vmatprep.subr.mxu0 0.0
      %460 = vmatpush2.msra.mxu0 0.0
      %461 = vmatprep.subr.mxu0 0.0
      %462 = vmatpush2.msra.mxu0 0.0
      %463 = vmatprep.subr.mxu0 0.0
      %464 = vmatpush2.msra.mxu0 0.0
      %465 = vmatprep.subr.mxu0 0.0
      %466 = vmatpush2.msra.mxu0 0.0
      %467 = vmatprep.subr.mxu0 0.0
      %468 = vmatpush2.msra.mxu0 0.0
      %469 = vmatprep.subr.mxu0 0.0
      %470 = vmatpush2.msra.mxu0 0.0
      %471 = vmatprep.mubr.f32.mxu0 0.0
      %472 = vmatmul.mubr.f32.gmra.mxu0 %v380
      %v473 = vpop.f32.mrf.mxu0
      %v474 = vadd.f32 0.0, %v473
      %v475 = vpop.f32.mrf.mxu0
      %476 = vmatprep.mubr.f32.mxu0 0.0
      %477 = vmatmul.mubr.f32.gmra.mxu0 %v383
      %v478 = vpop.f32.mrf.mxu0
      %v479 = vadd.f32 0.0, %v478
      %v480 = vpop.f32.mrf.mxu0
      %481 = vmatprep.mubr.f32.mxu0 0.0
      %482 = vmatmul.mubr.f32.gmra.mxu0 %v386
      %v483 = vpop.f32.mrf.mxu0
      %v484 = vadd.f32 0.0, %v483
      %v485 = vpop.f32.mrf.mxu0
      %486 = vmatprep.mubr.f32.mxu0 0.0
      %487 = vmatmul.mubr.f32.gmra.mxu0 %v389
      %v488 = vpop.f32.mrf.mxu0
      %v489 = vadd.f32 0.0, %v488
      %v490 = vpop.f32.mrf.mxu0
      %491 = vmatprep.mubr.f32.mxu0 0.0
      %492 = vmatmul.mubr.f32.gmra.mxu0 %v392
      %v493 = vpop.f32.mrf.mxu0
      %v494 = vadd.f32 0.0, %v493
      %v495 = vpop.f32.mrf.mxu0
      %496 = vmatprep.mubr.f32.mxu0 0.0
      %497 = vmatmul.mubr.f32.gmra.mxu0 %v395
      %v498 = vpop.f32.mrf.mxu0
      %v499 = vadd.f32 0.0, %v498
      %v500 = vpop.f32.mrf.mxu0
      %501 = vmatprep.mubr.f32.mxu0 0.0
      %502 = vmatmul.mubr.f32.gmra.mxu0 %v398
      %v503 = vpop.f32.mrf.mxu0
      %v504 = vadd.f32 0.0, %v503
      %v505 = vpop.f32.mrf.mxu0
      %506 = vmatprep.mubr.f32.mxu0 0.0
      %507 = vmatmul.mubr.f32.gmra.mxu0 %v401
      %v508 = vpop.f32.mrf.mxu0
      %v509 = vadd.f32 0.0, %v508
      %v510 = vpop.f32.mrf.mxu0
      %511 = vdwg.mxu0
      %v513 = vsel %vm329, %v360, 0
      %v516 = vsel %vm329, %v361, 0
      %v519 = vsel %vm329, %v362, 0
      %v522 = vsel %vm329, %v363, 0
      %v525 = vsel %vm329, %v364, 0
      %v528 = vsel %vm329, %v365, 0
      %v531 = vsel %vm329, %v366, 0
      %v534 = vsel %vm329, %v367, 0
      %v537 = vsel %vm403, %v368, 0
      %539 = vmatprep.subr.mxu0 0.0
      %540 = vmatpush1.msra.mxu0 0.0
      %541 = vmatprep.subr.mxu0 0.0
      %542 = vmatpush1.msra.mxu0 0.0
      %543 = vmatprep.subr.mxu0 0.0
      %544 = vmatpush1.msra.mxu0 0.0
      %545 = vmatprep.subr.mxu0 0.0
      %546 = vmatpush1.msra.mxu0 0.0
      %547 = vmatprep.subr.mxu0 0.0
      %548 = vmatpush1.msra.mxu0 0.0
      %549 = vmatprep.subr.mxu0 0.0
      %550 = vmatpush1.msra.mxu0 0.0
      %551 = vmatprep.subr.mxu0 0.0
      %552 = vmatpush1.msra.mxu0 0.0
      %553 = vmatprep.subr.mxu0 0.0
      %554 = vmatpush1.msra.mxu0 0.0
      %555 = vmatprep.subr.mxu0 0.0
      %556 = vmatpush1.msra.mxu0 0.0
      %557 = vmatprep.subr.mxu0 0.0
      %558 = vmatpush1.msra.mxu0 0.0
      %559 = vmatprep.subr.mxu0 0.0
      %560 = vmatpush1.msra.mxu0 0.0
      %561 = vmatprep.subr.mxu0 0.0
      %562 = vmatpush1.msra.mxu0 0.0
      %563 = vmatprep.subr.mxu0 0.0
      %564 = vmatpush1.msra.mxu0 0.0
      %565 = vmatprep.subr.mxu0 0.0
      %566 = vmatpush1.msra.mxu0 0.0
      %567 = vmatprep.subr.mxu0 0.0
      %568 = vmatpush1.msra.mxu0 0.0
      %569 = vmatprep.subr.mxu0 0.0
      %570 = vmatpush1.msra.mxu0 %v537
      %571 = vmatprep.subr.mxu0 0.0
      %572 = vmatpush2.msra.mxu0 0.0
      %573 = vmatprep.subr.mxu0 0.0
      %574 = vmatpush2.msra.mxu0 0.0
      %575 = vmatprep.subr.mxu0 0.0
      %576 = vmatpush2.msra.mxu0 0.0
      %577 = vmatprep.subr.mxu0 0.0
      %578 = vmatpush2.msra.mxu0 0.0
      %579 = vmatprep.subr.mxu0 0.0
      %580 = vmatpush2.msra.mxu0 0.0
      %581 = vmatprep.subr.mxu0 0.0
      %582 = vmatpush2.msra.mxu0 0.0
      %583 = vmatprep.subr.mxu0 0.0
      %584 = vmatpush2.msra.mxu0 0.0
      %585 = vmatprep.subr.mxu0 0.0
      %586 = vmatpush2.msra.mxu0 0.0
      %587 = vmatprep.subr.mxu0 0.0
      %588 = vmatpush2.msra.mxu0 0.0
      %589 = vmatprep.subr.mxu0 0.0
      %590 = vmatpush2.msra.mxu0 0.0
      %591 = vmatprep.subr.mxu0 0.0
      %592 = vmatpush2.msra.mxu0 0.0
      %593 = vmatprep.subr.mxu0 0.0
      %594 = vmatpush2.msra.mxu0 0.0
      %595 = vmatprep.subr.mxu0 0.0
      %596 = vmatpush2.msra.mxu0 0.0
      %597 = vmatprep.subr.mxu0 0.0
      %598 = vmatpush2.msra.mxu0 0.0
      %599 = vmatprep.subr.mxu0 0.0
      %600 = vmatpush2.msra.mxu0 0.0
      %601 = vmatprep.subr.mxu0 0.0
      %602 = vmatpush2.msra.mxu0 0.0
      %603 = vmatprep.mubr.f32.mxu0 0.0
      %604 = vmatmul.mubr.f32.gmra.mxu0 %v513
      %v605 = vpop.f32.mrf.mxu0
      %v606 = vadd.f32 %v474, %v605
      %v607 = vpop.f32.mrf.mxu0
      %608 = vmatprep.mubr.f32.mxu0 0.0
      %609 = vmatmul.mubr.f32.gmra.mxu0 %v516
      %v610 = vpop.f32.mrf.mxu0
      %v611 = vadd.f32 %v479, %v610
      %v612 = vpop.f32.mrf.mxu0
      %613 = vmatprep.mubr.f32.mxu0 0.0
      %614 = vmatmul.mubr.f32.gmra.mxu0 %v519
      %v615 = vpop.f32.mrf.mxu0
      %v616 = vadd.f32 %v484, %v615
      %v617 = vpop.f32.mrf.mxu0
      %618 = vmatprep.mubr.f32.mxu0 0.0
      %619 = vmatmul.mubr.f32.gmra.mxu0 %v522
      %v620 = vpop.f32.mrf.mxu0
      %v621 = vadd.f32 %v489, %v620
      %v622 = vpop.f32.mrf.mxu0
      %623 = vmatprep.mubr.f32.mxu0 0.0
      %624 = vmatmul.mubr.f32.gmra.mxu0 %v525
      %v625 = vpop.f32.mrf.mxu0
      %v626 = vadd.f32 %v494, %v625
      %v627 = vpop.f32.mrf.mxu0
      %628 = vmatprep.mubr.f32.mxu0 0.0
      %629 = vmatmul.mubr.f32.gmra.mxu0 %v528
      %v630 = vpop.f32.mrf.mxu0
      %v631 = vadd.f32 %v499, %v630
      %v632 = vpop.f32.mrf.mxu0
      %633 = vmatprep.mubr.f32.mxu0 0.0
      %634 = vmatmul.mubr.f32.gmra.mxu0 %v531
      %v635 = vpop.f32.mrf.mxu0
      %v636 = vadd.f32 %v504, %v635
      %v637 = vpop.f32.mrf.mxu0
      %638 = vmatprep.mubr.f32.mxu0 0.0
      %639 = vmatmul.mubr.f32.gmra.mxu0 %v534
      %v640 = vpop.f32.mrf.mxu0
      %v641 = vadd.f32 %v509, %v640
      %v642 = vpop.f32.mrf.mxu0
      %643 = vdwg.mxu0
      %v644 = vld [vmem:[#allocation2 + $0x2] sm:$0xff]
      %v645 = vld [vmem:[#allocation2 + $0x12] sm:$0xff]
      %v646 = vld [vmem:[#allocation2 + $0x22] sm:$0xff]
      %v647 = vld [vmem:[#allocation2 + $0x32] sm:$0xff]
      %v648 = vld [vmem:[#allocation2 + $0x42] sm:$0xff]
      %v649 = vld [vmem:[#allocation2 + $0x52] sm:$0xff]
      %v650 = vld [vmem:[#allocation2 + $0x62] sm:$0xff]
      %v651 = vld [vmem:[#allocation2 + $0x72] sm:$0xff]
      %s652 = scalar_lea.vmem %s1, 8
      %v653 = vld [vmem:[%s652] sm:$0xf]
      %v655 = vsel %vm329, %v644, 0
      %v658 = vsel %vm329, %v645, 0
      %v661 = vsel %vm329, %v646, 0
      %v664 = vsel %vm329, %v647, 0
      %v667 = vsel %vm329, %v648, 0
      %v670 = vsel %vm329, %v649, 0
      %v673 = vsel %vm329, %v650, 0
      %v676 = vsel %vm329, %v651, 0
      %v679 = vsel %vm403, %v653, 0
      %681 = vmatprep.subr.mxu0 0.0
      %682 = vmatpush1.msra.mxu0 0.0
      %683 = vmatprep.subr.mxu0 0.0
      %684 = vmatpush1.msra.mxu0 0.0
      %685 = vmatprep.subr.mxu0 0.0
      %686 = vmatpush1.msra.mxu0 0.0
      %687 = vmatprep.subr.mxu0 0.0
      %688 = vmatpush1.msra.mxu0 0.0
      %689 = vmatprep.subr.mxu0 0.0
      %690 = vmatpush1.msra.mxu0 0.0
      %691 = vmatprep.subr.mxu0 0.0
      %692 = vmatpush1.msra.mxu0 0.0
      %693 = vmatprep.subr.mxu0 0.0
      %694 = vmatpush1.msra.mxu0 0.0
      %695 = vmatprep.subr.mxu0 0.0
      %696 = vmatpush1.msra.mxu0 0.0
      %697 = vmatprep.subr.mxu0 0.0
      %698 = vmatpush1.msra.mxu0 0.0
      %699 = vmatprep.subr.mxu0 0.0
      %700 = vmatpush1.msra.mxu0 0.0
      %701 = vmatprep.subr.mxu0 0.0
      %702 = vmatpush1.msra.mxu0 0.0
      %703 = vmatprep.subr.mxu0 0.0
      %704 = vmatpush1.msra.mxu0 0.0
      %705 = vmatprep.subr.mxu0 0.0
      %706 = vmatpush1.msra.mxu0 0.0
      %707 = vmatprep.subr.mxu0 0.0
      %708 = vmatpush1.msra.mxu0 0.0
      %709 = vmatprep.subr.mxu0 0.0
      %710 = vmatpush1.msra.mxu0 0.0
      %711 = vmatprep.subr.mxu0 0.0
      %712 = vmatpush1.msra.mxu0 %v679
      %713 = vmatprep.subr.mxu0 0.0
      %714 = vmatpush2.msra.mxu0 0.0
      %715 = vmatprep.subr.mxu0 0.0
      %716 = vmatpush2.msra.mxu0 0.0
      %717 = vmatprep.subr.mxu0 0.0
      %718 = vmatpush2.msra.mxu0 0.0
      %719 = vmatprep.subr.mxu0 0.0
      %720 = vmatpush2.msra.mxu0 0.0
      %721 = vmatprep.subr.mxu0 0.0
      %722 = vmatpush2.msra.mxu0 0.0
      %723 = vmatprep.subr.mxu0 0.0
      %724 = vmatpush2.msra.mxu0 0.0
      %725 = vmatprep.subr.mxu0 0.0
      %726 = vmatpush2.msra.mxu0 0.0
      %727 = vmatprep.subr.mxu0 0.0
      %728 = vmatpush2.msra.mxu0 0.0
      %729 = vmatprep.subr.mxu0 0.0
      %730 = vmatpush2.msra.mxu0 0.0
      %731 = vmatprep.subr.mxu0 0.0
      %732 = vmatpush2.msra.mxu0 0.0
      %733 = vmatprep.subr.mxu0 0.0
      %734 = vmatpush2.msra.mxu0 0.0
      %735 = vmatprep.subr.mxu0 0.0
      %736 = vmatpush2.msra.mxu0 0.0
      %737 = vmatprep.subr.mxu0 0.0
      %738 = vmatpush2.msra.mxu0 0.0
      %739 = vmatprep.subr.mxu0 0.0
      %740 = vmatpush2.msra.mxu0 0.0
      %741 = vmatprep.subr.mxu0 0.0
      %742 = vmatpush2.msra.mxu0 0.0
      %743 = vmatprep.subr.mxu0 0.0
      %744 = vmatpush2.msra.mxu0 0.0
      %745 = vmatprep.mubr.f32.mxu0 0.0
      %746 = vmatmul.mubr.f32.gmra.mxu0 %v655
      %v747 = vpop.f32.mrf.mxu0
      %v748 = vadd.f32 0.0, %v747
      %v749 = vpop.f32.mrf.mxu0
      %750 = vmatprep.mubr.f32.mxu0 0.0
      %751 = vmatmul.mubr.f32.gmra.mxu0 %v658
      %v752 = vpop.f32.mrf.mxu0
      %v753 = vadd.f32 0.0, %v752
      %v754 = vpop.f32.mrf.mxu0
      %755 = vmatprep.mubr.f32.mxu0 0.0
      %756 = vmatmul.mubr.f32.gmra.mxu0 %v661
      %v757 = vpop.f32.mrf.mxu0
      %v758 = vadd.f32 0.0, %v757
      %v759 = vpop.f32.mrf.mxu0
      %760 = vmatprep.mubr.f32.mxu0 0.0
      %761 = vmatmul.mubr.f32.gmra.mxu0 %v664
      %v762 = vpop.f32.mrf.mxu0
      %v763 = vadd.f32 0.0, %v762
      %v764 = vpop.f32.mrf.mxu0
      %765 = vmatprep.mubr.f32.mxu0 0.0
      %766 = vmatmul.mubr.f32.gmra.mxu0 %v667
      %v767 = vpop.f32.mrf.mxu0
      %v768 = vadd.f32 0.0, %v767
      %v769 = vpop.f32.mrf.mxu0
      %770 = vmatprep.mubr.f32.mxu0 0.0
      %771 = vmatmul.mubr.f32.gmra.mxu0 %v670
      %v772 = vpop.f32.mrf.mxu0
      %v773 = vadd.f32 0.0, %v772
      %v774 = vpop.f32.mrf.mxu0
      %775 = vmatprep.mubr.f32.mxu0 0.0
      %776 = vmatmul.mubr.f32.gmra.mxu0 %v673
      %v777 = vpop.f32.mrf.mxu0
      %v778 = vadd.f32 0.0, %v777
      %v779 = vpop.f32.mrf.mxu0
      %780 = vmatprep.mubr.f32.mxu0 0.0
      %781 = vmatmul.mubr.f32.gmra.mxu0 %v676
      %v782 = vpop.f32.mrf.mxu0
      %v783 = vadd.f32 0.0, %v782
      %v784 = vpop.f32.mrf.mxu0
      %785 = vdwg.mxu0
      %v786 = vadd.f32 %v606, %v748
      %v787 = vadd.f32 %v611, %v753
      %v788 = vadd.f32 %v616, %v758
      %v789 = vadd.f32 %v621, %v763
      %v790 = vadd.f32 %v626, %v768
      %v791 = vadd.f32 %v631, %v773
      %v792 = vadd.f32 %v636, %v778
      %v793 = vadd.f32 %v641, %v783
      %v794 = vld [vmem:[%s351] sm:$0xff]
      %v795 = vld [vmem:[%s351 + $0x10] sm:$0xff]
      %v796 = vld [vmem:[%s351 + $0x20] sm:$0xff]
      %v797 = vld [vmem:[%s351 + $0x30] sm:$0xff]
      %v798 = vld [vmem:[%s351 + $0x40] sm:$0xff]
      %v799 = vld [vmem:[%s351 + $0x50] sm:$0xff]
      %v800 = vld [vmem:[%s351 + $0x60] sm:$0xff]
      %v801 = vld [vmem:[%s351 + $0x70] sm:$0xff]
      %s802 = scalar_lea.vmem %s1, 12
      %v803 = vld [vmem:[%s802] sm:$0xf]
      %v805 = vsel %vm329, %v794, 0
      %v808 = vsel %vm329, %v795, 0
      %v811 = vsel %vm329, %v796, 0
      %v814 = vsel %vm329, %v797, 0
      %v817 = vsel %vm329, %v798, 0
      %v820 = vsel %vm329, %v799, 0
      %v823 = vsel %vm329, %v800, 0
      %v826 = vsel %vm329, %v801, 0
      %v829 = vsel %vm403, %v803, 0
      %831 = vmatprep.subr.mxu0 0.0
      %832 = vmatpush1.msra.mxu0 0.0
      %833 = vmatprep.subr.mxu0 0.0
      %834 = vmatpush1.msra.mxu0 0.0
      %835 = vmatprep.subr.mxu0 0.0
      %836 = vmatpush1.msra.mxu0 0.0
      %837 = vmatprep.subr.mxu0 0.0
      %838 = vmatpush1.msra.mxu0 0.0
      %839 = vmatprep.subr.mxu0 0.0
      %840 = vmatpush1.msra.mxu0 0.0
      %841 = vmatprep.subr.mxu0 0.0
      %842 = vmatpush1.msra.mxu0 0.0
      %843 = vmatprep.subr.mxu0 0.0
      %844 = vmatpush1.msra.mxu0 0.0
      %845 = vmatprep.subr.mxu0 0.0
      %846 = vmatpush1.msra.mxu0 0.0
      %847 = vmatprep.subr.mxu0 0.0
      %848 = vmatpush1.msra.mxu0 0.0
      %849 = vmatprep.subr.mxu0 0.0
      %850 = vmatpush1.msra.mxu0 0.0
      %851 = vmatprep.subr.mxu0 0.0
      %852 = vmatpush1.msra.mxu0 0.0
      %853 = vmatprep.subr.mxu0 0.0
      %854 = vmatpush1.msra.mxu0 0.0
      %855 = vmatprep.subr.mxu0 0.0
      %856 = vmatpush1.msra.mxu0 0.0
      %857 = vmatprep.subr.mxu0 0.0
      %858 = vmatpush1.msra.mxu0 0.0
      %859 = vmatprep.subr.mxu0 0.0
      %860 = vmatpush1.msra.mxu0 0.0
      %861 = vmatprep.subr.mxu0 0.0
      %862 = vmatpush1.msra.mxu0 %v829
      %863 = vmatprep.subr.mxu0 0.0
      %864 = vmatpush2.msra.mxu0 0.0
      %865 = vmatprep.subr.mxu0 0.0
      %866 = vmatpush2.msra.mxu0 0.0
      %867 = vmatprep.subr.mxu0 0.0
      %868 = vmatpush2.msra.mxu0 0.0
      %869 = vmatprep.subr.mxu0 0.0
      %870 = vmatpush2.msra.mxu0 0.0
      %871 = vmatprep.subr.mxu0 0.0
      %872 = vmatpush2.msra.mxu0 0.0
      %873 = vmatprep.subr.mxu0 0.0
      %874 = vmatpush2.msra.mxu0 0.0
      %875 = vmatprep.subr.mxu0 0.0
      %876 = vmatpush2.msra.mxu0 0.0
      %877 = vmatprep.subr.mxu0 0.0
      %878 = vmatpush2.msra.mxu0 0.0
      %879 = vmatprep.subr.mxu0 0.0
      %880 = vmatpush2.msra.mxu0 0.0
      %881 = vmatprep.subr.mxu0 0.0
      %882 = vmatpush2.msra.mxu0 0.0
      %883 = vmatprep.subr.mxu0 0.0
      %884 = vmatpush2.msra.mxu0 0.0
      %885 = vmatprep.subr.mxu0 0.0
      %886 = vmatpush2.msra.mxu0 0.0
      %887 = vmatprep.subr.mxu0 0.0
      %888 = vmatpush2.msra.mxu0 0.0
      %889 = vmatprep.subr.mxu0 0.0
      %890 = vmatpush2.msra.mxu0 0.0
      %891 = vmatprep.subr.mxu0 0.0
      %892 = vmatpush2.msra.mxu0 0.0
      %893 = vmatprep.subr.mxu0 0.0
      %894 = vmatpush2.msra.mxu0 0.0
      %895 = vmatprep.mubr.f32.mxu0 0.0
      %896 = vmatmul.mubr.f32.gmra.mxu0 %v805
      %v897 = vpop.f32.mrf.mxu0
      %v898 = vadd.f32 0.0, %v897
      %v899 = vpop.f32.mrf.mxu0
      %900 = vmatprep.mubr.f32.mxu0 0.0
      %901 = vmatmul.mubr.f32.gmra.mxu0 %v808
      %v902 = vpop.f32.mrf.mxu0
      %v903 = vadd.f32 0.0, %v902
      %v904 = vpop.f32.mrf.mxu0
      %905 = vmatprep.mubr.f32.mxu0 0.0
      %906 = vmatmul.mubr.f32.gmra.mxu0 %v811
      %v907 = vpop.f32.mrf.mxu0
      %v908 = vadd.f32 0.0, %v907
      %v909 = vpop.f32.mrf.mxu0
      %910 = vmatprep.mubr.f32.mxu0 0.0
      %911 = vmatmul.mubr.f32.gmra.mxu0 %v814
      %v912 = vpop.f32.mrf.mxu0
      %v913 = vadd.f32 0.0, %v912
      %v914 = vpop.f32.mrf.mxu0
      %915 = vmatprep.mubr.f32.mxu0 0.0
      %916 = vmatmul.mubr.f32.gmra.mxu0 %v817
      %v917 = vpop.f32.mrf.mxu0
      %v918 = vadd.f32 0.0, %v917
      %v919 = vpop.f32.mrf.mxu0
      %920 = vmatprep.mubr.f32.mxu0 0.0
      %921 = vmatmul.mubr.f32.gmra.mxu0 %v820
      %v922 = vpop.f32.mrf.mxu0
      %v923 = vadd.f32 0.0, %v922
      %v924 = vpop.f32.mrf.mxu0
      %925 = vmatprep.mubr.f32.mxu0 0.0
      %926 = vmatmul.mubr.f32.gmra.mxu0 %v823
      %v927 = vpop.f32.mrf.mxu0
      %v928 = vadd.f32 0.0, %v927
      %v929 = vpop.f32.mrf.mxu0
      %930 = vmatprep.mubr.f32.mxu0 0.0
      %931 = vmatmul.mubr.f32.gmra.mxu0 %v826
      %v932 = vpop.f32.mrf.mxu0
      %v933 = vadd.f32 0.0, %v932
      %v934 = vpop.f32.mrf.mxu0
      %935 = vdwg.mxu0
      %v936 = vadd.f32 %v786, %v898
      %v937 = vadd.f32 %v787, %v903
      %v938 = vadd.f32 %v788, %v908
      %v939 = vadd.f32 %v789, %v913
      %v940 = vadd.f32 %v790, %v918
      %v941 = vadd.f32 %v791, %v923
      %v942 = vadd.f32 %v792, %v928
      %v943 = vadd.f32 %v793, %v933
      %v944 = vld [vmem:[%s351 + $0x1] sm:$0xff]
      %v945 = vld [vmem:[%s351 + $0x11] sm:$0xff]
      %v946 = vld [vmem:[%s351 + $0x21] sm:$0xff]
      %v947 = vld [vmem:[%s351 + $0x31] sm:$0xff]
      %v948 = vld [vmem:[%s351 + $0x41] sm:$0xff]
      %v949 = vld [vmem:[%s351 + $0x51] sm:$0xff]
      %v950 = vld [vmem:[%s351 + $0x61] sm:$0xff]
      %v951 = vld [vmem:[%s351 + $0x71] sm:$0xff]
      %s952 = scalar_lea.vmem %s1, 16
      %v953 = vld [vmem:[%s952] sm:$0xf]
      %v955 = vsel %vm329, %v944, 0
      %v958 = vsel %vm329, %v945, 0
      %v961 = vsel %vm329, %v946, 0
      %v964 = vsel %vm329, %v947, 0
      %v967 = vsel %vm329, %v948, 0
      %v970 = vsel %vm329, %v949, 0
      %v973 = vsel %vm329, %v950, 0
      %v976 = vsel %vm329, %v951, 0
      %v979 = vsel %vm403, %v953, 0
      %981 = vmatprep.subr.mxu0 0.0
      %982 = vmatpush1.msra.mxu0 0.0
      %983 = vmatprep.subr.mxu0 0.0
      %984 = vmatpush1.msra.mxu0 0.0
      %985 = vmatprep.subr.mxu0 0.0
      %986 = vmatpush1.msra.mxu0 0.0
      %987 = vmatprep.subr.mxu0 0.0
      %988 = vmatpush1.msra.mxu0 0.0
      %989 = vmatprep.subr.mxu0 0.0
      %990 = vmatpush1.msra.mxu0 0.0
      %991 = vmatprep.subr.mxu0 0.0
      %992 = vmatpush1.msra.mxu0 0.0
      %993 = vmatprep.subr.mxu0 0.0
      %994 = vmatpush1.msra.mxu0 0.0
      %995 = vmatprep.subr.mxu0 0.0
      %996 = vmatpush1.msra.mxu0 0.0
      %997 = vmatprep.subr.mxu0 0.0
      %998 = vmatpush1.msra.mxu0 0.0
      %999 = vmatprep.subr.mxu0 0.0
      %1000 = vmatpush1.msra.mxu0 0.0
      %1001 = vmatprep.subr.mxu0 0.0
      %1002 = vmatpush1.msra.mxu0 0.0
      %1003 = vmatprep.subr.mxu0 0.0
      %1004 = vmatpush1.msra.mxu0 0.0
      %1005 = vmatprep.subr.mxu0 0.0
      %1006 = vmatpush1.msra.mxu0 0.0
      %1007 = vmatprep.subr.mxu0 0.0
      %1008 = vmatpush1.msra.mxu0 0.0
      %1009 = vmatprep.subr.mxu0 0.0
      %1010 = vmatpush1.msra.mxu0 0.0
      %1011 = vmatprep.subr.mxu0 0.0
      %1012 = vmatpush1.msra.mxu0 %v979
      %1013 = vmatprep.subr.mxu0 0.0
      %1014 = vmatpush2.msra.mxu0 0.0
      %1015 = vmatprep.subr.mxu0 0.0
      %1016 = vmatpush2.msra.mxu0 0.0
      %1017 = vmatprep.subr.mxu0 0.0
      %1018 = vmatpush2.msra.mxu0 0.0
      %1019 = vmatprep.subr.mxu0 0.0
      %1020 = vmatpush2.msra.mxu0 0.0
      %1021 = vmatprep.subr.mxu0 0.0
      %1022 = vmatpush2.msra.mxu0 0.0
      %1023 = vmatprep.subr.mxu0 0.0
      %1024 = vmatpush2.msra.mxu0 0.0
      %1025 = vmatprep.subr.mxu0 0.0
      %1026 = vmatpush2.msra.mxu0 0.0
      %1027 = vmatprep.subr.mxu0 0.0
      %1028 = vmatpush2.msra.mxu0 0.0
      %1029 = vmatprep.subr.mxu0 0.0
      %1030 = vmatpush2.msra.mxu0 0.0
      %1031 = vmatprep.subr.mxu0 0.0
      %1032 = vmatpush2.msra.mxu0 0.0
      %1033 = vmatprep.subr.mxu0 0.0
      %1034 = vmatpush2.msra.mxu0 0.0
      %1035 = vmatprep.subr.mxu0 0.0
      %1036 = vmatpush2.msra.mxu0 0.0
      %1037 = vmatprep.subr.mxu0 0.0
      %1038 = vmatpush2.msra.mxu0 0.0
      %1039 = vmatprep.subr.mxu0 0.0
      %1040 = vmatpush2.msra.mxu0 0.0
      %1041 = vmatprep.subr.mxu0 0.0
      %1042 = vmatpush2.msra.mxu0 0.0
      %1043 = vmatprep.subr.mxu0 0.0
      %1044 = vmatpush2.msra.mxu0 0.0
      %1045 = vmatprep.mubr.f32.mxu0 0.0
      %1046 = vmatmul.mubr.f32.gmra.mxu0 %v955
      %v1047 = vpop.f32.mrf.mxu0
      %v1048 = vadd.f32 0.0, %v1047
      %v1049 = vpop.f32.mrf.mxu0
      %1050 = vmatprep.mubr.f32.mxu0 0.0
      %1051 = vmatmul.mubr.f32.gmra.mxu0 %v958
      %v1052 = vpop.f32.mrf.mxu0
      %v1053 = vadd.f32 0.0, %v1052
      %v1054 = vpop.f32.mrf.mxu0
      %1055 = vmatprep.mubr.f32.mxu0 0.0
      %1056 = vmatmul.mubr.f32.gmra.mxu0 %v961
      %v1057 = vpop.f32.mrf.mxu0
      %v1058 = vadd.f32 0.0, %v1057
      %v1059 = vpop.f32.mrf.mxu0
      %1060 = vmatprep.mubr.f32.mxu0 0.0
      %1061 = vmatmul.mubr.f32.gmra.mxu0 %v964
      %v1062 = vpop.f32.mrf.mxu0
      %v1063 = vadd.f32 0.0, %v1062
      %v1064 = vpop.f32.mrf.mxu0
      %1065 = vmatprep.mubr.f32.mxu0 0.0
      %1066 = vmatmul.mubr.f32.gmra.mxu0 %v967
      %v1067 = vpop.f32.mrf.mxu0
      %v1068 = vadd.f32 0.0, %v1067
      %v1069 = vpop.f32.mrf.mxu0
      %1070 = vmatprep.mubr.f32.mxu0 0.0
      %1071 = vmatmul.mubr.f32.gmra.mxu0 %v970
      %v1072 = vpop.f32.mrf.mxu0
      %v1073 = vadd.f32 0.0, %v1072
      %v1074 = vpop.f32.mrf.mxu0
      %1075 = vmatprep.mubr.f32.mxu0 0.0
      %1076 = vmatmul.mubr.f32.gmra.mxu0 %v973
      %v1077 = vpop.f32.mrf.mxu0
      %v1078 = vadd.f32 0.0, %v1077
      %v1079 = vpop.f32.mrf.mxu0
      %1080 = vmatprep.mubr.f32.mxu0 0.0
      %1081 = vmatmul.mubr.f32.gmra.mxu0 %v976
      %v1082 = vpop.f32.mrf.mxu0
      %v1083 = vadd.f32 0.0, %v1082
      %v1084 = vpop.f32.mrf.mxu0
      %1085 = vdwg.mxu0
      %v1086 = vadd.f32 %v936, %v1048
      %v1087 = vadd.f32 %v937, %v1053
      %v1088 = vadd.f32 %v938, %v1058
      %v1089 = vadd.f32 %v939, %v1063
      %v1090 = vadd.f32 %v940, %v1068
      %v1091 = vadd.f32 %v941, %v1073
      %v1092 = vadd.f32 %v942, %v1078
      %v1093 = vadd.f32 %v943, %v1083
      %v1094 = vld [vmem:[%s351 + $0x2] sm:$0xff]
      %v1095 = vld [vmem:[%s351 + $0x12] sm:$0xff]
      %v1096 = vld [vmem:[%s351 + $0x22] sm:$0xff]
      %v1097 = vld [vmem:[%s351 + $0x32] sm:$0xff]
      %v1098 = vld [vmem:[%s351 + $0x42] sm:$0xff]
      %v1099 = vld [vmem:[%s351 + $0x52] sm:$0xff]
      %v1100 = vld [vmem:[%s351 + $0x62] sm:$0xff]
      %v1101 = vld [vmem:[%s351 + $0x72] sm:$0xff]
      %s1102 = scalar_lea.vmem %s1, 20
      %v1103 = vld [vmem:[%s1102] sm:$0xf]
      %v1105 = vsel %vm329, %v1094, 0
      %v1108 = vsel %vm329, %v1095, 0
      %v1111 = vsel %vm329, %v1096, 0
      %v1114 = vsel %vm329, %v1097, 0
      %v1117 = vsel %vm329, %v1098, 0
      %v1120 = vsel %vm329, %v1099, 0
      %v1123 = vsel %vm329, %v1100, 0
      %v1126 = vsel %vm329, %v1101, 0
      %v1129 = vsel %vm403, %v1103, 0
      %1131 = vmatprep.subr.mxu0 0.0
      %1132 = vmatpush1.msra.mxu0 0.0
      %1133 = vmatprep.subr.mxu0 0.0
      %1134 = vmatpush1.msra.mxu0 0.0
      %1135 = vmatprep.subr.mxu0 0.0
      %1136 = vmatpush1.msra.mxu0 0.0
      %1137 = vmatprep.subr.mxu0 0.0
      %1138 = vmatpush1.msra.mxu0 0.0
      %1139 = vmatprep.subr.mxu0 0.0
      %1140 = vmatpush1.msra.mxu0 0.0
      %1141 = vmatprep.subr.mxu0 0.0
      %1142 = vmatpush1.msra.mxu0 0.0
      %1143 = vmatprep.subr.mxu0 0.0
      %1144 = vmatpush1.msra.mxu0 0.0
      %1145 = vmatprep.subr.mxu0 0.0
      %1146 = vmatpush1.msra.mxu0 0.0
      %1147 = vmatprep.subr.mxu0 0.0
      %1148 = vmatpush1.msra.mxu0 0.0
      %1149 = vmatprep.subr.mxu0 0.0
      %1150 = vmatpush1.msra.mxu0 0.0
      %1151 = vmatprep.subr.mxu0 0.0
      %1152 = vmatpush1.msra.mxu0 0.0
      %1153 = vmatprep.subr.mxu0 0.0
      %1154 = vmatpush1.msra.mxu0 0.0
      %1155 = vmatprep.subr.mxu0 0.0
      %1156 = vmatpush1.msra.mxu0 0.0
      %1157 = vmatprep.subr.mxu0 0.0
      %1158 = vmatpush1.msra.mxu0 0.0
      %1159 = vmatprep.subr.mxu0 0.0
      %1160 = vmatpush1.msra.mxu0 0.0
      %1161 = vmatprep.subr.mxu0 0.0
      %1162 = vmatpush1.msra.mxu0 %v1129
      %1163 = vmatprep.subr.mxu0 0.0
      %1164 = vmatpush2.msra.mxu0 0.0
      %1165 = vmatprep.subr.mxu0 0.0
      %1166 = vmatpush2.msra.mxu0 0.0
      %1167 = vmatprep.subr.mxu0 0.0
      %1168 = vmatpush2.msra.mxu0 0.0
      %1169 = vmatprep.subr.mxu0 0.0
      %1170 = vmatpush2.msra.mxu0 0.0
      %1171 = vmatprep.subr.mxu0 0.0
      %1172 = vmatpush2.msra.mxu0 0.0
      %1173 = vmatprep.subr.mxu0 0.0
      %1174 = vmatpush2.msra.mxu0 0.0
      %1175 = vmatprep.subr.mxu0 0.0
      %1176 = vmatpush2.msra.mxu0 0.0
      %1177 = vmatprep.subr.mxu0 0.0
      %1178 = vmatpush2.msra.mxu0 0.0
      %1179 = vmatprep.subr.mxu0 0.0
      %1180 = vmatpush2.msra.mxu0 0.0
      %1181 = vmatprep.subr.mxu0 0.0
      %1182 = vmatpush2.msra.mxu0 0.0
      %1183 = vmatprep.subr.mxu0 0.0
      %1184 = vmatpush2.msra.mxu0 0.0
      %1185 = vmatprep.subr.mxu0 0.0
      %1186 = vmatpush2.msra.mxu0 0.0
      %1187 = vmatprep.subr.mxu0 0.0
      %1188 = vmatpush2.msra.mxu0 0.0
      %1189 = vmatprep.subr.mxu0 0.0
      %1190 = vmatpush2.msra.mxu0 0.0
      %1191 = vmatprep.subr.mxu0 0.0
      %1192 = vmatpush2.msra.mxu0 0.0
      %1193 = vmatprep.subr.mxu0 0.0
      %1194 = vmatpush2.msra.mxu0 0.0
      %1195 = vmatprep.mubr.f32.mxu0 0.0
      %1196 = vmatmul.mubr.f32.gmra.mxu0 %v1105
      %v1197 = vpop.f32.mrf.mxu0
      %v1198 = vadd.f32 0.0, %v1197
      %v1199 = vpop.f32.mrf.mxu0
      %1200 = vmatprep.mubr.f32.mxu0 0.0
      %1201 = vmatmul.mubr.f32.gmra.mxu0 %v1108
      %v1202 = vpop.f32.mrf.mxu0
      %v1203 = vadd.f32 0.0, %v1202
      %v1204 = vpop.f32.mrf.mxu0
      %1205 = vmatprep.mubr.f32.mxu0 0.0
      %1206 = vmatmul.mubr.f32.gmra.mxu0 %v1111
      %v1207 = vpop.f32.mrf.mxu0
      %v1208 = vadd.f32 0.0, %v1207
      %v1209 = vpop.f32.mrf.mxu0
      %1210 = vmatprep.mubr.f32.mxu0 0.0
      %1211 = vmatmul.mubr.f32.gmra.mxu0 %v1114
      %v1212 = vpop.f32.mrf.mxu0
      %v1213 = vadd.f32 0.0, %v1212
      %v1214 = vpop.f32.mrf.mxu0
      %1215 = vmatprep.mubr.f32.mxu0 0.0
      %1216 = vmatmul.mubr.f32.gmra.mxu0 %v1117
      %v1217 = vpop.f32.mrf.mxu0
      %v1218 = vadd.f32 0.0, %v1217
      %v1219 = vpop.f32.mrf.mxu0
      %1220 = vmatprep.mubr.f32.mxu0 0.0
      %1221 = vmatmul.mubr.f32.gmra.mxu0 %v1120
      %v1222 = vpop.f32.mrf.mxu0
      %v1223 = vadd.f32 0.0, %v1222
      %v1224 = vpop.f32.mrf.mxu0
      %1225 = vmatprep.mubr.f32.mxu0 0.0
      %1226 = vmatmul.mubr.f32.gmra.mxu0 %v1123
      %v1227 = vpop.f32.mrf.mxu0
      %v1228 = vadd.f32 0.0, %v1227
      %v1229 = vpop.f32.mrf.mxu0
      %1230 = vmatprep.mubr.f32.mxu0 0.0
      %1231 = vmatmul.mubr.f32.gmra.mxu0 %v1126
      %v1232 = vpop.f32.mrf.mxu0
      %v1233 = vadd.f32 0.0, %v1232
      %v1234 = vpop.f32.mrf.mxu0
      %1235 = vdwg.mxu0
      %v1236 = vadd.f32 %v1086, %v1198
      %v1237 = vadd.f32 %v1087, %v1203
      %v1238 = vadd.f32 %v1088, %v1208
      %v1239 = vadd.f32 %v1089, %v1213
      %v1240 = vadd.f32 %v1090, %v1218
      %v1241 = vadd.f32 %v1091, %v1223
      %v1242 = vadd.f32 %v1092, %v1228
      %v1243 = vadd.f32 %v1093, %v1233
      %s1244 = scalar_lea.vmem [#allocation2], 32
      %v1245 = vld [vmem:[%s1244] sm:$0xff]
      %v1246 = vld [vmem:[%s1244 + $0x10] sm:$0xff]
      %v1247 = vld [vmem:[%s1244 + $0x20] sm:$0xff]
      %v1248 = vld [vmem:[%s1244 + $0x30] sm:$0xff]
      %v1249 = vld [vmem:[%s1244 + $0x40] sm:$0xff]
      %v1250 = vld [vmem:[%s1244 + $0x50] sm:$0xff]
      %v1251 = vld [vmem:[%s1244 + $0x60] sm:$0xff]
      %v1252 = vld [vmem:[%s1244 + $0x70] sm:$0xff]
      %s1253 = scalar_lea.vmem %s1, 24
      %v1254 = vld [vmem:[%s1253] sm:$0xf]
      %v1256 = vsel %vm329, %v1245, 0
      %v1259 = vsel %vm329, %v1246, 0
      %v1262 = vsel %vm329, %v1247, 0
      %v1265 = vsel %vm329, %v1248, 0
      %v1268 = vsel %vm329, %v1249, 0
      %v1271 = vsel %vm329, %v1250, 0
      %v1274 = vsel %vm329, %v1251, 0
      %v1277 = vsel %vm329, %v1252, 0
      %v1280 = vsel %vm403, %v1254, 0
      %1282 = vmatprep.subr.mxu0 0.0
      %1283 = vmatpush1.msra.mxu0 0.0
      %1284 = vmatprep.subr.mxu0 0.0
      %1285 = vmatpush1.msra.mxu0 0.0
      %1286 = vmatprep.subr.mxu0 0.0
      %1287 = vmatpush1.msra.mxu0 0.0
      %1288 = vmatprep.subr.mxu0 0.0
      %1289 = vmatpush1.msra.mxu0 0.0
      %1290 = vmatprep.subr.mxu0 0.0
      %1291 = vmatpush1.msra.mxu0 0.0
      %1292 = vmatprep.subr.mxu0 0.0
      %1293 = vmatpush1.msra.mxu0 0.0
      %1294 = vmatprep.subr.mxu0 0.0
      %1295 = vmatpush1.msra.mxu0 0.0
      %1296 = vmatprep.subr.mxu0 0.0
      %1297 = vmatpush1.msra.mxu0 0.0
      %1298 = vmatprep.subr.mxu0 0.0
      %1299 = vmatpush1.msra.mxu0 0.0
      %1300 = vmatprep.subr.mxu0 0.0
      %1301 = vmatpush1.msra.mxu0 0.0
      %1302 = vmatprep.subr.mxu0 0.0
      %1303 = vmatpush1.msra.mxu0 0.0
      %1304 = vmatprep.subr.mxu0 0.0
      %1305 = vmatpush1.msra.mxu0 0.0
      %1306 = vmatprep.subr.mxu0 0.0
      %1307 = vmatpush1.msra.mxu0 0.0
      %1308 = vmatprep.subr.mxu0 0.0
      %1309 = vmatpush1.msra.mxu0 0.0
      %1310 = vmatprep.subr.mxu0 0.0
      %1311 = vmatpush1.msra.mxu0 0.0
      %1312 = vmatprep.subr.mxu0 0.0
      %1313 = vmatpush1.msra.mxu0 %v1280
      %1314 = vmatprep.subr.mxu0 0.0
      %1315 = vmatpush2.msra.mxu0 0.0
      %1316 = vmatprep.subr.mxu0 0.0
      %1317 = vmatpush2.msra.mxu0 0.0
      %1318 = vmatprep.subr.mxu0 0.0
      %1319 = vmatpush2.msra.mxu0 0.0
      %1320 = vmatprep.subr.mxu0 0.0
      %1321 = vmatpush2.msra.mxu0 0.0
      %1322 = vmatprep.subr.mxu0 0.0
      %1323 = vmatpush2.msra.mxu0 0.0
      %1324 = vmatprep.subr.mxu0 0.0
      %1325 = vmatpush2.msra.mxu0 0.0
      %1326 = vmatprep.subr.mxu0 0.0
      %1327 = vmatpush2.msra.mxu0 0.0
      %1328 = vmatprep.subr.mxu0 0.0
      %1329 = vmatpush2.msra.mxu0 0.0
      %1330 = vmatprep.subr.mxu0 0.0
      %1331 = vmatpush2.msra.mxu0 0.0
      %1332 = vmatprep.subr.mxu0 0.0
      %1333 = vmatpush2.msra.mxu0 0.0
      %1334 = vmatprep.subr.mxu0 0.0
      %1335 = vmatpush2.msra.mxu0 0.0
      %1336 = vmatprep.subr.mxu0 0.0
      %1337 = vmatpush2.msra.mxu0 0.0
      %1338 = vmatprep.subr.mxu0 0.0
      %1339 = vmatpush2.msra.mxu0 0.0
      %1340 = vmatprep.subr.mxu0 0.0
      %1341 = vmatpush2.msra.mxu0 0.0
      %1342 = vmatprep.subr.mxu0 0.0
      %1343 = vmatpush2.msra.mxu0 0.0
      %1344 = vmatprep.subr.mxu0 0.0
      %1345 = vmatpush2.msra.mxu0 0.0
      %1346 = vmatprep.mubr.f32.mxu0 0.0
      %1347 = vmatmul.mubr.f32.gmra.mxu0 %v1256
      %v1348 = vpop.f32.mrf.mxu0
      %v1349 = vadd.f32 0.0, %v1348
      %v1350 = vpop.f32.mrf.mxu0
      %1351 = vmatprep.mubr.f32.mxu0 0.0
      %1352 = vmatmul.mubr.f32.gmra.mxu0 %v1259
      %v1353 = vpop.f32.mrf.mxu0
      %v1354 = vadd.f32 0.0, %v1353
      %v1355 = vpop.f32.mrf.mxu0
      %1356 = vmatprep.mubr.f32.mxu0 0.0
      %1357 = vmatmul.mubr.f32.gmra.mxu0 %v1262
      %v1358 = vpop.f32.mrf.mxu0
      %v1359 = vadd.f32 0.0, %v1358
      %v1360 = vpop.f32.mrf.mxu0
      %1361 = vmatprep.mubr.f32.mxu0 0.0
      %1362 = vmatmul.mubr.f32.gmra.mxu0 %v1265
      %v1363 = vpop.f32.mrf.mxu0
      %v1364 = vadd.f32 0.0, %v1363
      %v1365 = vpop.f32.mrf.mxu0
      %1366 = vmatprep.mubr.f32.mxu0 0.0
      %1367 = vmatmul.mubr.f32.gmra.mxu0 %v1268
      %v1368 = vpop.f32.mrf.mxu0
      %v1369 = vadd.f32 0.0, %v1368
      %v1370 = vpop.f32.mrf.mxu0
      %1371 = vmatprep.mubr.f32.mxu0 0.0
      %1372 = vmatmul.mubr.f32.gmra.mxu0 %v1271
      %v1373 = vpop.f32.mrf.mxu0
      %v1374 = vadd.f32 0.0, %v1373
      %v1375 = vpop.f32.mrf.mxu0
      %1376 = vmatprep.mubr.f32.mxu0 0.0
      %1377 = vmatmul.mubr.f32.gmra.mxu0 %v1274
      %v1378 = vpop.f32.mrf.mxu0
      %v1379 = vadd.f32 0.0, %v1378
      %v1380 = vpop.f32.mrf.mxu0
      %1381 = vmatprep.mubr.f32.mxu0 0.0
      %1382 = vmatmul.mubr.f32.gmra.mxu0 %v1277
      %v1383 = vpop.f32.mrf.mxu0
      %v1384 = vadd.f32 0.0, %v1383
      %v1385 = vpop.f32.mrf.mxu0
      %1386 = vdwg.mxu0
      %v1387 = vadd.f32 %v1236, %v1349
      %v1388 = vadd.f32 %v1237, %v1354
      %v1389 = vadd.f32 %v1238, %v1359
      %v1390 = vadd.f32 %v1239, %v1364
      %v1391 = vadd.f32 %v1240, %v1369
      %v1392 = vadd.f32 %v1241, %v1374
      %v1393 = vadd.f32 %v1242, %v1379
      %v1394 = vadd.f32 %v1243, %v1384
      %v1395 = vld [vmem:[%s1244 + $0x1] sm:$0xff]
      %v1396 = vld [vmem:[%s1244 + $0x11] sm:$0xff]
      %v1397 = vld [vmem:[%s1244 + $0x21] sm:$0xff]
      %v1398 = vld [vmem:[%s1244 + $0x31] sm:$0xff]
      %v1399 = vld [vmem:[%s1244 + $0x41] sm:$0xff]
      %v1400 = vld [vmem:[%s1244 + $0x51] sm:$0xff]
      %v1401 = vld [vmem:[%s1244 + $0x61] sm:$0xff]
      %v1402 = vld [vmem:[%s1244 + $0x71] sm:$0xff]
      %s1403 = scalar_lea.vmem %s1, 28
      %v1404 = vld [vmem:[%s1403] sm:$0xf]
      %v1406 = vsel %vm329, %v1395, 0
      %v1409 = vsel %vm329, %v1396, 0
      %v1412 = vsel %vm329, %v1397, 0
      %v1415 = vsel %vm329, %v1398, 0
      %v1418 = vsel %vm329, %v1399, 0
      %v1421 = vsel %vm329, %v1400, 0
      %v1424 = vsel %vm329, %v1401, 0
      %v1427 = vsel %vm329, %v1402, 0
      %v1430 = vsel %vm403, %v1404, 0
      %1432 = vmatprep.subr.mxu0 0.0
      %1433 = vmatpush1.msra.mxu0 0.0
      %1434 = vmatprep.subr.mxu0 0.0
      %1435 = vmatpush1.msra.mxu0 0.0
      %1436 = vmatprep.subr.mxu0 0.0
      %1437 = vmatpush1.msra.mxu0 0.0
      %1438 = vmatprep.subr.mxu0 0.0
      %1439 = vmatpush1.msra.mxu0 0.0
      %1440 = vmatprep.subr.mxu0 0.0
      %1441 = vmatpush1.msra.mxu0 0.0
      %1442 = vmatprep.subr.mxu0 0.0
      %1443 = vmatpush1.msra.mxu0 0.0
      %1444 = vmatprep.subr.mxu0 0.0
      %1445 = vmatpush1.msra.mxu0 0.0
      %1446 = vmatprep.subr.mxu0 0.0
      %1447 = vmatpush1.msra.mxu0 0.0
      %1448 = vmatprep.subr.mxu0 0.0
      %1449 = vmatpush1.msra.mxu0 0.0
      %1450 = vmatprep.subr.mxu0 0.0
      %1451 = vmatpush1.msra.mxu0 0.0
      %1452 = vmatprep.subr.mxu0 0.0
      %1453 = vmatpush1.msra.mxu0 0.0
      %1454 = vmatprep.subr.mxu0 0.0
      %1455 = vmatpush1.msra.mxu0 0.0
      %1456 = vmatprep.subr.mxu0 0.0
      %1457 = vmatpush1.msra.mxu0 0.0
      %1458 = vmatprep.subr.mxu0 0.0
      %1459 = vmatpush1.msra.mxu0 0.0
      %1460 = vmatprep.subr.mxu0 0.0
      %1461 = vmatpush1.msra.mxu0 0.0
      %1462 = vmatprep.subr.mxu0 0.0
      %1463 = vmatpush1.msra.mxu0 %v1430
      %1464 = vmatprep.subr.mxu0 0.0
      %1465 = vmatpush2.msra.mxu0 0.0
      %1466 = vmatprep.subr.mxu0 0.0
      %1467 = vmatpush2.msra.mxu0 0.0
      %1468 = vmatprep.subr.mxu0 0.0
      %1469 = vmatpush2.msra.mxu0 0.0
      %1470 = vmatprep.subr.mxu0 0.0
      %1471 = vmatpush2.msra.mxu0 0.0
      %1472 = vmatprep.subr.mxu0 0.0
      %1473 = vmatpush2.msra.mxu0 0.0
      %1474 = vmatprep.subr.mxu0 0.0
      %1475 = vmatpush2.msra.mxu0 0.0
      %1476 = vmatprep.subr.mxu0 0.0
      %1477 = vmatpush2.msra.mxu0 0.0
      %1478 = vmatprep.subr.mxu0 0.0
      %1479 = vmatpush2.msra.mxu0 0.0
      %1480 = vmatprep.subr.mxu0 0.0
      %1481 = vmatpush2.msra.mxu0 0.0
      %1482 = vmatprep.subr.mxu0 0.0
      %1483 = vmatpush2.msra.mxu0 0.0
      %1484 = vmatprep.subr.mxu0 0.0
      %1485 = vmatpush2.msra.mxu0 0.0
      %1486 = vmatprep.subr.mxu0 0.0
      %1487 = vmatpush2.msra.mxu0 0.0
      %1488 = vmatprep.subr.mxu0 0.0
      %1489 = vmatpush2.msra.mxu0 0.0
      %1490 = vmatprep.subr.mxu0 0.0
      %1491 = vmatpush2.msra.mxu0 0.0
      %1492 = vmatprep.subr.mxu0 0.0
      %1493 = vmatpush2.msra.mxu0 0.0
      %1494 = vmatprep.subr.mxu0 0.0
      %1495 = vmatpush2.msra.mxu0 0.0
      %1496 = vmatprep.mubr.f32.mxu0 0.0
      %1497 = vmatmul.mubr.f32.gmra.mxu0 %v1406
      %v1498 = vpop.f32.mrf.mxu0
      %v1499 = vadd.f32 0.0, %v1498
      %v1500 = vpop.f32.mrf.mxu0
      %1501 = vmatprep.mubr.f32.mxu0 0.0
      %1502 = vmatmul.mubr.f32.gmra.mxu0 %v1409
      %v1503 = vpop.f32.mrf.mxu0
      %v1504 = vadd.f32 0.0, %v1503
      %v1505 = vpop.f32.mrf.mxu0
      %1506 = vmatprep.mubr.f32.mxu0 0.0
      %1507 = vmatmul.mubr.f32.gmra.mxu0 %v1412
      %v1508 = vpop.f32.mrf.mxu0
      %v1509 = vadd.f32 0.0, %v1508
      %v1510 = vpop.f32.mrf.mxu0
      %1511 = vmatprep.mubr.f32.mxu0 0.0
      %1512 = vmatmul.mubr.f32.gmra.mxu0 %v1415
      %v1513 = vpop.f32.mrf.mxu0
      %v1514 = vadd.f32 0.0, %v1513
      %v1515 = vpop.f32.mrf.mxu0
      %1516 = vmatprep.mubr.f32.mxu0 0.0
      %1517 = vmatmul.mubr.f32.gmra.mxu0 %v1418
      %v1518 = vpop.f32.mrf.mxu0
      %v1519 = vadd.f32 0.0, %v1518
      %v1520 = vpop.f32.mrf.mxu0
      %1521 = vmatprep.mubr.f32.mxu0 0.0
      %1522 = vmatmul.mubr.f32.gmra.mxu0 %v1421
      %v1523 = vpop.f32.mrf.mxu0
      %v1524 = vadd.f32 0.0, %v1523
      %v1525 = vpop.f32.mrf.mxu0
      %1526 = vmatprep.mubr.f32.mxu0 0.0
      %1527 = vmatmul.mubr.f32.gmra.mxu0 %v1424
      %v1528 = vpop.f32.mrf.mxu0
      %v1529 = vadd.f32 0.0, %v1528
      %v1530 = vpop.f32.mrf.mxu0
      %1531 = vmatprep.mubr.f32.mxu0 0.0
      %1532 = vmatmul.mubr.f32.gmra.mxu0 %v1427
      %v1533 = vpop.f32.mrf.mxu0
      %v1534 = vadd.f32 0.0, %v1533
      %v1535 = vpop.f32.mrf.mxu0
      %1536 = vdwg.mxu0
      %v1537 = vadd.f32 %v1387, %v1499
      %v1538 = vadd.f32 %v1388, %v1504
      %v1539 = vadd.f32 %v1389, %v1509
      %v1540 = vadd.f32 %v1390, %v1514
      %v1541 = vadd.f32 %v1391, %v1519
      %v1542 = vadd.f32 %v1392, %v1524
      %v1543 = vadd.f32 %v1393, %v1529
      %v1544 = vadd.f32 %v1394, %v1534
      %v1545 = vld [vmem:[%s1244 + $0x2] sm:$0xff]
      %v1546 = vld [vmem:[%s1244 + $0x12] sm:$0xff]
      %v1547 = vld [vmem:[%s1244 + $0x22] sm:$0xff]
      %v1548 = vld [vmem:[%s1244 + $0x32] sm:$0xff]
      %v1549 = vld [vmem:[%s1244 + $0x42] sm:$0xff]
      %v1550 = vld [vmem:[%s1244 + $0x52] sm:$0xff]
      %v1551 = vld [vmem:[%s1244 + $0x62] sm:$0xff]
      %v1552 = vld [vmem:[%s1244 + $0x72] sm:$0xff]
      %s1553 = scalar_lea.vmem %s1, 32
      %v1554 = vld [vmem:[%s1553] sm:$0xf]
      %v1556 = vsel %vm329, %v1545, 0
      %v1559 = vsel %vm329, %v1546, 0
      %v1562 = vsel %vm329, %v1547, 0
      %v1565 = vsel %vm329, %v1548, 0
      %v1568 = vsel %vm329, %v1549, 0
      %v1571 = vsel %vm329, %v1550, 0
      %v1574 = vsel %vm329, %v1551, 0
      %v1577 = vsel %vm329, %v1552, 0
      %v1580 = vsel %vm403, %v1554, 0
      %1582 = vmatprep.subr.mxu0 0.0
      %1583 = vmatpush1.msra.mxu0 0.0
      %1584 = vmatprep.subr.mxu0 0.0
      %1585 = vmatpush1.msra.mxu0 0.0
      %1586 = vmatprep.subr.mxu0 0.0
      %1587 = vmatpush1.msra.mxu0 0.0
      %1588 = vmatprep.subr.mxu0 0.0
      %1589 = vmatpush1.msra.mxu0 0.0
      %1590 = vmatprep.subr.mxu0 0.0
      %1591 = vmatpush1.msra.mxu0 0.0
      %1592 = vmatprep.subr.mxu0 0.0
      %1593 = vmatpush1.msra.mxu0 0.0
      %1594 = vmatprep.subr.mxu0 0.0
      %1595 = vmatpush1.msra.mxu0 0.0
      %1596 = vmatprep.subr.mxu0 0.0
      %1597 = vmatpush1.msra.mxu0 0.0
      %1598 = vmatprep.subr.mxu0 0.0
      %1599 = vmatpush1.msra.mxu0 0.0
      %1600 = vmatprep.subr.mxu0 0.0
      %1601 = vmatpush1.msra.mxu0 0.0
      %1602 = vmatprep.subr.mxu0 0.0
      %1603 = vmatpush1.msra.mxu0 0.0
      %1604 = vmatprep.subr.mxu0 0.0
      %1605 = vmatpush1.msra.mxu0 0.0
      %1606 = vmatprep.subr.mxu0 0.0
      %1607 = vmatpush1.msra.mxu0 0.0
      %1608 = vmatprep.subr.mxu0 0.0
      %1609 = vmatpush1.msra.mxu0 0.0
      %1610 = vmatprep.subr.mxu0 0.0
      %1611 = vmatpush1.msra.mxu0 0.0
      %1612 = vmatprep.subr.mxu0 0.0
      %1613 = vmatpush1.msra.mxu0 %v1580
      %1614 = vmatprep.subr.mxu0 0.0
      %1615 = vmatpush2.msra.mxu0 0.0
      %1616 = vmatprep.subr.mxu0 0.0
      %1617 = vmatpush2.msra.mxu0 0.0
      %1618 = vmatprep.subr.mxu0 0.0
      %1619 = vmatpush2.msra.mxu0 0.0
      %1620 = vmatprep.subr.mxu0 0.0
      %1621 = vmatpush2.msra.mxu0 0.0
      %1622 = vmatprep.subr.mxu0 0.0
      %1623 = vmatpush2.msra.mxu0 0.0
      %1624 = vmatprep.subr.mxu0 0.0
      %1625 = vmatpush2.msra.mxu0 0.0
      %1626 = vmatprep.subr.mxu0 0.0
      %1627 = vmatpush2.msra.mxu0 0.0
      %1628 = vmatprep.subr.mxu0 0.0
      %1629 = vmatpush2.msra.mxu0 0.0
      %1630 = vmatprep.subr.mxu0 0.0
      %1631 = vmatpush2.msra.mxu0 0.0
      %1632 = vmatprep.subr.mxu0 0.0
      %1633 = vmatpush2.msra.mxu0 0.0
      %1634 = vmatprep.subr.mxu0 0.0
      %1635 = vmatpush2.msra.mxu0 0.0
      %1636 = vmatprep.subr.mxu0 0.0
      %1637 = vmatpush2.msra.mxu0 0.0
      %1638 = vmatprep.subr.mxu0 0.0
      %1639 = vmatpush2.msra.mxu0 0.0
      %1640 = vmatprep.subr.mxu0 0.0
      %1641 = vmatpush2.msra.mxu0 0.0
      %1642 = vmatprep.subr.mxu0 0.0
      %1643 = vmatpush2.msra.mxu0 0.0
      %1644 = vmatprep.subr.mxu0 0.0
      %1645 = vmatpush2.msra.mxu0 0.0
      %1646 = vmatprep.mubr.f32.mxu0 0.0
      %1647 = vmatmul.mubr.f32.gmra.mxu0 %v1556
      %v1648 = vpop.f32.mrf.mxu0
      %v1649 = vadd.f32 0.0, %v1648
      %v1650 = vpop.f32.mrf.mxu0
      %1651 = vmatprep.mubr.f32.mxu0 0.0
      %1652 = vmatmul.mubr.f32.gmra.mxu0 %v1559
      %v1653 = vpop.f32.mrf.mxu0
      %v1654 = vadd.f32 0.0, %v1653
      %v1655 = vpop.f32.mrf.mxu0
      %1656 = vmatprep.mubr.f32.mxu0 0.0
      %1657 = vmatmul.mubr.f32.gmra.mxu0 %v1562
      %v1658 = vpop.f32.mrf.mxu0
      %v1659 = vadd.f32 0.0, %v1658
      %v1660 = vpop.f32.mrf.mxu0
      %1661 = vmatprep.mubr.f32.mxu0 0.0
      %1662 = vmatmul.mubr.f32.gmra.mxu0 %v1565
      %v1663 = vpop.f32.mrf.mxu0
      %v1664 = vadd.f32 0.0, %v1663
      %v1665 = vpop.f32.mrf.mxu0
      %1666 = vmatprep.mubr.f32.mxu0 0.0
      %1667 = vmatmul.mubr.f32.gmra.mxu0 %v1568
      %v1668 = vpop.f32.mrf.mxu0
      %v1669 = vadd.f32 0.0, %v1668
      %v1670 = vpop.f32.mrf.mxu0
      %1671 = vmatprep.mubr.f32.mxu0 0.0
      %1672 = vmatmul.mubr.f32.gmra.mxu0 %v1571
      %v1673 = vpop.f32.mrf.mxu0
      %v1674 = vadd.f32 0.0, %v1673
      %v1675 = vpop.f32.mrf.mxu0
      %1676 = vmatprep.mubr.f32.mxu0 0.0
      %1677 = vmatmul.mubr.f32.gmra.mxu0 %v1574
      %v1678 = vpop.f32.mrf.mxu0
      %v1679 = vadd.f32 0.0, %v1678
      %v1680 = vpop.f32.mrf.mxu0
      %1681 = vmatprep.mubr.f32.mxu0 0.0
      %1682 = vmatmul.mubr.f32.gmra.mxu0 %v1577
      %v1683 = vpop.f32.mrf.mxu0
      %v1684 = vadd.f32 0.0, %v1683
      %v1685 = vpop.f32.mrf.mxu0
      %1686 = vdwg.mxu0
      %v1687 = vadd.f32 %v1537, %v1649
      %v1688 = vadd.f32 %v1538, %v1654
      %v1689 = vadd.f32 %v1539, %v1659
      %v1690 = vadd.f32 %v1540, %v1664
      %v1691 = vadd.f32 %v1541, %v1669
      %v1692 = vadd.f32 %v1542, %v1674
      %v1693 = vadd.f32 %v1543, %v1679
      %v1694 = vadd.f32 %v1544, %v1684
      %v1695 = vld [vmem:[%s2] sm:$0x1]
      %v1697 = vlaneseq
      %v1698 = vshrl.u32 %v1697, 7
      %v1699 = vsub.s32 0, %v1698
      %v1700 = vrot.slane %v1695, %v1699
      %v1702 = vadd.f32 %v1687, %v1700
      %v1703 = vadd.f32 %v1688, %v1700
      %v1704 = vadd.f32 %v1689, %v1700
      %v1705 = vadd.f32 %v1690, %v1700
      %v1706 = vadd.f32 %v1691, %v1700
      %v1707 = vadd.f32 %v1692, %v1700
      %v1708 = vadd.f32 %v1693, %v1700
      %v1709 = vadd.f32 %v1694, %v1700
      %v1710 = vmax.f32 %v1702, 0.0
      %v1711 = vmax.f32 %v1703, 0.0
      %v1712 = vmax.f32 %v1704, 0.0
      %v1713 = vmax.f32 %v1705, 0.0
      %v1714 = vmax.f32 %v1706, 0.0
      %v1715 = vmax.f32 %v1707, 0.0
      %v1716 = vmax.f32 %v1708, 0.0
      %v1717 = vmax.f32 %v1709, 0.0
      %vm1718 = vcmask 64512
      %1719 = vst.msk [vmem:[#allocation3] sm:$0xff] %vm1718, 0.0
      %vm1720 = vcmask 58368
      %1721 = vst.msk [vmem:[#allocation3 + $0x8] sm:$0x3] %vm1720, 0.0
      %1722 = vst.msk [vmem:[#allocation3 + $0x10] sm:$0xff] %vm1718, 0.0
      %1723 = vst.msk [vmem:[#allocation3 + $0x18] sm:$0x3] %vm1720, 0.0
      %1724 = vst.msk [vmem:[#allocation3 + $0x20] sm:$0xff] %vm1718, 0.0
      %1725 = vst.msk [vmem:[#allocation3 + $0x28] sm:$0x3] %vm1720, 0.0
      %1726 = vst.msk [vmem:[#allocation3 + $0x30] sm:$0xff] %vm1718, 0.0
      %1727 = vst.msk [vmem:[#allocation3 + $0x38] sm:$0x3] %vm1720, 0.0
      %1728 = vst.msk [vmem:[#allocation3 + $0x40] sm:$0xff] %vm1718, 0.0
      %1729 = vst.msk [vmem:[#allocation3 + $0x48] sm:$0x3] %vm1720, 0.0
      %1730 = vst.msk [vmem:[#allocation3 + $0x50] sm:$0xff] %vm1718, 0.0
      %1731 = vst.msk [vmem:[#allocation3 + $0x58] sm:$0x3] %vm1720, 0.0
      %1732 = vst.msk [vmem:[#allocation3 + $0x60] sm:$0xff] %vm1718, 0.0
      %1733 = vst.msk [vmem:[#allocation3 + $0x68] sm:$0x3] %vm1720, 0.0
      %1734 = vst.msk [vmem:[#allocation3 + $0x70] sm:$0xff] %vm1718, 0.0
      %1735 = vst.msk [vmem:[#allocation3 + $0x78] sm:$0x3] %vm1720, 0.0
      %1736 = vst.msk [vmem:[#allocation3 + $0x80] sm:$0xff] %vm1718, 0.0
      %1737 = vst.msk [vmem:[#allocation3 + $0x88] sm:$0x3] %vm1720, 0.0
      %1738 = vst.msk [vmem:[#allocation3 + $0x90] sm:$0xff] %vm1718, 0.0
      %1739 = vst.msk [vmem:[#allocation3 + $0x98] sm:$0x3] %vm1720, 0.0
      %s1740 = scalar_lea.vmem [#allocation3], 16
      %1741 = vst.msk [vmem:[%s1740 + $0x1] sm:$0xff] %vm1718, %v1710
      %1742 = vst.msk [vmem:[%s1740 + $0x11] sm:$0xff] %vm1718, %v1711
      %1743 = vst.msk [vmem:[%s1740 + $0x21] sm:$0xff] %vm1718, %v1712
      %1744 = vst.msk [vmem:[%s1740 + $0x31] sm:$0xff] %vm1718, %v1713
      %1745 = vst.msk [vmem:[%s1740 + $0x41] sm:$0xff] %vm1718, %v1714
      %1746 = vst.msk [vmem:[%s1740 + $0x51] sm:$0xff] %vm1718, %v1715
      %1747 = vst.msk [vmem:[%s1740 + $0x61] sm:$0xff] %vm1718, %v1716
      %1748 = vst.msk [vmem:[%s1740 + $0x71] sm:$0xff] %vm1718, %v1717
      %v1749 = vld [vmem:[#allocation3] sm:$0xff]
      %v1750 = vld [vmem:[#allocation3 + $0x10] sm:$0xff]
      %v1751 = vld [vmem:[#allocation3 + $0x20] sm:$0xff]
      %v1752 = vld [vmem:[#allocation3 + $0x30] sm:$0xff]
      %v1753 = vld [vmem:[#allocation3 + $0x40] sm:$0xff]
      %v1754 = vld [vmem:[#allocation3 + $0x50] sm:$0xff]
      %v1755 = vld [vmem:[#allocation3 + $0x60] sm:$0xff]
      %v1756 = vld [vmem:[#allocation3 + $0x70] sm:$0xff]
      %v1757 = vld [vmem:[%s3] sm:$0xff]
      %v1758 = vld [vmem:[#allocation3 + $0x1] sm:$0xff]
      %v1759 = vld [vmem:[#allocation3 + $0x11] sm:$0xff]
      %v1760 = vld [vmem:[#allocation3 + $0x21] sm:$0xff]
      %v1761 = vld [vmem:[#allocation3 + $0x31] sm:$0xff]
      %v1762 = vld [vmem:[#allocation3 + $0x41] sm:$0xff]
      %v1763 = vld [vmem:[#allocation3 + $0x51] sm:$0xff]
      %v1764 = vld [vmem:[#allocation3 + $0x61] sm:$0xff]
      %v1765 = vld [vmem:[#allocation3 + $0x71] sm:$0xff]
      %s1766 = scalar_lea.vmem %s3, 8
      %v1767 = vld [vmem:[%s1766] sm:$0xff]
      %v1769 = vsel %vm1718, %v1758, 0
      %v1772 = vsel %vm1718, %v1759, 0
      %v1775 = vsel %vm1718, %v1760, 0
      %v1778 = vsel %vm1718, %v1761, 0
      %v1781 = vsel %vm1718, %v1762, 0
      %v1784 = vsel %vm1718, %v1763, 0
      %v1787 = vsel %vm1718, %v1764, 0
      %v1790 = vsel %vm1718, %v1765, 0
      %1792 = vmatprep.subr.mxu0 0.0
      %1793 = vmatpush1.msra.mxu0 0.0
      %1794 = vmatprep.subr.mxu0 0.0
      %1795 = vmatpush1.msra.mxu0 0.0
      %1796 = vmatprep.subr.mxu0 0.0
      %1797 = vmatpush1.msra.mxu0 0.0
      %1798 = vmatprep.subr.mxu0 0.0
      %1799 = vmatpush1.msra.mxu0 0.0
      %1800 = vmatprep.subr.mxu0 0.0
      %1801 = vmatpush1.msra.mxu0 0.0
      %1802 = vmatprep.subr.mxu0 0.0
      %1803 = vmatpush1.msra.mxu0 0.0
      %1804 = vmatprep.subr.mxu0 0.0
      %1805 = vmatpush1.msra.mxu0 0.0
      %1806 = vmatprep.subr.mxu0 0.0
      %1807 = vmatpush1.msra.mxu0 0.0
      %1808 = vmatprep.subr.mxu0 0.0
      %1809 = vmatpush1.msra.mxu0 0.0
      %1810 = vmatprep.subr.mxu0 0.0
      %1811 = vmatpush1.msra.mxu0 0.0
      %1812 = vmatprep.subr.mxu0 0.0
      %1813 = vmatpush1.msra.mxu0 0.0
      %1814 = vmatprep.subr.mxu0 0.0
      %1815 = vmatpush1.msra.mxu0 0.0
      %1816 = vmatprep.subr.mxu0 0.0
      %1817 = vmatpush1.msra.mxu0 0.0
      %1818 = vmatprep.subr.mxu0 0.0
      %1819 = vmatpush1.msra.mxu0 0.0
      %1820 = vmatprep.subr.mxu0 0.0
      %1821 = vmatpush1.msra.mxu0 0.0
      %1822 = vmatprep.subr.mxu0 0.0
      %1823 = vmatpush1.msra.mxu0 %v1767
      %1824 = vmatprep.subr.mxu0 0.0
      %1825 = vmatpush2.msra.mxu0 0.0
      %1826 = vmatprep.subr.mxu0 0.0
      %1827 = vmatpush2.msra.mxu0 0.0
      %1828 = vmatprep.subr.mxu0 0.0
      %1829 = vmatpush2.msra.mxu0 0.0
      %1830 = vmatprep.subr.mxu0 0.0
      %1831 = vmatpush2.msra.mxu0 0.0
      %1832 = vmatprep.subr.mxu0 0.0
      %1833 = vmatpush2.msra.mxu0 0.0
      %1834 = vmatprep.subr.mxu0 0.0
      %1835 = vmatpush2.msra.mxu0 0.0
      %1836 = vmatprep.subr.mxu0 0.0
      %1837 = vmatpush2.msra.mxu0 0.0
      %1838 = vmatprep.subr.mxu0 0.0
      %1839 = vmatpush2.msra.mxu0 0.0
      %1840 = vmatprep.subr.mxu0 0.0
      %1841 = vmatpush2.msra.mxu0 0.0
      %1842 = vmatprep.subr.mxu0 0.0
      %1843 = vmatpush2.msra.mxu0 0.0
      %1844 = vmatprep.subr.mxu0 0.0
      %1845 = vmatpush2.msra.mxu0 0.0
      %1846 = vmatprep.subr.mxu0 0.0
      %1847 = vmatpush2.msra.mxu0 0.0
      %1848 = vmatprep.subr.mxu0 0.0
      %1849 = vmatpush2.msra.mxu0 0.0
      %1850 = vmatprep.subr.mxu0 0.0
      %1851 = vmatpush2.msra.mxu0 0.0
      %1852 = vmatprep.subr.mxu0 0.0
      %1853 = vmatpush2.msra.mxu0 0.0
      %1854 = vmatprep.subr.mxu0 0.0
      %1855 = vmatpush2.msra.mxu0 0.0
      %1856 = vmatprep.mubr.f32.mxu0 0.0
      %1857 = vmatmul.mubr.f32.gmra.mxu0 %v1769
      %v1858 = vpop.f32.mrf.mxu0
      %v1859 = vadd.f32 0.0, %v1858
      %v1860 = vpop.f32.mrf.mxu0
      %1861 = vmatprep.mubr.f32.mxu0 0.0
      %1862 = vmatmul.mubr.f32.gmra.mxu0 %v1772
      %v1863 = vpop.f32.mrf.mxu0
      %v1864 = vadd.f32 0.0, %v1863
      %v1865 = vpop.f32.mrf.mxu0
      %1866 = vmatprep.mubr.f32.mxu0 0.0
      %1867 = vmatmul.mubr.f32.gmra.mxu0 %v1775
      %v1868 = vpop.f32.mrf.mxu0
      %v1869 = vadd.f32 0.0, %v1868
      %v1870 = vpop.f32.mrf.mxu0
      %1871 = vmatprep.mubr.f32.mxu0 0.0
      %1872 = vmatmul.mubr.f32.gmra.mxu0 %v1778
      %v1873 = vpop.f32.mrf.mxu0
      %v1874 = vadd.f32 0.0, %v1873
      %v1875 = vpop.f32.mrf.mxu0
      %1876 = vmatprep.mubr.f32.mxu0 0.0
      %1877 = vmatmul.mubr.f32.gmra.mxu0 %v1781
      %v1878 = vpop.f32.mrf.mxu0
      %v1879 = vadd.f32 0.0, %v1878
      %v1880 = vpop.f32.mrf.mxu0
      %1881 = vmatprep.mubr.f32.mxu0 0.0
      %1882 = vmatmul.mubr.f32.gmra.mxu0 %v1784
      %v1883 = vpop.f32.mrf.mxu0
      %v1884 = vadd.f32 0.0, %v1883
      %v1885 = vpop.f32.mrf.mxu0
      %1886 = vmatprep.mubr.f32.mxu0 0.0
      %1887 = vmatmul.mubr.f32.gmra.mxu0 %v1787
      %v1888 = vpop.f32.mrf.mxu0
      %v1889 = vadd.f32 0.0, %v1888
      %v1890 = vpop.f32.mrf.mxu0
      %1891 = vmatprep.mubr.f32.mxu0 0.0
      %1892 = vmatmul.mubr.f32.gmra.mxu0 %v1790
      %v1893 = vpop.f32.mrf.mxu0
      %v1894 = vadd.f32 0.0, %v1893
      %v1895 = vpop.f32.mrf.mxu0
      %1896 = vdwg.mxu0
      %v1898 = vsel %vm1718, %v1749, 0
      %v1901 = vsel %vm1718, %v1750, 0
      %v1904 = vsel %vm1718, %v1751, 0
      %v1907 = vsel %vm1718, %v1752, 0
      %v1910 = vsel %vm1718, %v1753, 0
      %v1913 = vsel %vm1718, %v1754, 0
      %v1916 = vsel %vm1718, %v1755, 0
      %v1919 = vsel %vm1718, %v1756, 0
      %1921 = vmatprep.subr.mxu0 0.0
      %1922 = vmatpush1.msra.mxu0 0.0
      %1923 = vmatprep.subr.mxu0 0.0
      %1924 = vmatpush1.msra.mxu0 0.0
      %1925 = vmatprep.subr.mxu0 0.0
      %1926 = vmatpush1.msra.mxu0 0.0
      %1927 = vmatprep.subr.mxu0 0.0
      %1928 = vmatpush1.msra.mxu0 0.0
      %1929 = vmatprep.subr.mxu0 0.0
      %1930 = vmatpush1.msra.mxu0 0.0
      %1931 = vmatprep.subr.mxu0 0.0
      %1932 = vmatpush1.msra.mxu0 0.0
      %1933 = vmatprep.subr.mxu0 0.0
      %1934 = vmatpush1.msra.mxu0 0.0
      %1935 = vmatprep.subr.mxu0 0.0
      %1936 = vmatpush1.msra.mxu0 0.0
      %1937 = vmatprep.subr.mxu0 0.0
      %1938 = vmatpush1.msra.mxu0 0.0
      %1939 = vmatprep.subr.mxu0 0.0
      %1940 = vmatpush1.msra.mxu0 0.0
      %1941 = vmatprep.subr.mxu0 0.0
      %1942 = vmatpush1.msra.mxu0 0.0
      %1943 = vmatprep.subr.mxu0 0.0
      %1944 = vmatpush1.msra.mxu0 0.0
      %1945 = vmatprep.subr.mxu0 0.0
      %1946 = vmatpush1.msra.mxu0 0.0
      %1947 = vmatprep.subr.mxu0 0.0
      %1948 = vmatpush1.msra.mxu0 0.0
      %1949 = vmatprep.subr.mxu0 0.0
      %1950 = vmatpush1.msra.mxu0 0.0
      %1951 = vmatprep.subr.mxu0 0.0
      %1952 = vmatpush1.msra.mxu0 %v1757
      %1953 = vmatprep.subr.mxu0 0.0
      %1954 = vmatpush2.msra.mxu0 0.0
      %1955 = vmatprep.subr.mxu0 0.0
      %1956 = vmatpush2.msra.mxu0 0.0
      %1957 = vmatprep.subr.mxu0 0.0
      %1958 = vmatpush2.msra.mxu0 0.0
      %1959 = vmatprep.subr.mxu0 0.0
      %1960 = vmatpush2.msra.mxu0 0.0
      %1961 = vmatprep.subr.mxu0 0.0
      %1962 = vmatpush2.msra.mxu0 0.0
      %1963 = vmatprep.subr.mxu0 0.0
      %1964 = vmatpush2.msra.mxu0 0.0
      %1965 = vmatprep.subr.mxu0 0.0
      %1966 = vmatpush2.msra.mxu0 0.0
      %1967 = vmatprep.subr.mxu0 0.0
      %1968 = vmatpush2.msra.mxu0 0.0
      %1969 = vmatprep.subr.mxu0 0.0
      %1970 = vmatpush2.msra.mxu0 0.0
      %1971 = vmatprep.subr.mxu0 0.0
      %1972 = vmatpush2.msra.mxu0 0.0
      %1973 = vmatprep.subr.mxu0 0.0
      %1974 = vmatpush2.msra.mxu0 0.0
      %1975 = vmatprep.subr.mxu0 0.0
      %1976 = vmatpush2.msra.mxu0 0.0
      %1977 = vmatprep.subr.mxu0 0.0
      %1978 = vmatpush2.msra.mxu0 0.0
      %1979 = vmatprep.subr.mxu0 0.0
      %1980 = vmatpush2.msra.mxu0 0.0
      %1981 = vmatprep.subr.mxu0 0.0
      %1982 = vmatpush2.msra.mxu0 0.0
      %1983 = vmatprep.subr.mxu0 0.0
      %1984 = vmatpush2.msra.mxu0 0.0
      %1985 = vmatprep.mubr.f32.mxu0 0.0
      %1986 = vmatmul.mubr.f32.gmra.mxu0 %v1898
      %v1987 = vpop.f32.mrf.mxu0
      %v1988 = vadd.f32 %v1859, %v1987
      %v1989 = vpop.f32.mrf.mxu0
      %1990 = vmatprep.mubr.f32.mxu0 0.0
      %1991 = vmatmul.mubr.f32.gmra.mxu0 %v1901
      %v1992 = vpop.f32.mrf.mxu0
      %v1993 = vadd.f32 %v1864, %v1992
      %v1994 = vpop.f32.mrf.mxu0
      %1995 = vmatprep.mubr.f32.mxu0 0.0
      %1996 = vmatmul.mubr.f32.gmra.mxu0 %v1904
      %v1997 = vpop.f32.mrf.mxu0
      %v1998 = vadd.f32 %v1869, %v1997
      %v1999 = vpop.f32.mrf.mxu0
      %2000 = vmatprep.mubr.f32.mxu0 0.0
      %2001 = vmatmul.mubr.f32.gmra.mxu0 %v1907
      %v2002 = vpop.f32.mrf.mxu0
      %v2003 = vadd.f32 %v1874, %v2002
      %v2004 = vpop.f32.mrf.mxu0
      %2005 = vmatprep.mubr.f32.mxu0 0.0
      %2006 = vmatmul.mubr.f32.gmra.mxu0 %v1910
      %v2007 = vpop.f32.mrf.mxu0
      %v2008 = vadd.f32 %v1879, %v2007
      %v2009 = vpop.f32.mrf.mxu0
      %2010 = vmatprep.mubr.f32.mxu0 0.0
      %2011 = vmatmul.mubr.f32.gmra.mxu0 %v1913
      %v2012 = vpop.f32.mrf.mxu0
      %v2013 = vadd.f32 %v1884, %v2012
      %v2014 = vpop.f32.mrf.mxu0
      %2015 = vmatprep.mubr.f32.mxu0 0.0
      %2016 = vmatmul.mubr.f32.gmra.mxu0 %v1916
      %v2017 = vpop.f32.mrf.mxu0
      %v2018 = vadd.f32 %v1889, %v2017
      %v2019 = vpop.f32.mrf.mxu0
      %2020 = vmatprep.mubr.f32.mxu0 0.0
      %2021 = vmatmul.mubr.f32.gmra.mxu0 %v1919
      %v2022 = vpop.f32.mrf.mxu0
      %v2023 = vadd.f32 %v1894, %v2022
      %v2024 = vpop.f32.mrf.mxu0
      %2025 = vdwg.mxu0
      %v2026 = vld [vmem:[#allocation3 + $0x2] sm:$0xff]
      %v2027 = vld [vmem:[#allocation3 + $0x12] sm:$0xff]
      %v2028 = vld [vmem:[#allocation3 + $0x22] sm:$0xff]
      %v2029 = vld [vmem:[#allocation3 + $0x32] sm:$0xff]
      %v2030 = vld [vmem:[#allocation3 + $0x42] sm:$0xff]
      %v2031 = vld [vmem:[#allocation3 + $0x52] sm:$0xff]
      %v2032 = vld [vmem:[#allocation3 + $0x62] sm:$0xff]
      %v2033 = vld [vmem:[#allocation3 + $0x72] sm:$0xff]
      %s2034 = scalar_lea.vmem %s3, 16
      %v2035 = vld [vmem:[%s2034] sm:$0xff]
      %v2037 = vsel %vm1718, %v2026, 0
      %v2040 = vsel %vm1718, %v2027, 0
      %v2043 = vsel %vm1718, %v2028, 0
      %v2046 = vsel %vm1718, %v2029, 0
      %v2049 = vsel %vm1718, %v2030, 0
      %v2052 = vsel %vm1718, %v2031, 0
      %v2055 = vsel %vm1718, %v2032, 0
      %v2058 = vsel %vm1718, %v2033, 0
      %2060 = vmatprep.subr.mxu0 0.0
      %2061 = vmatpush1.msra.mxu0 0.0
      %2062 = vmatprep.subr.mxu0 0.0
      %2063 = vmatpush1.msra.mxu0 0.0
      %2064 = vmatprep.subr.mxu0 0.0
      %2065 = vmatpush1.msra.mxu0 0.0
      %2066 = vmatprep.subr.mxu0 0.0
      %2067 = vmatpush1.msra.mxu0 0.0
      %2068 = vmatprep.subr.mxu0 0.0
      %2069 = vmatpush1.msra.mxu0 0.0
      %2070 = vmatprep.subr.mxu0 0.0
      %2071 = vmatpush1.msra.mxu0 0.0
      %2072 = vmatprep.subr.mxu0 0.0
      %2073 = vmatpush1.msra.mxu0 0.0
      %2074 = vmatprep.subr.mxu0 0.0
      %2075 = vmatpush1.msra.mxu0 0.0
      %2076 = vmatprep.subr.mxu0 0.0
      %2077 = vmatpush1.msra.mxu0 0.0
      %2078 = vmatprep.subr.mxu0 0.0
      %2079 = vmatpush1.msra.mxu0 0.0
      %2080 = vmatprep.subr.mxu0 0.0
      %2081 = vmatpush1.msra.mxu0 0.0
      %2082 = vmatprep.subr.mxu0 0.0
      %2083 = vmatpush1.msra.mxu0 0.0
      %2084 = vmatprep.subr.mxu0 0.0
      %2085 = vmatpush1.msra.mxu0 0.0
      %2086 = vmatprep.subr.mxu0 0.0
      %2087 = vmatpush1.msra.mxu0 0.0
      %2088 = vmatprep.subr.mxu0 0.0
      %2089 = vmatpush1.msra.mxu0 0.0
      %2090 = vmatprep.subr.mxu0 0.0
      %2091 = vmatpush1.msra.mxu0 %v2035
      %2092 = vmatprep.subr.mxu0 0.0
      %2093 = vmatpush2.msra.mxu0 0.0
      %2094 = vmatprep.subr.mxu0 0.0
      %2095 = vmatpush2.msra.mxu0 0.0
      %2096 = vmatprep.subr.mxu0 0.0
      %2097 = vmatpush2.msra.mxu0 0.0
      %2098 = vmatprep.subr.mxu0 0.0
      %2099 = vmatpush2.msra.mxu0 0.0
      %2100 = vmatprep.subr.mxu0 0.0
      %2101 = vmatpush2.msra.mxu0 0.0
      %2102 = vmatprep.subr.mxu0 0.0
      %2103 = vmatpush2.msra.mxu0 0.0
      %2104 = vmatprep.subr.mxu0 0.0
      %2105 = vmatpush2.msra.mxu0 0.0
      %2106 = vmatprep.subr.mxu0 0.0
      %2107 = vmatpush2.msra.mxu0 0.0
      %2108 = vmatprep.subr.mxu0 0.0
      %2109 = vmatpush2.msra.mxu0 0.0
      %2110 = vmatprep.subr.mxu0 0.0
      %2111 = vmatpush2.msra.mxu0 0.0
      %2112 = vmatprep.subr.mxu0 0.0
      %2113 = vmatpush2.msra.mxu0 0.0
      %2114 = vmatprep.subr.mxu0 0.0
      %2115 = vmatpush2.msra.mxu0 0.0
      %2116 = vmatprep.subr.mxu0 0.0
      %2117 = vmatpush2.msra.mxu0 0.0
      %2118 = vmatprep.subr.mxu0 0.0
      %2119 = vmatpush2.msra.mxu0 0.0
      %2120 = vmatprep.subr.mxu0 0.0
      %2121 = vmatpush2.msra.mxu0 0.0
      %2122 = vmatprep.subr.mxu0 0.0
      %2123 = vmatpush2.msra.mxu0 0.0
      %2124 = vmatprep.mubr.f32.mxu0 0.0
      %2125 = vmatmul.mubr.f32.gmra.mxu0 %v2037
      %v2126 = vpop.f32.mrf.mxu0
      %v2127 = vadd.f32 0.0, %v2126
      %v2128 = vpop.f32.mrf.mxu0
      %2129 = vmatprep.mubr.f32.mxu0 0.0
      %2130 = vmatmul.mubr.f32.gmra.mxu0 %v2040
      %v2131 = vpop.f32.mrf.mxu0
      %v2132 = vadd.f32 0.0, %v2131
      %v2133 = vpop.f32.mrf.mxu0
      %2134 = vmatprep.mubr.f32.mxu0 0.0
      %2135 = vmatmul.mubr.f32.gmra.mxu0 %v2043
      %v2136 = vpop.f32.mrf.mxu0
      %v2137 = vadd.f32 0.0, %v2136
      %v2138 = vpop.f32.mrf.mxu0
      %2139 = vmatprep.mubr.f32.mxu0 0.0
      %2140 = vmatmul.mubr.f32.gmra.mxu0 %v2046
      %v2141 = vpop.f32.mrf.mxu0
      %v2142 = vadd.f32 0.0, %v2141
      %v2143 = vpop.f32.mrf.mxu0
      %2144 = vmatprep.mubr.f32.mxu0 0.0
      %2145 = vmatmul.mubr.f32.gmra.mxu0 %v2049
      %v2146 = vpop.f32.mrf.mxu0
      %v2147 = vadd.f32 0.0, %v2146
      %v2148 = vpop.f32.mrf.mxu0
      %2149 = vmatprep.mubr.f32.mxu0 0.0
      %2150 = vmatmul.mubr.f32.gmra.mxu0 %v2052
      %v2151 = vpop.f32.mrf.mxu0
      %v2152 = vadd.f32 0.0, %v2151
      %v2153 = vpop.f32.mrf.mxu0
      %2154 = vmatprep.mubr.f32.mxu0 0.0
      %2155 = vmatmul.mubr.f32.gmra.mxu0 %v2055
      %v2156 = vpop.f32.mrf.mxu0
      %v2157 = vadd.f32 0.0, %v2156
      %v2158 = vpop.f32.mrf.mxu0
      %2159 = vmatprep.mubr.f32.mxu0 0.0
      %2160 = vmatmul.mubr.f32.gmra.mxu0 %v2058
      %v2161 = vpop.f32.mrf.mxu0
      %v2162 = vadd.f32 0.0, %v2161
      %v2163 = vpop.f32.mrf.mxu0
      %2164 = vdwg.mxu0
      %v2165 = vadd.f32 %v1988, %v2127
      %v2166 = vadd.f32 %v1993, %v2132
      %v2167 = vadd.f32 %v1998, %v2137
      %v2168 = vadd.f32 %v2003, %v2142
      %v2169 = vadd.f32 %v2008, %v2147
      %v2170 = vadd.f32 %v2013, %v2152
      %v2171 = vadd.f32 %v2018, %v2157
      %v2172 = vadd.f32 %v2023, %v2162
      %v2173 = vld [vmem:[%s1740] sm:$0xff]
      %v2174 = vld [vmem:[%s1740 + $0x10] sm:$0xff]
      %v2175 = vld [vmem:[%s1740 + $0x20] sm:$0xff]
      %v2176 = vld [vmem:[%s1740 + $0x30] sm:$0xff]
      %v2177 = vld [vmem:[%s1740 + $0x40] sm:$0xff]
      %v2178 = vld [vmem:[%s1740 + $0x50] sm:$0xff]
      %v2179 = vld [vmem:[%s1740 + $0x60] sm:$0xff]
      %v2180 = vld [vmem:[%s1740 + $0x70] sm:$0xff]
      %s2181 = scalar_lea.vmem %s3, 24
      %v2182 = vld [vmem:[%s2181] sm:$0xff]
      %v2184 = vsel %vm1718, %v2173, 0
      %v2187 = vsel %vm1718, %v2174, 0
      %v2190 = vsel %vm1718, %v2175, 0
      %v2193 = vsel %vm1718, %v2176, 0
      %v2196 = vsel %vm1718, %v2177, 0
      %v2199 = vsel %vm1718, %v2178, 0
      %v2202 = vsel %vm1718, %v2179, 0
      %v2205 = vsel %vm1718, %v2180, 0
      %2207 = vmatprep.subr.mxu0 0.0
      %2208 = vmatpush1.msra.mxu0 0.0
      %2209 = vmatprep.subr.mxu0 0.0
      %2210 = vmatpush1.msra.mxu0 0.0
      %2211 = vmatprep.subr.mxu0 0.0
      %2212 = vmatpush1.msra.mxu0 0.0
      %2213 = vmatprep.subr.mxu0 0.0
      %2214 = vmatpush1.msra.mxu0 0.0
      %2215 = vmatprep.subr.mxu0 0.0
      %2216 = vmatpush1.msra.mxu0 0.0
      %2217 = vmatprep.subr.mxu0 0.0
      %2218 = vmatpush1.msra.mxu0 0.0
      %2219 = vmatprep.subr.mxu0 0.0
      %2220 = vmatpush1.msra.mxu0 0.0
      %2221 = vmatprep.subr.mxu0 0.0
      %2222 = vmatpush1.msra.mxu0 0.0
      %2223 = vmatprep.subr.mxu0 0.0
      %2224 = vmatpush1.msra.mxu0 0.0
      %2225 = vmatprep.subr.mxu0 0.0
      %2226 = vmatpush1.msra.mxu0 0.0
      %2227 = vmatprep.subr.mxu0 0.0
      %2228 = vmatpush1.msra.mxu0 0.0
      %2229 = vmatprep.subr.mxu0 0.0
      %2230 = vmatpush1.msra.mxu0 0.0
      %2231 = vmatprep.subr.mxu0 0.0
      %2232 = vmatpush1.msra.mxu0 0.0
      %2233 = vmatprep.subr.mxu0 0.0
      %2234 = vmatpush1.msra.mxu0 0.0
      %2235 = vmatprep.subr.mxu0 0.0
      %2236 = vmatpush1.msra.mxu0 0.0
      %2237 = vmatprep.subr.mxu0 0.0
      %2238 = vmatpush1.msra.mxu0 %v2182
      %2239 = vmatprep.subr.mxu0 0.0
      %2240 = vmatpush2.msra.mxu0 0.0
      %2241 = vmatprep.subr.mxu0 0.0
      %2242 = vmatpush2.msra.mxu0 0.0
      %2243 = vmatprep.subr.mxu0 0.0
      %2244 = vmatpush2.msra.mxu0 0.0
      %2245 = vmatprep.subr.mxu0 0.0
      %2246 = vmatpush2.msra.mxu0 0.0
      %2247 = vmatprep.subr.mxu0 0.0
      %2248 = vmatpush2.msra.mxu0 0.0
      %2249 = vmatprep.subr.mxu0 0.0
      %2250 = vmatpush2.msra.mxu0 0.0
      %2251 = vmatprep.subr.mxu0 0.0
      %2252 = vmatpush2.msra.mxu0 0.0
      %2253 = vmatprep.subr.mxu0 0.0
      %2254 = vmatpush2.msra.mxu0 0.0
      %2255 = vmatprep.subr.mxu0 0.0
      %2256 = vmatpush2.msra.mxu0 0.0
      %2257 = vmatprep.subr.mxu0 0.0
      %2258 = vmatpush2.msra.mxu0 0.0
      %2259 = vmatprep.subr.mxu0 0.0
      %2260 = vmatpush2.msra.mxu0 0.0
      %2261 = vmatprep.subr.mxu0 0.0
      %2262 = vmatpush2.msra.mxu0 0.0
      %2263 = vmatprep.subr.mxu0 0.0
      %2264 = vmatpush2.msra.mxu0 0.0
      %2265 = vmatprep.subr.mxu0 0.0
      %2266 = vmatpush2.msra.mxu0 0.0
      %2267 = vmatprep.subr.mxu0 0.0
      %2268 = vmatpush2.msra.mxu0 0.0
      %2269 = vmatprep.subr.mxu0 0.0
      %2270 = vmatpush2.msra.mxu0 0.0
      %2271 = vmatprep.mubr.f32.mxu0 0.0
      %2272 = vmatmul.mubr.f32.gmra.mxu0 %v2184
      %v2273 = vpop.f32.mrf.mxu0
      %v2274 = vadd.f32 0.0, %v2273
      %v2275 = vpop.f32.mrf.mxu0
      %2276 = vmatprep.mubr.f32.mxu0 0.0
      %2277 = vmatmul.mubr.f32.gmra.mxu0 %v2187
      %v2278 = vpop.f32.mrf.mxu0
      %v2279 = vadd.f32 0.0, %v2278
      %v2280 = vpop.f32.mrf.mxu0
      %2281 = vmatprep.mubr.f32.mxu0 0.0
      %2282 = vmatmul.mubr.f32.gmra.mxu0 %v2190
      %v2283 = vpop.f32.mrf.mxu0
      %v2284 = vadd.f32 0.0, %v2283
      %v2285 = vpop.f32.mrf.mxu0
      %2286 = vmatprep.mubr.f32.mxu0 0.0
      %2287 = vmatmul.mubr.f32.gmra.mxu0 %v2193
      %v2288 = vpop.f32.mrf.mxu0
      %v2289 = vadd.f32 0.0, %v2288
      %v2290 = vpop.f32.mrf.mxu0
      %2291 = vmatprep.mubr.f32.mxu0 0.0
      %2292 = vmatmul.mubr.f32.gmra.mxu0 %v2196
      %v2293 = vpop.f32.mrf.mxu0
      %v2294 = vadd.f32 0.0, %v2293
      %v2295 = vpop.f32.mrf.mxu0
      %2296 = vmatprep.mubr.f32.mxu0 0.0
      %2297 = vmatmul.mubr.f32.gmra.mxu0 %v2199
      %v2298 = vpop.f32.mrf.mxu0
      %v2299 = vadd.f32 0.0, %v2298
      %v2300 = vpop.f32.mrf.mxu0
      %2301 = vmatprep.mubr.f32.mxu0 0.0
      %2302 = vmatmul.mubr.f32.gmra.mxu0 %v2202
      %v2303 = vpop.f32.mrf.mxu0
      %v2304 = vadd.f32 0.0, %v2303
      %v2305 = vpop.f32.mrf.mxu0
      %2306 = vmatprep.mubr.f32.mxu0 0.0
      %2307 = vmatmul.mubr.f32.gmra.mxu0 %v2205
      %v2308 = vpop.f32.mrf.mxu0
      %v2309 = vadd.f32 0.0, %v2308
      %v2310 = vpop.f32.mrf.mxu0
      %2311 = vdwg.mxu0
      %v2312 = vadd.f32 %v2165, %v2274
      %v2313 = vadd.f32 %v2166, %v2279
      %v2314 = vadd.f32 %v2167, %v2284
      %v2315 = vadd.f32 %v2168, %v2289
      %v2316 = vadd.f32 %v2169, %v2294
      %v2317 = vadd.f32 %v2170, %v2299
      %v2318 = vadd.f32 %v2171, %v2304
      %v2319 = vadd.f32 %v2172, %v2309
      %v2320 = vld [vmem:[%s1740 + $0x1] sm:$0xff]
      %v2321 = vld [vmem:[%s1740 + $0x11] sm:$0xff]
      %v2322 = vld [vmem:[%s1740 + $0x21] sm:$0xff]
      %v2323 = vld [vmem:[%s1740 + $0x31] sm:$0xff]
      %v2324 = vld [vmem:[%s1740 + $0x41] sm:$0xff]
      %v2325 = vld [vmem:[%s1740 + $0x51] sm:$0xff]
      %v2326 = vld [vmem:[%s1740 + $0x61] sm:$0xff]
      %v2327 = vld [vmem:[%s1740 + $0x71] sm:$0xff]
      %s2328 = scalar_lea.vmem %s3, 32
      %v2329 = vld [vmem:[%s2328] sm:$0xff]
      %v2331 = vsel %vm1718, %v2320, 0
      %v2334 = vsel %vm1718, %v2321, 0
      %v2337 = vsel %vm1718, %v2322, 0
      %v2340 = vsel %vm1718, %v2323, 0
      %v2343 = vsel %vm1718, %v2324, 0
      %v2346 = vsel %vm1718, %v2325, 0
      %v2349 = vsel %vm1718, %v2326, 0
      %v2352 = vsel %vm1718, %v2327, 0
      %2354 = vmatprep.subr.mxu0 0.0
      %2355 = vmatpush1.msra.mxu0 0.0
      %2356 = vmatprep.subr.mxu0 0.0
      %2357 = vmatpush1.msra.mxu0 0.0
      %2358 = vmatprep.subr.mxu0 0.0
      %2359 = vmatpush1.msra.mxu0 0.0
      %2360 = vmatprep.subr.mxu0 0.0
      %2361 = vmatpush1.msra.mxu0 0.0
      %2362 = vmatprep.subr.mxu0 0.0
      %2363 = vmatpush1.msra.mxu0 0.0
      %2364 = vmatprep.subr.mxu0 0.0
      %2365 = vmatpush1.msra.mxu0 0.0
      %2366 = vmatprep.subr.mxu0 0.0
      %2367 = vmatpush1.msra.mxu0 0.0
      %2368 = vmatprep.subr.mxu0 0.0
      %2369 = vmatpush1.msra.mxu0 0.0
      %2370 = vmatprep.subr.mxu0 0.0
      %2371 = vmatpush1.msra.mxu0 0.0
      %2372 = vmatprep.subr.mxu0 0.0
      %2373 = vmatpush1.msra.mxu0 0.0
      %2374 = vmatprep.subr.mxu0 0.0
      %2375 = vmatpush1.msra.mxu0 0.0
      %2376 = vmatprep.subr.mxu0 0.0
      %2377 = vmatpush1.msra.mxu0 0.0
      %2378 = vmatprep.subr.mxu0 0.0
      %2379 = vmatpush1.msra.mxu0 0.0
      %2380 = vmatprep.subr.mxu0 0.0
      %2381 = vmatpush1.msra.mxu0 0.0
      %2382 = vmatprep.subr.mxu0 0.0
      %2383 = vmatpush1.msra.mxu0 0.0
      %2384 = vmatprep.subr.mxu0 0.0
      %2385 = vmatpush1.msra.mxu0 %v2329
      %2386 = vmatprep.subr.mxu0 0.0
      %2387 = vmatpush2.msra.mxu0 0.0
      %2388 = vmatprep.subr.mxu0 0.0
      %2389 = vmatpush2.msra.mxu0 0.0
      %2390 = vmatprep.subr.mxu0 0.0
      %2391 = vmatpush2.msra.mxu0 0.0
      %2392 = vmatprep.subr.mxu0 0.0
      %2393 = vmatpush2.msra.mxu0 0.0
      %2394 = vmatprep.subr.mxu0 0.0
      %2395 = vmatpush2.msra.mxu0 0.0
      %2396 = vmatprep.subr.mxu0 0.0
      %2397 = vmatpush2.msra.mxu0 0.0
      %2398 = vmatprep.subr.mxu0 0.0
      %2399 = vmatpush2.msra.mxu0 0.0
      %2400 = vmatprep.subr.mxu0 0.0
      %2401 = vmatpush2.msra.mxu0 0.0
      %2402 = vmatprep.subr.mxu0 0.0
      %2403 = vmatpush2.msra.mxu0 0.0
      %2404 = vmatprep.subr.mxu0 0.0
      %2405 = vmatpush2.msra.mxu0 0.0
      %2406 = vmatprep.subr.mxu0 0.0
      %2407 = vmatpush2.msra.mxu0 0.0
      %2408 = vmatprep.subr.mxu0 0.0
      %2409 = vmatpush2.msra.mxu0 0.0
      %2410 = vmatprep.subr.mxu0 0.0
      %2411 = vmatpush2.msra.mxu0 0.0
      %2412 = vmatprep.subr.mxu0 0.0
      %2413 = vmatpush2.msra.mxu0 0.0
      %2414 = vmatprep.subr.mxu0 0.0
      %2415 = vmatpush2.msra.mxu0 0.0
      %2416 = vmatprep.subr.mxu0 0.0
      %2417 = vmatpush2.msra.mxu0 0.0
      %2418 = vmatprep.mubr.f32.mxu0 0.0
      %2419 = vmatmul.mubr.f32.gmra.mxu0 %v2331
      %v2420 = vpop.f32.mrf.mxu0
      %v2421 = vadd.f32 0.0, %v2420
      %v2422 = vpop.f32.mrf.mxu0
      %2423 = vmatprep.mubr.f32.mxu0 0.0
      %2424 = vmatmul.mubr.f32.gmra.mxu0 %v2334
      %v2425 = vpop.f32.mrf.mxu0
      %v2426 = vadd.f32 0.0, %v2425
      %v2427 = vpop.f32.mrf.mxu0
      %2428 = vmatprep.mubr.f32.mxu0 0.0
      %2429 = vmatmul.mubr.f32.gmra.mxu0 %v2337
      %v2430 = vpop.f32.mrf.mxu0
      %v2431 = vadd.f32 0.0, %v2430
      %v2432 = vpop.f32.mrf.mxu0
      %2433 = vmatprep.mubr.f32.mxu0 0.0
      %2434 = vmatmul.mubr.f32.gmra.mxu0 %v2340
      %v2435 = vpop.f32.mrf.mxu0
      %v2436 = vadd.f32 0.0, %v2435
      %v2437 = vpop.f32.mrf.mxu0
      %2438 = vmatprep.mubr.f32.mxu0 0.0
      %2439 = vmatmul.mubr.f32.gmra.mxu0 %v2343
      %v2440 = vpop.f32.mrf.mxu0
      %v2441 = vadd.f32 0.0, %v2440
      %v2442 = vpop.f32.mrf.mxu0
      %2443 = vmatprep.mubr.f32.mxu0 0.0
      %2444 = vmatmul.mubr.f32.gmra.mxu0 %v2346
      %v2445 = vpop.f32.mrf.mxu0
      %v2446 = vadd.f32 0.0, %v2445
      %v2447 = vpop.f32.mrf.mxu0
      %2448 = vmatprep.mubr.f32.mxu0 0.0
      %2449 = vmatmul.mubr.f32.gmra.mxu0 %v2349
      %v2450 = vpop.f32.mrf.mxu0
      %v2451 = vadd.f32 0.0, %v2450
      %v2452 = vpop.f32.mrf.mxu0
      %2453 = vmatprep.mubr.f32.mxu0 0.0
      %2454 = vmatmul.mubr.f32.gmra.mxu0 %v2352
      %v2455 = vpop.f32.mrf.mxu0
      %v2456 = vadd.f32 0.0, %v2455
      %v2457 = vpop.f32.mrf.mxu0
      %2458 = vdwg.mxu0
      %v2459 = vadd.f32 %v2312, %v2421
      %v2460 = vadd.f32 %v2313, %v2426
      %v2461 = vadd.f32 %v2314, %v2431
      %v2462 = vadd.f32 %v2315, %v2436
      %v2463 = vadd.f32 %v2316, %v2441
      %v2464 = vadd.f32 %v2317, %v2446
      %v2465 = vadd.f32 %v2318, %v2451
      %v2466 = vadd.f32 %v2319, %v2456
      %v2467 = vld [vmem:[%s1740 + $0x2] sm:$0xff]
      %v2468 = vld [vmem:[%s1740 + $0x12] sm:$0xff]
      %v2469 = vld [vmem:[%s1740 + $0x22] sm:$0xff]
      %v2470 = vld [vmem:[%s1740 + $0x32] sm:$0xff]
      %v2471 = vld [vmem:[%s1740 + $0x42] sm:$0xff]
      %v2472 = vld [vmem:[%s1740 + $0x52] sm:$0xff]
      %v2473 = vld [vmem:[%s1740 + $0x62] sm:$0xff]
      %v2474 = vld [vmem:[%s1740 + $0x72] sm:$0xff]
      %s2475 = scalar_lea.vmem %s3, 40
      %v2476 = vld [vmem:[%s2475] sm:$0xff]
      %v2478 = vsel %vm1718, %v2467, 0
      %v2481 = vsel %vm1718, %v2468, 0
      %v2484 = vsel %vm1718, %v2469, 0
      %v2487 = vsel %vm1718, %v2470, 0
      %v2490 = vsel %vm1718, %v2471, 0
      %v2493 = vsel %vm1718, %v2472, 0
      %v2496 = vsel %vm1718, %v2473, 0
      %v2499 = vsel %vm1718, %v2474, 0
      %2501 = vmatprep.subr.mxu0 0.0
      %2502 = vmatpush1.msra.mxu0 0.0
      %2503 = vmatprep.subr.mxu0 0.0
      %2504 = vmatpush1.msra.mxu0 0.0
      %2505 = vmatprep.subr.mxu0 0.0
      %2506 = vmatpush1.msra.mxu0 0.0
      %2507 = vmatprep.subr.mxu0 0.0
      %2508 = vmatpush1.msra.mxu0 0.0
      %2509 = vmatprep.subr.mxu0 0.0
      %2510 = vmatpush1.msra.mxu0 0.0
      %2511 = vmatprep.subr.mxu0 0.0
      %2512 = vmatpush1.msra.mxu0 0.0
      %2513 = vmatprep.subr.mxu0 0.0
      %2514 = vmatpush1.msra.mxu0 0.0
      %2515 = vmatprep.subr.mxu0 0.0
      %2516 = vmatpush1.msra.mxu0 0.0
      %2517 = vmatprep.subr.mxu0 0.0
      %2518 = vmatpush1.msra.mxu0 0.0
      %2519 = vmatprep.subr.mxu0 0.0
      %2520 = vmatpush1.msra.mxu0 0.0
      %2521 = vmatprep.subr.mxu0 0.0
      %2522 = vmatpush1.msra.mxu0 0.0
      %2523 = vmatprep.subr.mxu0 0.0
      %2524 = vmatpush1.msra.mxu0 0.0
      %2525 = vmatprep.subr.mxu0 0.0
      %2526 = vmatpush1.msra.mxu0 0.0
      %2527 = vmatprep.subr.mxu0 0.0
      %2528 = vmatpush1.msra.mxu0 0.0
      %2529 = vmatprep.subr.mxu0 0.0
      %2530 = vmatpush1.msra.mxu0 0.0
      %2531 = vmatprep.subr.mxu0 0.0
      %2532 = vmatpush1.msra.mxu0 %v2476
      %2533 = vmatprep.subr.mxu0 0.0
      %2534 = vmatpush2.msra.mxu0 0.0
      %2535 = vmatprep.subr.mxu0 0.0
      %2536 = vmatpush2.msra.mxu0 0.0
      %2537 = vmatprep.subr.mxu0 0.0
      %2538 = vmatpush2.msra.mxu0 0.0
      %2539 = vmatprep.subr.mxu0 0.0
      %2540 = vmatpush2.msra.mxu0 0.0
      %2541 = vmatprep.subr.mxu0 0.0
      %2542 = vmatpush2.msra.mxu0 0.0
      %2543 = vmatprep.subr.mxu0 0.0
      %2544 = vmatpush2.msra.mxu0 0.0
      %2545 = vmatprep.subr.mxu0 0.0
      %2546 = vmatpush2.msra.mxu0 0.0
      %2547 = vmatprep.subr.mxu0 0.0
      %2548 = vmatpush2.msra.mxu0 0.0
      %2549 = vmatprep.subr.mxu0 0.0
      %2550 = vmatpush2.msra.mxu0 0.0
      %2551 = vmatprep.subr.mxu0 0.0
      %2552 = vmatpush2.msra.mxu0 0.0
      %2553 = vmatprep.subr.mxu0 0.0
      %2554 = vmatpush2.msra.mxu0 0.0
      %2555 = vmatprep.subr.mxu0 0.0
      %2556 = vmatpush2.msra.mxu0 0.0
      %2557 = vmatprep.subr.mxu0 0.0
      %2558 = vmatpush2.msra.mxu0 0.0
      %2559 = vmatprep.subr.mxu0 0.0
      %2560 = vmatpush2.msra.mxu0 0.0
      %2561 = vmatprep.subr.mxu0 0.0
      %2562 = vmatpush2.msra.mxu0 0.0
      %2563 = vmatprep.subr.mxu0 0.0
      %2564 = vmatpush2.msra.mxu0 0.0
      %2565 = vmatprep.mubr.f32.mxu0 0.0
      %2566 = vmatmul.mubr.f32.gmra.mxu0 %v2478
      %v2567 = vpop.f32.mrf.mxu0
      %v2568 = vadd.f32 0.0, %v2567
      %v2569 = vpop.f32.mrf.mxu0
      %2570 = vmatprep.mubr.f32.mxu0 0.0
      %2571 = vmatmul.mubr.f32.gmra.mxu0 %v2481
      %v2572 = vpop.f32.mrf.mxu0
      %v2573 = vadd.f32 0.0, %v2572
      %v2574 = vpop.f32.mrf.mxu0
      %2575 = vmatprep.mubr.f32.mxu0 0.0
      %2576 = vmatmul.mubr.f32.gmra.mxu0 %v2484
      %v2577 = vpop.f32.mrf.mxu0
      %v2578 = vadd.f32 0.0, %v2577
      %v2579 = vpop.f32.mrf.mxu0
      %2580 = vmatprep.mubr.f32.mxu0 0.0
      %2581 = vmatmul.mubr.f32.gmra.mxu0 %v2487
      %v2582 = vpop.f32.mrf.mxu0
      %v2583 = vadd.f32 0.0, %v2582
      %v2584 = vpop.f32.mrf.mxu0
      %2585 = vmatprep.mubr.f32.mxu0 0.0
      %2586 = vmatmul.mubr.f32.gmra.mxu0 %v2490
      %v2587 = vpop.f32.mrf.mxu0
      %v2588 = vadd.f32 0.0, %v2587
      %v2589 = vpop.f32.mrf.mxu0
      %2590 = vmatprep.mubr.f32.mxu0 0.0
      %2591 = vmatmul.mubr.f32.gmra.mxu0 %v2493
      %v2592 = vpop.f32.mrf.mxu0
      %v2593 = vadd.f32 0.0, %v2592
      %v2594 = vpop.f32.mrf.mxu0
      %2595 = vmatprep.mubr.f32.mxu0 0.0
      %2596 = vmatmul.mubr.f32.gmra.mxu0 %v2496
      %v2597 = vpop.f32.mrf.mxu0
      %v2598 = vadd.f32 0.0, %v2597
      %v2599 = vpop.f32.mrf.mxu0
      %2600 = vmatprep.mubr.f32.mxu0 0.0
      %2601 = vmatmul.mubr.f32.gmra.mxu0 %v2499
      %v2602 = vpop.f32.mrf.mxu0
      %v2603 = vadd.f32 0.0, %v2602
      %v2604 = vpop.f32.mrf.mxu0
      %2605 = vdwg.mxu0
      %v2606 = vadd.f32 %v2459, %v2568
      %v2607 = vadd.f32 %v2460, %v2573
      %v2608 = vadd.f32 %v2461, %v2578
      %v2609 = vadd.f32 %v2462, %v2583
      %v2610 = vadd.f32 %v2463, %v2588
      %v2611 = vadd.f32 %v2464, %v2593
      %v2612 = vadd.f32 %v2465, %v2598
      %v2613 = vadd.f32 %v2466, %v2603
      %s2614 = scalar_lea.vmem [#allocation3], 32
      %v2615 = vld [vmem:[%s2614] sm:$0xff]
      %v2616 = vld [vmem:[%s2614 + $0x10] sm:$0xff]
      %v2617 = vld [vmem:[%s2614 + $0x20] sm:$0xff]
      %v2618 = vld [vmem:[%s2614 + $0x30] sm:$0xff]
      %v2619 = vld [vmem:[%s2614 + $0x40] sm:$0xff]
      %v2620 = vld [vmem:[%s2614 + $0x50] sm:$0xff]
      %v2621 = vld [vmem:[%s2614 + $0x60] sm:$0xff]
      %v2622 = vld [vmem:[%s2614 + $0x70] sm:$0xff]
      %s2623 = scalar_lea.vmem %s3, 48
      %v2624 = vld [vmem:[%s2623] sm:$0xff]
      %v2626 = vsel %vm1718, %v2615, 0
      %v2629 = vsel %vm1718, %v2616, 0
      %v2632 = vsel %vm1718, %v2617, 0
      %v2635 = vsel %vm1718, %v2618, 0
      %v2638 = vsel %vm1718, %v2619, 0
      %v2641 = vsel %vm1718, %v2620, 0
      %v2644 = vsel %vm1718, %v2621, 0
      %v2647 = vsel %vm1718, %v2622, 0
      %2649 = vmatprep.subr.mxu0 0.0
      %2650 = vmatpush1.msra.mxu0 0.0
      %2651 = vmatprep.subr.mxu0 0.0
      %2652 = vmatpush1.msra.mxu0 0.0
      %2653 = vmatprep.subr.mxu0 0.0
      %2654 = vmatpush1.msra.mxu0 0.0
      %2655 = vmatprep.subr.mxu0 0.0
      %2656 = vmatpush1.msra.mxu0 0.0
      %2657 = vmatprep.subr.mxu0 0.0
      %2658 = vmatpush1.msra.mxu0 0.0
      %2659 = vmatprep.subr.mxu0 0.0
      %2660 = vmatpush1.msra.mxu0 0.0
      %2661 = vmatprep.subr.mxu0 0.0
      %2662 = vmatpush1.msra.mxu0 0.0
      %2663 = vmatprep.subr.mxu0 0.0
      %2664 = vmatpush1.msra.mxu0 0.0
      %2665 = vmatprep.subr.mxu0 0.0
      %2666 = vmatpush1.msra.mxu0 0.0
      %2667 = vmatprep.subr.mxu0 0.0
      %2668 = vmatpush1.msra.mxu0 0.0
      %2669 = vmatprep.subr.mxu0 0.0
      %2670 = vmatpush1.msra.mxu0 0.0
      %2671 = vmatprep.subr.mxu0 0.0
      %2672 = vmatpush1.msra.mxu0 0.0
      %2673 = vmatprep.subr.mxu0 0.0
      %2674 = vmatpush1.msra.mxu0 0.0
      %2675 = vmatprep.subr.mxu0 0.0
      %2676 = vmatpush1.msra.mxu0 0.0
      %2677 = vmatprep.subr.mxu0 0.0
      %2678 = vmatpush1.msra.mxu0 0.0
      %2679 = vmatprep.subr.mxu0 0.0
      %2680 = vmatpush1.msra.mxu0 %v2624
      %2681 = vmatprep.subr.mxu0 0.0
      %2682 = vmatpush2.msra.mxu0 0.0
      %2683 = vmatprep.subr.mxu0 0.0
      %2684 = vmatpush2.msra.mxu0 0.0
      %2685 = vmatprep.subr.mxu0 0.0
      %2686 = vmatpush2.msra.mxu0 0.0
      %2687 = vmatprep.subr.mxu0 0.0
      %2688 = vmatpush2.msra.mxu0 0.0
      %2689 = vmatprep.subr.mxu0 0.0
      %2690 = vmatpush2.msra.mxu0 0.0
      %2691 = vmatprep.subr.mxu0 0.0
      %2692 = vmatpush2.msra.mxu0 0.0
      %2693 = vmatprep.subr.mxu0 0.0
      %2694 = vmatpush2.msra.mxu0 0.0
      %2695 = vmatprep.subr.mxu0 0.0
      %2696 = vmatpush2.msra.mxu0 0.0
      %2697 = vmatprep.subr.mxu0 0.0
      %2698 = vmatpush2.msra.mxu0 0.0
      %2699 = vmatprep.subr.mxu0 0.0
      %2700 = vmatpush2.msra.mxu0 0.0
      %2701 = vmatprep.subr.mxu0 0.0
      %2702 = vmatpush2.msra.mxu0 0.0
      %2703 = vmatprep.subr.mxu0 0.0
      %2704 = vmatpush2.msra.mxu0 0.0
      %2705 = vmatprep.subr.mxu0 0.0
      %2706 = vmatpush2.msra.mxu0 0.0
      %2707 = vmatprep.subr.mxu0 0.0
      %2708 = vmatpush2.msra.mxu0 0.0
      %2709 = vmatprep.subr.mxu0 0.0
      %2710 = vmatpush2.msra.mxu0 0.0
      %2711 = vmatprep.subr.mxu0 0.0
      %2712 = vmatpush2.msra.mxu0 0.0
      %2713 = vmatprep.mubr.f32.mxu0 0.0
      %2714 = vmatmul.mubr.f32.gmra.mxu0 %v2626
      %v2715 = vpop.f32.mrf.mxu0
      %v2716 = vadd.f32 0.0, %v2715
      %v2717 = vpop.f32.mrf.mxu0
      %2718 = vmatprep.mubr.f32.mxu0 0.0
      %2719 = vmatmul.mubr.f32.gmra.mxu0 %v2629
      %v2720 = vpop.f32.mrf.mxu0
      %v2721 = vadd.f32 0.0, %v2720
      %v2722 = vpop.f32.mrf.mxu0
      %2723 = vmatprep.mubr.f32.mxu0 0.0
      %2724 = vmatmul.mubr.f32.gmra.mxu0 %v2632
      %v2725 = vpop.f32.mrf.mxu0
      %v2726 = vadd.f32 0.0, %v2725
      %v2727 = vpop.f32.mrf.mxu0
      %2728 = vmatprep.mubr.f32.mxu0 0.0
      %2729 = vmatmul.mubr.f32.gmra.mxu0 %v2635
      %v2730 = vpop.f32.mrf.mxu0
      %v2731 = vadd.f32 0.0, %v2730
      %v2732 = vpop.f32.mrf.mxu0
      %2733 = vmatprep.mubr.f32.mxu0 0.0
      %2734 = vmatmul.mubr.f32.gmra.mxu0 %v2638
      %v2735 = vpop.f32.mrf.mxu0
      %v2736 = vadd.f32 0.0, %v2735
      %v2737 = vpop.f32.mrf.mxu0
      %2738 = vmatprep.mubr.f32.mxu0 0.0
      %2739 = vmatmul.mubr.f32.gmra.mxu0 %v2641
      %v2740 = vpop.f32.mrf.mxu0
      %v2741 = vadd.f32 0.0, %v2740
      %v2742 = vpop.f32.mrf.mxu0
      %2743 = vmatprep.mubr.f32.mxu0 0.0
      %2744 = vmatmul.mubr.f32.gmra.mxu0 %v2644
      %v2745 = vpop.f32.mrf.mxu0
      %v2746 = vadd.f32 0.0, %v2745
      %v2747 = vpop.f32.mrf.mxu0
      %2748 = vmatprep.mubr.f32.mxu0 0.0
      %2749 = vmatmul.mubr.f32.gmra.mxu0 %v2647
      %v2750 = vpop.f32.mrf.mxu0
      %v2751 = vadd.f32 0.0, %v2750
      %v2752 = vpop.f32.mrf.mxu0
      %2753 = vdwg.mxu0
      %v2754 = vadd.f32 %v2606, %v2716
      %v2755 = vadd.f32 %v2607, %v2721
      %v2756 = vadd.f32 %v2608, %v2726
      %v2757 = vadd.f32 %v2609, %v2731
      %v2758 = vadd.f32 %v2610, %v2736
      %v2759 = vadd.f32 %v2611, %v2741
      %v2760 = vadd.f32 %v2612, %v2746
      %v2761 = vadd.f32 %v2613, %v2751
      %v2762 = vld [vmem:[%s2614 + $0x1] sm:$0xff]
      %v2763 = vld [vmem:[%s2614 + $0x11] sm:$0xff]
      %v2764 = vld [vmem:[%s2614 + $0x21] sm:$0xff]
      %v2765 = vld [vmem:[%s2614 + $0x31] sm:$0xff]
      %v2766 = vld [vmem:[%s2614 + $0x41] sm:$0xff]
      %v2767 = vld [vmem:[%s2614 + $0x51] sm:$0xff]
      %v2768 = vld [vmem:[%s2614 + $0x61] sm:$0xff]
      %v2769 = vld [vmem:[%s2614 + $0x71] sm:$0xff]
      %s2770 = scalar_lea.vmem %s3, 56
      %v2771 = vld [vmem:[%s2770] sm:$0xff]
      %v2773 = vsel %vm1718, %v2762, 0
      %v2776 = vsel %vm1718, %v2763, 0
      %v2779 = vsel %vm1718, %v2764, 0
      %v2782 = vsel %vm1718, %v2765, 0
      %v2785 = vsel %vm1718, %v2766, 0
      %v2788 = vsel %vm1718, %v2767, 0
      %v2791 = vsel %vm1718, %v2768, 0
      %v2794 = vsel %vm1718, %v2769, 0
      %2796 = vmatprep.subr.mxu0 0.0
      %2797 = vmatpush1.msra.mxu0 0.0
      %2798 = vmatprep.subr.mxu0 0.0
      %2799 = vmatpush1.msra.mxu0 0.0
      %2800 = vmatprep.subr.mxu0 0.0
      %2801 = vmatpush1.msra.mxu0 0.0
      %2802 = vmatprep.subr.mxu0 0.0
      %2803 = vmatpush1.msra.mxu0 0.0
      %2804 = vmatprep.subr.mxu0 0.0
      %2805 = vmatpush1.msra.mxu0 0.0
      %2806 = vmatprep.subr.mxu0 0.0
      %2807 = vmatpush1.msra.mxu0 0.0
      %2808 = vmatprep.subr.mxu0 0.0
      %2809 = vmatpush1.msra.mxu0 0.0
      %2810 = vmatprep.subr.mxu0 0.0
      %2811 = vmatpush1.msra.mxu0 0.0
      %2812 = vmatprep.subr.mxu0 0.0
      %2813 = vmatpush1.msra.mxu0 0.0
      %2814 = vmatprep.subr.mxu0 0.0
      %2815 = vmatpush1.msra.mxu0 0.0
      %2816 = vmatprep.subr.mxu0 0.0
      %2817 = vmatpush1.msra.mxu0 0.0
      %2818 = vmatprep.subr.mxu0 0.0
      %2819 = vmatpush1.msra.mxu0 0.0
      %2820 = vmatprep.subr.mxu0 0.0
      %2821 = vmatpush1.msra.mxu0 0.0
      %2822 = vmatprep.subr.mxu0 0.0
      %2823 = vmatpush1.msra.mxu0 0.0
      %2824 = vmatprep.subr.mxu0 0.0
      %2825 = vmatpush1.msra.mxu0 0.0
      %2826 = vmatprep.subr.mxu0 0.0
      %2827 = vmatpush1.msra.mxu0 %v2771
      %2828 = vmatprep.subr.mxu0 0.0
      %2829 = vmatpush2.msra.mxu0 0.0
      %2830 = vmatprep.subr.mxu0 0.0
      %2831 = vmatpush2.msra.mxu0 0.0
      %2832 = vmatprep.subr.mxu0 0.0
      %2833 = vmatpush2.msra.mxu0 0.0
      %2834 = vmatprep.subr.mxu0 0.0
      %2835 = vmatpush2.msra.mxu0 0.0
      %2836 = vmatprep.subr.mxu0 0.0
      %2837 = vmatpush2.msra.mxu0 0.0
      %2838 = vmatprep.subr.mxu0 0.0
      %2839 = vmatpush2.msra.mxu0 0.0
      %2840 = vmatprep.subr.mxu0 0.0
      %2841 = vmatpush2.msra.mxu0 0.0
      %2842 = vmatprep.subr.mxu0 0.0
      %2843 = vmatpush2.msra.mxu0 0.0
      %2844 = vmatprep.subr.mxu0 0.0
      %2845 = vmatpush2.msra.mxu0 0.0
      %2846 = vmatprep.subr.mxu0 0.0
      %2847 = vmatpush2.msra.mxu0 0.0
      %2848 = vmatprep.subr.mxu0 0.0
      %2849 = vmatpush2.msra.mxu0 0.0
      %2850 = vmatprep.subr.mxu0 0.0
      %2851 = vmatpush2.msra.mxu0 0.0
      %2852 = vmatprep.subr.mxu0 0.0
      %2853 = vmatpush2.msra.mxu0 0.0
      %2854 = vmatprep.subr.mxu0 0.0
      %2855 = vmatpush2.msra.mxu0 0.0
      %2856 = vmatprep.subr.mxu0 0.0
      %2857 = vmatpush2.msra.mxu0 0.0
      %2858 = vmatprep.subr.mxu0 0.0
      %2859 = vmatpush2.msra.mxu0 0.0
      %2860 = vmatprep.mubr.f32.mxu0 0.0
      %2861 = vmatmul.mubr.f32.gmra.mxu0 %v2773
      %v2862 = vpop.f32.mrf.mxu0
      %v2863 = vadd.f32 0.0, %v2862
      %v2864 = vpop.f32.mrf.mxu0
      %2865 = vmatprep.mubr.f32.mxu0 0.0
      %2866 = vmatmul.mubr.f32.gmra.mxu0 %v2776
      %v2867 = vpop.f32.mrf.mxu0
      %v2868 = vadd.f32 0.0, %v2867
      %v2869 = vpop.f32.mrf.mxu0
      %2870 = vmatprep.mubr.f32.mxu0 0.0
      %2871 = vmatmul.mubr.f32.gmra.mxu0 %v2779
      %v2872 = vpop.f32.mrf.mxu0
      %v2873 = vadd.f32 0.0, %v2872
      %v2874 = vpop.f32.mrf.mxu0
      %2875 = vmatprep.mubr.f32.mxu0 0.0
      %2876 = vmatmul.mubr.f32.gmra.mxu0 %v2782
      %v2877 = vpop.f32.mrf.mxu0
      %v2878 = vadd.f32 0.0, %v2877
      %v2879 = vpop.f32.mrf.mxu0
      %2880 = vmatprep.mubr.f32.mxu0 0.0
      %2881 = vmatmul.mubr.f32.gmra.mxu0 %v2785
      %v2882 = vpop.f32.mrf.mxu0
      %v2883 = vadd.f32 0.0, %v2882
      %v2884 = vpop.f32.mrf.mxu0
      %2885 = vmatprep.mubr.f32.mxu0 0.0
      %2886 = vmatmul.mubr.f32.gmra.mxu0 %v2788
      %v2887 = vpop.f32.mrf.mxu0
      %v2888 = vadd.f32 0.0, %v2887
      %v2889 = vpop.f32.mrf.mxu0
      %2890 = vmatprep.mubr.f32.mxu0 0.0
      %2891 = vmatmul.mubr.f32.gmra.mxu0 %v2791
      %v2892 = vpop.f32.mrf.mxu0
      %v2893 = vadd.f32 0.0, %v2892
      %v2894 = vpop.f32.mrf.mxu0
      %2895 = vmatprep.mubr.f32.mxu0 0.0
      %2896 = vmatmul.mubr.f32.gmra.mxu0 %v2794
      %v2897 = vpop.f32.mrf.mxu0
      %v2898 = vadd.f32 0.0, %v2897
      %v2899 = vpop.f32.mrf.mxu0
      %2900 = vdwg.mxu0
      %v2901 = vadd.f32 %v2754, %v2863
      %v2902 = vadd.f32 %v2755, %v2868
      %v2903 = vadd.f32 %v2756, %v2873
      %v2904 = vadd.f32 %v2757, %v2878
      %v2905 = vadd.f32 %v2758, %v2883
      %v2906 = vadd.f32 %v2759, %v2888
      %v2907 = vadd.f32 %v2760, %v2893
      %v2908 = vadd.f32 %v2761, %v2898
      %v2909 = vld [vmem:[%s2614 + $0x2] sm:$0xff]
      %v2910 = vld [vmem:[%s2614 + $0x12] sm:$0xff]
      %v2911 = vld [vmem:[%s2614 + $0x22] sm:$0xff]
      %v2912 = vld [vmem:[%s2614 + $0x32] sm:$0xff]
      %v2913 = vld [vmem:[%s2614 + $0x42] sm:$0xff]
      %v2914 = vld [vmem:[%s2614 + $0x52] sm:$0xff]
      %v2915 = vld [vmem:[%s2614 + $0x62] sm:$0xff]
      %v2916 = vld [vmem:[%s2614 + $0x72] sm:$0xff]
      %s2917 = scalar_lea.vmem %s3, 64
      %v2918 = vld [vmem:[%s2917] sm:$0xff]
      %v2920 = vsel %vm1718, %v2909, 0
      %v2923 = vsel %vm1718, %v2910, 0
      %v2926 = vsel %vm1718, %v2911, 0
      %v2929 = vsel %vm1718, %v2912, 0
      %v2932 = vsel %vm1718, %v2913, 0
      %v2935 = vsel %vm1718, %v2914, 0
      %v2938 = vsel %vm1718, %v2915, 0
      %v2941 = vsel %vm1718, %v2916, 0
      %2943 = vmatprep.subr.mxu0 0.0
      %2944 = vmatpush1.msra.mxu0 0.0
      %2945 = vmatprep.subr.mxu0 0.0
      %2946 = vmatpush1.msra.mxu0 0.0
      %2947 = vmatprep.subr.mxu0 0.0
      %2948 = vmatpush1.msra.mxu0 0.0
      %2949 = vmatprep.subr.mxu0 0.0
      %2950 = vmatpush1.msra.mxu0 0.0
      %2951 = vmatprep.subr.mxu0 0.0
      %2952 = vmatpush1.msra.mxu0 0.0
      %2953 = vmatprep.subr.mxu0 0.0
      %2954 = vmatpush1.msra.mxu0 0.0
      %2955 = vmatprep.subr.mxu0 0.0
      %2956 = vmatpush1.msra.mxu0 0.0
      %2957 = vmatprep.subr.mxu0 0.0
      %2958 = vmatpush1.msra.mxu0 0.0
      %2959 = vmatprep.subr.mxu0 0.0
      %2960 = vmatpush1.msra.mxu0 0.0
      %2961 = vmatprep.subr.mxu0 0.0
      %2962 = vmatpush1.msra.mxu0 0.0
      %2963 = vmatprep.subr.mxu0 0.0
      %2964 = vmatpush1.msra.mxu0 0.0
      %2965 = vmatprep.subr.mxu0 0.0
      %2966 = vmatpush1.msra.mxu0 0.0
      %2967 = vmatprep.subr.mxu0 0.0
      %2968 = vmatpush1.msra.mxu0 0.0
      %2969 = vmatprep.subr.mxu0 0.0
      %2970 = vmatpush1.msra.mxu0 0.0
      %2971 = vmatprep.subr.mxu0 0.0
      %2972 = vmatpush1.msra.mxu0 0.0
      %2973 = vmatprep.subr.mxu0 0.0
      %2974 = vmatpush1.msra.mxu0 %v2918
      %2975 = vmatprep.subr.mxu0 0.0
      %2976 = vmatpush2.msra.mxu0 0.0
      %2977 = vmatprep.subr.mxu0 0.0
      %2978 = vmatpush2.msra.mxu0 0.0
      %2979 = vmatprep.subr.mxu0 0.0
      %2980 = vmatpush2.msra.mxu0 0.0
      %2981 = vmatprep.subr.mxu0 0.0
      %2982 = vmatpush2.msra.mxu0 0.0
      %2983 = vmatprep.subr.mxu0 0.0
      %2984 = vmatpush2.msra.mxu0 0.0
      %2985 = vmatprep.subr.mxu0 0.0
      %2986 = vmatpush2.msra.mxu0 0.0
      %2987 = vmatprep.subr.mxu0 0.0
      %2988 = vmatpush2.msra.mxu0 0.0
      %2989 = vmatprep.subr.mxu0 0.0
      %2990 = vmatpush2.msra.mxu0 0.0
      %2991 = vmatprep.subr.mxu0 0.0
      %2992 = vmatpush2.msra.mxu0 0.0
      %2993 = vmatprep.subr.mxu0 0.0
      %2994 = vmatpush2.msra.mxu0 0.0
      %2995 = vmatprep.subr.mxu0 0.0
      %2996 = vmatpush2.msra.mxu0 0.0
      %2997 = vmatprep.subr.mxu0 0.0
      %2998 = vmatpush2.msra.mxu0 0.0
      %2999 = vmatprep.subr.mxu0 0.0
      %3000 = vmatpush2.msra.mxu0 0.0
      %3001 = vmatprep.subr.mxu0 0.0
      %3002 = vmatpush2.msra.mxu0 0.0
      %3003 = vmatprep.subr.mxu0 0.0
      %3004 = vmatpush2.msra.mxu0 0.0
      %3005 = vmatprep.subr.mxu0 0.0
      %3006 = vmatpush2.msra.mxu0 0.0
      %3007 = vmatprep.mubr.f32.mxu0 0.0
      %3008 = vmatmul.mubr.f32.gmra.mxu0 %v2920
      %v3009 = vpop.f32.mrf.mxu0
      %v3010 = vadd.f32 0.0, %v3009
      %v3011 = vpop.f32.mrf.mxu0
      %3012 = vmatprep.mubr.f32.mxu0 0.0
      %3013 = vmatmul.mubr.f32.gmra.mxu0 %v2923
      %v3014 = vpop.f32.mrf.mxu0
      %v3015 = vadd.f32 0.0, %v3014
      %v3016 = vpop.f32.mrf.mxu0
      %3017 = vmatprep.mubr.f32.mxu0 0.0
      %3018 = vmatmul.mubr.f32.gmra.mxu0 %v2926
      %v3019 = vpop.f32.mrf.mxu0
      %v3020 = vadd.f32 0.0, %v3019
      %v3021 = vpop.f32.mrf.mxu0
      %3022 = vmatprep.mubr.f32.mxu0 0.0
      %3023 = vmatmul.mubr.f32.gmra.mxu0 %v2929
      %v3024 = vpop.f32.mrf.mxu0
      %v3025 = vadd.f32 0.0, %v3024
      %v3026 = vpop.f32.mrf.mxu0
      %3027 = vmatprep.mubr.f32.mxu0 0.0
      %3028 = vmatmul.mubr.f32.gmra.mxu0 %v2932
      %v3029 = vpop.f32.mrf.mxu0
      %v3030 = vadd.f32 0.0, %v3029
      %v3031 = vpop.f32.mrf.mxu0
      %3032 = vmatprep.mubr.f32.mxu0 0.0
      %3033 = vmatmul.mubr.f32.gmra.mxu0 %v2935
      %v3034 = vpop.f32.mrf.mxu0
      %v3035 = vadd.f32 0.0, %v3034
      %v3036 = vpop.f32.mrf.mxu0
      %3037 = vmatprep.mubr.f32.mxu0 0.0
      %3038 = vmatmul.mubr.f32.gmra.mxu0 %v2938
      %v3039 = vpop.f32.mrf.mxu0
      %v3040 = vadd.f32 0.0, %v3039
      %v3041 = vpop.f32.mrf.mxu0
      %3042 = vmatprep.mubr.f32.mxu0 0.0
      %3043 = vmatmul.mubr.f32.gmra.mxu0 %v2941
      %v3044 = vpop.f32.mrf.mxu0
      %v3045 = vadd.f32 0.0, %v3044
      %v3046 = vpop.f32.mrf.mxu0
      %3047 = vdwg.mxu0
      %v3048 = vadd.f32 %v2901, %v3010
      %v3049 = vadd.f32 %v2902, %v3015
      %v3050 = vadd.f32 %v2903, %v3020
      %v3051 = vadd.f32 %v2904, %v3025
      %v3052 = vadd.f32 %v2905, %v3030
      %v3053 = vadd.f32 %v2906, %v3035
      %v3054 = vadd.f32 %v2907, %v3040
      %v3055 = vadd.f32 %v2908, %v3045
      %v3056 = vld [vmem:[%s4] sm:$0x1]
      %v3058 = vlaneseq
      %v3059 = vshrl.u32 %v3058, 7
      %v3060 = vsub.s32 0, %v3059
      %v3061 = vrot.slane %v3056, %v3060
      %v3063 = vadd.f32 %v3048, %v3061
      %v3064 = vadd.f32 %v3049, %v3061
      %v3065 = vadd.f32 %v3050, %v3061
      %v3066 = vadd.f32 %v3051, %v3061
      %v3067 = vadd.f32 %v3052, %v3061
      %v3068 = vadd.f32 %v3053, %v3061
      %v3069 = vadd.f32 %v3054, %v3061
      %v3070 = vadd.f32 %v3055, %v3061
      %v3071 = vmax.f32 %v3063, 0.0
      %v3072 = vmax.f32 %v3064, 0.0
      %v3073 = vmax.f32 %v3065, 0.0
      %v3074 = vmax.f32 %v3066, 0.0
      %v3075 = vmax.f32 %v3067, 0.0
      %v3076 = vmax.f32 %v3068, 0.0
      %v3077 = vmax.f32 %v3069, 0.0
      %v3078 = vmax.f32 %v3070, 0.0
      %3079 = vst.msk [vmem:[%s224] sm:$0xff] %vm1718, %v3071
      %3080 = vst.msk [vmem:[%s224 + $0x8] sm:$0xff] %vm1718, %v3072
      %3081 = vst.msk [vmem:[%s224 + $0x10] sm:$0xff] %vm1718, %v3073
      %3082 = vst.msk [vmem:[%s224 + $0x18] sm:$0xff] %vm1718, %v3074
      %3083 = vst.msk [vmem:[%s224 + $0x20] sm:$0xff] %vm1718, %v3075
      %3084 = vst.msk [vmem:[%s224 + $0x28] sm:$0xff] %vm1718, %v3076
      %3085 = vst.msk [vmem:[%s224 + $0x30] sm:$0xff] %vm1718, %v3077
      %3086 = vst.msk [vmem:[%s224 + $0x38] sm:$0xff] %vm1718, %v3078
      %p3087 = scmp.lt.s32.totalorder %s16, 1
      %s3088 = scalar_select %p3087, %s16, 1
      %s3089 = smul.addr %s3088, 8
      %s3090 = smul.addr %s3089, 8
      %s3091 = scalar_lea.vmem %s5, %s3090
      // Predicated region
      $region41: #{poolconv_forward.1} parent=39 // pred_check
        %p3092 = pneg %p144
      $region42: #{poolconv_forward.1} parent=39 // pred_check_branch
        %3094 = sbr.rel (%p3092) target = $region44
      $region43: #{poolconv_forward.1} parent=39 // pred_region
        _
      $region44: #{poolconv_forward.1} parent=39 // pred_fallthru
        _
    $region40: #{poolconv_forward.1} parent=5 // pred_fallthru
      _
    %p3095 = scmp.le.s32.totalorder 2, %s11
    // Predicated region
    $region45: #{poolconv_forward.1} parent=5 // pred_check
      %p3096 = pneg %p3095
    $region46: #{poolconv_forward.1} parent=5 // pred_check_branch
      %3098 = sbr.rel (%p3096) target = $region48
    $region47: #{poolconv_forward.1} parent=5 // pred_region
      %s3099 = ssub.s32 %s11, 2
      // Predicated region
      $region49: #{poolconv_forward.1} parent=47 // pred_check
        %p3100 = pneg %p150
      $region50: #{poolconv_forward.1} parent=47 // pred_check_branch
        %3102 = sbr.rel (%p3100) target = $region52
      $region51: #{poolconv_forward.1} parent=47 // pred_region
        %p3103 = scmp.lt.s32.totalorder %s17, 1
        %s3104 = scalar_select %p3103, %s17, 1
        %s3105 = smul.addr %s3104, 8
        %s3106 = smul.addr %s3105, 8
        %s3107 = scalar_lea.vmem %s5, %s3106
      $region52: #{poolconv_forward.1} parent=47 // pred_fallthru
        _
    $region48: #{poolconv_forward.1} parent=5 // pred_fallthru
      _
  $region6: #{poolconv_forward.1} parent=0 // loop_footer
    %s15 = sadd.s32 1, %s11
  $region7: #{poolconv_forward.1} parent=0 // loop_footer_branch
    %10 = sbr.rel target = $region3
  $region8: #{poolconv_forward.1} parent=0 // loop_exit
    _

</llo_original>
